<compile_context>
chip_gen: v6e
topology: v6e:2x2x1
jax: 0.10.0
libtpu: 0.0.40
codegen_flags: <defaults>
</compile_context>

<pallas_src>
import functools

import jax
import jax.numpy as jnp
from jax.experimental import pallas as pl
from jax.experimental.pallas import tpu as pltpu

BN_EPS = 1e-5
_MiB = 1 << 20


# ----------------------------------------------------------------------------- kernel

def pointwise_ffn_kernel(x_ref, scale_ref, shift_ref, w1t_ref, b1_ref,
                         w2t_ref, b2_ref, out_ref, *,
                         matmul_dtype, out_3d, vpu_contraction):
    bc, w, d = x_ref.shape
    c = w2t_ref.shape[1]
    approx_recip = jnp.dtype(matmul_dtype) != jnp.dtype(jnp.float32)

    # TODO(synk): Dropout is treated as identity (eval mode); BatchNorm1d (eval) is
    # pre-folded into scale/shift vectors by the wrapper: xn = x*scale + shift.
    xn = x_ref[...] * scale_ref[0] + shift_ref[0]                      # (Bc, W, D) f32

    # Shared 2-layer MLP on the flattened token slab (one fat-M MXU matmul per layer).
    # Weights arrive pre-cast to matmul_dtype from the wrapper; xn is cast exactly once.
    xf = xn.reshape(bc * w, d).astype(matmul_dtype)                    # (Bc*W, D)
    h = jnp.dot(xf, w1t_ref[...], preferred_element_type=jnp.float32) + b1_ref[0]
    h = jnp.maximum(h, 0.0)                                            # (Bc*W, H) f32
    logits = jnp.dot(h.astype(matmul_dtype), w2t_ref[...],
                     preferred_element_type=jnp.float32) + b2_ref[0]   # (Bc*W, C) f32
    logits = logits.reshape(bc, w, c)

    # transpose(1,2) + softmax(dim=-1) == softmax over the words axis per (class, cluster).
    m = jnp.max(logits, axis=1, keepdims=True)                         # (Bc, 1, C)
    p = jnp.exp(logits - m)                                            # (Bc, W, C) f32
    denom = jnp.sum(p, axis=1, keepdims=True)
    p = p * pl.reciprocal(denom, approx=approx_recip)

    if vpu_contraction:
        # Small C/W: contract over words on the VPU, keeping p and xn in f32.
        # Avoids Bc degenerate (C x W)@(W x D) MXU matmuls and keeps the output f32-exact.
        cols = [jnp.sum(p[:, :, ci:ci + 1] * xn, axis=1) for ci in range(c)]   # (Bc, D) each
        if out_3d:
            out_ref[...] = jnp.stack(cols, axis=1).astype(out_ref.dtype)        # (Bc, C, D)
        else:
            out_ref[...] = jnp.concatenate(cols, axis=-1).astype(out_ref.dtype) # (Bc, C*D)
    else:
        cl = jnp.einsum("bwc,bwd->bcd",
                        p.astype(matmul_dtype), xn.astype(matmul_dtype),
                        preferred_element_type=jnp.float32)            # (Bc, C, D)
        if out_3d:
            out_ref[...] = cl.astype(out_ref.dtype)
        else:
            out_ref[...] = cl.reshape(bc, c * d).astype(out_ref.dtype)


# ------------------------------------------------------------------- tiling heuristics

def _tpu_config():
    """Generation-aware (vmem_limit_bytes, target x-block bytes, #TensorCores)."""
    try:
        vmem_cap = int(pltpu.get_tpu_info().vmem_capacity_bytes)
    except Exception:
        vmem_cap = 128 * _MiB
    if vmem_cap <= 96 * _MiB:
        # v7x-like: 64 MiB VMEM per TensorCore, 2 TCs per chip.
        return min(48 * _MiB, (vmem_cap * 3) // 4), 2 * _MiB, 2
    # v5e / v6e: 128 MiB VMEM, single TensorCore.
    return 64 * _MiB, 3 * _MiB, 1


def _pad_up(n, m):
    return ((n + m - 1) // m) * m


def _tile2(rows, cols, itemsize):
    """Padded VMEM bytes of a 2-D tile (sublane->8, lane->128)."""
    return _pad_up(max(rows, 1), 8) * _pad_up(max(cols, 1), 128) * itemsize


def _block_vmem_bytes(bc, words, d, h, c, mdt_bytes, out_3d):
    """Padded per-grid-step VMEM footprint: double-buffered x/out, single-buffered
    constants, plus simultaneously-live intermediates."""
    x_blk = bc * _tile2(words, d, 4)
    out_blk = bc * _tile2(c, d, 4) if out_3d else _tile2(bc, c * d, 4)
    consts = (_tile2(d, h, mdt_bytes) + _tile2(h, c, mdt_bytes)
              + 2 * _tile2(1, d, 4) + _tile2(1, h, 4) + _tile2(1, c, 4))
    inter = (bc * _tile2(words, d, 4)              # xn (f32)
             + _tile2(bc * words, d, mdt_bytes)    # xf
             + _tile2(bc * words, h, 4)            # h (f32)
             + 2 * bc * _tile2(words, c, 4)        # logits, p (f32)
             + bc * _tile2(c, d, 4))               # contraction result (f32)
    return 2 * x_blk + 2 * out_blk + consts + inter


def _choose_block_classes(classes, words, embed_dim, hidden, nclusters,
                          matmul_dtype, out_3d):
    vmem_limit, target_x_bytes, num_tc = _tpu_config()
    budget = (vmem_limit * 3) // 4
    mdt_bytes = jnp.dtype(matmul_dtype).itemsize

    def fits(bc):
        return _block_vmem_bytes(bc, words, embed_dim, hidden, nclusters,
                                 mdt_bytes, out_3d) <= budget

    if classes <= 8:
        return classes                                   # tiny: one full block

    per_class_x = _tile2(words, embed_dim, 4)

    # Start from the x-block byte target, then enforce a fat enough M = Bc*W for the MXU.
    bc = max(1, target_x_bytes // per_class_x)
    bc = max(bc, -(-256 // max(1, words)))               # Bc*W >= 256 when classes allow
    bc = min(bc, classes)

    # Shrink until the padded per-step footprint fits the VMEM budget.
    while bc > 1 and not fits(bc):
        bc = max(1, bc - 8) if bc > 8 else bc - 1

    if num_tc == 1:
        # Single TensorCore: one block if the whole problem fits VMEM, else >= ~4 blocks
        # so the x/out DMAs pipeline behind compute.
        if bc >= classes and fits(classes):
            return classes
        cap = (classes // 4) // 8 * 8
        if cap >= 8:
            bc = min(bc, cap)
    else:
        # v7x megacore: >= 2 blocks per TensorCore (>= 4 total) when classes allow,
        # otherwise at least one block per core.
        cap4 = (classes // 4) // 8 * 8
        cap2 = (classes // 2) // 8 * 8
        if cap4 >= 8:
            bc = min(bc, cap4)
        elif cap2 >= 8:
            bc = min(bc, cap2)

    bc = max(1, min(bc, classes))
    if bc >= classes:
        return classes
    bc = max(8, (bc // 8) * 8)                           # multi-block: 8-aligned sublanes

    if num_tc == 2:
        # Prefer an even number of grid steps (load balance across the two TCs).
        n_blocks = -(-classes // bc)
        if n_blocks > 1 and n_blocks % 2 == 1:
            alt = ((-(-classes // (n_blocks + 1))) // 8) * 8
            if alt >= 8:
                bc = alt
    return bc


# ----------------------------------------------------------------------------- wrapper

def pointwise_ffn(x, params, *, matmul_dtype=jnp.bfloat16, block_classes=None):
    """x: (classes, words, embed_dim) f32 -> (classes, nclusters*embed_dim) f32."""
    classes, words, embed_dim = x.shape
    gamma, beta, run_mean, run_var, w1, b1, w2, b2 = params
    hidden = w1.shape[0]
    nclusters = w2.shape[0]
    matmul_dtype = jnp.dtype(matmul_dtype)

    # Glue (plain JAX): fold BN(eval) into scale/shift; pre-transpose + pre-cast weights.
    scale = jnp.asarray(gamma) * jax.lax.rsqrt(jnp.asarray(run_var) + BN_EPS)   # (D,)
    shift = jnp.asarray(beta) - jnp.asarray(run_mean) * scale                    # (D,)
    w1t = jnp.asarray(w1).T.astype(matmul_dtype)      # (D, H)
    w2t = jnp.asarray(w2).T.astype(matmul_dtype)      # (H, C)
    to2d = lambda v: jnp.asarray(v, jnp.float32).reshape(1, -1)
    scale2, shift2, b1_2, b2_2 = to2d(scale), to2d(shift), to2d(b1), to2d(b2)

    out_3d = (embed_dim % 128 == 0)          # lane-dense 3-D store when D is 128-aligned
    vpu_contraction = nclusters <= 16        # small C: unrolled VPU contraction (f32)

    if block_classes is None:
        bc = _choose_block_classes(classes, words, embed_dim, hidden, nclusters,
                                   matmul_dtype, out_3d)
    else:
        bc = int(block_classes)
    bc = max(1, min(bc, classes))
    n_blocks = pl.cdiv(classes, bc)
    padded = n_blocks * bc
    if padded != classes:
        # Zero-padded classes produce finite garbage rows, sliced off below.
        x = jnp.pad(x, ((0, padded - classes), (0, 0), (0, 0)))

    vmem_limit, _, _ = _tpu_config()

    kernel = functools.partial(pointwise_ffn_kernel, matmul_dtype=matmul_dtype,
                               out_3d=out_3d, vpu_contraction=vpu_contraction)

    if out_3d:
        out_shape = jax.ShapeDtypeStruct((padded, nclusters, embed_dim), jnp.float32)
        out_spec = pl.BlockSpec((bc, nclusters, embed_dim), lambda i: (i, 0, 0))
    else:
        out_shape = jax.ShapeDtypeStruct((padded, nclusters * embed_dim), jnp.float32)
        out_spec = pl.BlockSpec((bc, nclusters * embed_dim), lambda i: (i, 0))

    def run(single_buffer_consts):
        if single_buffer_consts:
            # Constant-index operands: single-buffered -> no wasted VMEM on a second copy.
            const_spec = lambda shape: pl.BlockSpec(
                shape, lambda i, _s=shape: tuple(0 for _ in _s),
                pipeline_mode=pl.Buffered(1))
        else:
            const_spec = lambda shape: pl.BlockSpec(
                shape, lambda i, _s=shape: tuple(0 for _ in _s))
        return pl.pallas_call(
            kernel,
            out_shape=out_shape,
            grid_spec=pltpu.PrefetchScalarGridSpec(
                num_scalar_prefetch=0,
                grid=(n_blocks,),
                in_specs=[
                    pl.BlockSpec((bc, words, embed_dim), lambda i: (i, 0, 0)),  # x block
                    const_spec((1, embed_dim)),        # BN scale
                    const_spec((1, embed_dim)),        # BN shift
                    const_spec((embed_dim, hidden)),   # w1.T (pre-cast)
                    const_spec((1, hidden)),           # b1
                    const_spec((hidden, nclusters)),   # w2.T (pre-cast)
                    const_spec((1, nclusters)),        # b2
                ],
                out_specs=out_spec,
            ),
            compiler_params=pltpu.CompilerParams(
                dimension_semantics=("parallel",),
                vmem_limit_bytes=int(vmem_limit),
            ),
        )(x, scale2, shift2, w1t, b1_2, w2t, b2_2)

    try:
        out = run(True)
    except Exception:
        # Fallback for jax versions without Buffered(1) single-buffering support.
        out = run(False)

    out = out[:classes]
    if out_3d:
        out = out.reshape(classes, nclusters * embed_dim)
    return out


# --------------------------------------------------------------------------- reference

def reference(x, params):
    gamma, beta, run_mean, run_var, w1, b1, w2, b2 = params
    classes, words, embed_dim = x.shape
    nclusters = w2.shape[0]
    xf = x.reshape(classes * words, embed_dim)
    xn = (xf - run_mean) / jnp.sqrt(run_var + BN_EPS) * gamma + beta
    h = jnp.maximum(xn @ w1.T + b1, 0.0)
    logits = h @ w2.T + b2
    w = logits.reshape(classes, words, nclusters).transpose(0, 2, 1)
    w = jax.nn.softmax(w, axis=-1)
    xn3 = xn.reshape(classes, words, embed_dim)
    cl = jnp.einsum("bcw,bwd->bcd", w, xn3)
    return cl.reshape(classes, nclusters * embed_dim)


def _make_params(key, embed_dim, hidden, nclusters):
    k = jax.random.split(key, 8)
    gamma = jnp.ones((embed_dim,), jnp.float32)
    beta = jnp.zeros((embed_dim,), jnp.float32)
    run_mean = 0.05 * jax.random.normal(k[1], (embed_dim,), jnp.float32)
    run_var = jnp.abs(1.0 + 0.1 * jax.random.normal(k[2], (embed_dim,), jnp.float32))
    w1 = jax.random.normal(k[3], (hidden, embed_dim), jnp.float32) / jnp.sqrt(embed_dim)
    b1 = 0.01 * jax.random.normal(k[4], (hidden,), jnp.float32)
    w2 = jax.random.normal(k[5], (nclusters, hidden), jnp.float32) / jnp.sqrt(hidden)
    b2 = 0.01 * jax.random.normal(k[6], (nclusters,), jnp.float32)
    return (gamma, beta, run_mean, run_var, w1, b1, w2, b2)


if __name__ == "__main__":
    key = jax.random.PRNGKey(0)
    kx1, kp1, kx2, kp2, kx3, kp3 = jax.random.split(key, 6)

    # Config A (toy, D<128 -> packed 2-D output): opt.nclusters=4, opt.ff_hidden_dim=16,
    # opt.ff_bn=True, opt.ff_dropout handled as eval-mode identity; in_dim=32.
    classes, words, embed_dim, hidden, nclusters = 16, 8, 32, 16, 4
    x = jax.random.normal(kx1, (classes, words, embed_dim), jnp.float32)
    params = _make_params(kp1, embed_dim, hidden, nclusters)
    ref = reference(x, params)

    out_bf16 = pointwise_ffn(x, params, matmul_dtype=jnp.bfloat16)
    jax.block_until_ready(out_bf16)
    assert out_bf16.shape == (classes, nclusters * embed_dim), out_bf16.shape
    assert jnp.allclose(out_bf16, ref, atol=4e-2, rtol=4e-2), \
        float(jnp.max(jnp.abs(out_bf16 - ref)))

    out_f32 = pointwise_ffn(x, params, matmul_dtype=jnp.float32)
    jax.block_until_ready(out_f32)
    assert jnp.allclose(out_f32, ref, atol=1e-4, rtol=1e-4), \
        float(jnp.max(jnp.abs(out_f32 - ref)))

    # Config B (D multiple of 128 -> lane-dense 3-D output path), bf16 matmuls.
    classes2, words2, embed_dim2, hidden2, nclusters2 = 16, 8, 128, 32, 4
    x2 = jax.random.normal(kx2, (classes2, words2, embed_dim2), jnp.float32)
    params2 = _make_params(kp2, embed_dim2, hidden2, nclusters2)
    ref2 = reference(x2, params2)
    out2 = pointwise_ffn(x2, params2, matmul_dtype=jnp.bfloat16)
    jax.block_until_ready(out2)
    assert out2.shape == (classes2, nclusters2 * embed_dim2), out2.shape
    assert jnp.allclose(out2, ref2, atol=4e-2, rtol=4e-2), \
        float(jnp.max(jnp.abs(out2 - ref2)))

    # Config C (classes not a multiple of the block -> padding + multi-block path), exact f32.
    classes3 = 13
    x3 = jax.random.normal(kx3, (classes3, words, embed_dim), jnp.float32)
    params3 = _make_params(kp3, embed_dim, hidden, nclusters)
    ref3 = reference(x3, params3)
    out3 = pointwise_ffn(x3, params3, matmul_dtype=jnp.float32, block_classes=8)
    jax.block_until_ready(out3)
    assert out3.shape == (classes3, nclusters * embed_dim), out3.shape
    assert jnp.allclose(out3, ref3, atol=1e-4, rtol=1e-4), \
        float(jnp.max(jnp.abs(out3 - ref3)))

    print("KERNEL_OK")
</pallas_src>

<mosaic_0001>
module attributes {stable_mosaic.version = 11 : i64} {
  func.func @pointwise_ffn_kernel(%arg0: i32, %arg1: memref<16x8x32xf32, #tpu.memory_space<vmem>>, %arg2: memref<1x32xf32, #tpu.memory_space<vmem>>, %arg3: memref<1x32xf32, #tpu.memory_space<vmem>>, %arg4: memref<32x16xbf16, #tpu.memory_space<vmem>>, %arg5: memref<1x16xf32, #tpu.memory_space<vmem>>, %arg6: memref<16x4xbf16, #tpu.memory_space<vmem>>, %arg7: memref<1x4xf32, #tpu.memory_space<vmem>>, %arg8: memref<16x128xf32, #tpu.memory_space<vmem>>) attributes {dimension_semantics = [#tpu.dimension_semantics<parallel>], iteration_bounds = array<i64: 1>, scalar_prefetch = 0 : i64, scratch_operands = 0 : i64, tpu.core_type = #tpu.core_type<tc>, window_params = [{transform_indices = @transform_0, window_bounds = array<i64: 16, 8, 32>}, {pipeline_mode = #tpu.pipeline_mode<synchronous>, transform_indices = @transform_1, window_bounds = array<i64: 1, 32>}, {pipeline_mode = #tpu.pipeline_mode<synchronous>, transform_indices = @transform_2, window_bounds = array<i64: 1, 32>}, {pipeline_mode = #tpu.pipeline_mode<synchronous>, transform_indices = @transform_3, window_bounds = array<i64: 32, 16>}, {pipeline_mode = #tpu.pipeline_mode<synchronous>, transform_indices = @transform_4, window_bounds = array<i64: 1, 16>}, {pipeline_mode = #tpu.pipeline_mode<synchronous>, transform_indices = @transform_5, window_bounds = array<i64: 16, 4>}, {pipeline_mode = #tpu.pipeline_mode<synchronous>, transform_indices = @transform_6, window_bounds = array<i64: 1, 4>}, {transform_indices = @transform_7, window_bounds = array<i64: 16, 128>}]} {
    %c0 = arith.constant 0 : index
    %c0_0 = arith.constant 0 : index
    %c0_1 = arith.constant 0 : index
    %0 = vector.load %arg1[%c0, %c0_0, %c0_1] : memref<16x8x32xf32, #tpu.memory_space<vmem>>, vector<16x8x32xf32>
    %c0_2 = arith.constant 0 : index
    %c0_3 = arith.constant 0 : index
    %1 = vector.load %arg2[%c0_2, %c0_3] : memref<1x32xf32, #tpu.memory_space<vmem>>, vector<1x32xf32>
    %2 = vector.shape_cast %1 : vector<1x32xf32> to vector<32xf32>
    %3 = vector.shape_cast %2 : vector<32xf32> to vector<1x1x32xf32>
    %4 = vector.broadcast %3 : vector<1x1x32xf32> to vector<16x8x32xf32>
    %5 = arith.mulf %0, %4 : vector<16x8x32xf32>
    %c0_4 = arith.constant 0 : index
    %c0_5 = arith.constant 0 : index
    %6 = vector.load %arg3[%c0_4, %c0_5] : memref<1x32xf32, #tpu.memory_space<vmem>>, vector<1x32xf32>
    %7 = vector.shape_cast %6 : vector<1x32xf32> to vector<32xf32>
    %8 = vector.shape_cast %7 : vector<32xf32> to vector<1x1x32xf32>
    %9 = vector.broadcast %8 : vector<1x1x32xf32> to vector<16x8x32xf32>
    %10 = arith.addf %5, %9 : vector<16x8x32xf32>
    %11 = vector.shape_cast %10 : vector<16x8x32xf32> to vector<128x32xf32>
    %12 = arith.truncf %11 : vector<128x32xf32> to vector<128x32xbf16>
    %c0_6 = arith.constant 0 : index
    %c0_7 = arith.constant 0 : index
    %13 = vector.load %arg4[%c0_6, %c0_7] : memref<32x16xbf16, #tpu.memory_space<vmem>>, vector<32x16xbf16>
    %cst = arith.constant dense<0.000000e+00> : vector<128x16xf32>
    %14 = tpu.matmul %12, %13, %cst {dimension_numbers = #tpu.dot_dimension_numbers<[1], [0], [0], [1], [0, 0, 1, 1], [], []>} : vector<128x32xbf16>, vector<32x16xbf16>, vector<128x16xf32> -> vector<128x16xf32>
    %c0_8 = arith.constant 0 : index
    %c0_9 = arith.constant 0 : index
    %15 = vector.load %arg5[%c0_8, %c0_9] : memref<1x16xf32, #tpu.memory_space<vmem>>, vector<1x16xf32>
    %16 = vector.shape_cast %15 : vector<1x16xf32> to vector<16xf32>
    %17 = vector.shape_cast %16 : vector<16xf32> to vector<1x16xf32>
    %18 = vector.broadcast %17 : vector<1x16xf32> to vector<128x16xf32>
    %19 = arith.addf %14, %18 : vector<128x16xf32>
    %cst_10 = arith.constant 0.000000e+00 : f32
    %20 = vector.broadcast %cst_10 : f32 to vector<128x16xf32>
    %21 = arith.maximumf %19, %20 : vector<128x16xf32>
    %22 = arith.truncf %21 : vector<128x16xf32> to vector<128x16xbf16>
    %c0_11 = arith.constant 0 : index
    %c0_12 = arith.constant 0 : index
    %23 = vector.load %arg6[%c0_11, %c0_12] : memref<16x4xbf16, #tpu.memory_space<vmem>>, vector<16x4xbf16>
    %cst_13 = arith.constant dense<0.000000e+00> : vector<128x4xf32>
    %24 = tpu.matmul %22, %23, %cst_13 {dimension_numbers = #tpu.dot_dimension_numbers<[1], [0], [0], [1], [0, 0, 1, 1], [], []>} : vector<128x16xbf16>, vector<16x4xbf16>, vector<128x4xf32> -> vector<128x4xf32>
    %c0_14 = arith.constant 0 : index
    %c0_15 = arith.constant 0 : index
    %25 = vector.load %arg7[%c0_14, %c0_15] : memref<1x4xf32, #tpu.memory_space<vmem>>, vector<1x4xf32>
    %26 = vector.shape_cast %25 : vector<1x4xf32> to vector<4xf32>
    %27 = vector.shape_cast %26 : vector<4xf32> to vector<1x4xf32>
    %28 = vector.broadcast %27 : vector<1x4xf32> to vector<128x4xf32>
    %29 = arith.addf %24, %28 : vector<128x4xf32>
    %30 = vector.shape_cast %29 : vector<128x4xf32> to vector<16x8x4xf32>
    %cst_16 = arith.constant dense<0xFF800000> : vector<16x4xf32>
    %31 = vector.multi_reduction <maximumf>, %30, %cst_16 [1] : vector<16x8x4xf32> to vector<16x4xf32>
    %32 = vector.shape_cast %31 : vector<16x4xf32> to vector<16x1x4xf32>
    %33 = vector.broadcast %32 : vector<16x1x4xf32> to vector<16x8x4xf32>
    %34 = arith.subf %30, %33 : vector<16x8x4xf32>
    %35 = math.exp %34 : vector<16x8x4xf32>
    %cst_17 = arith.constant dense<0.000000e+00> : vector<16x4xf32>
    %36 = vector.multi_reduction <add>, %35, %cst_17 [1] : vector<16x8x4xf32> to vector<16x4xf32>
    %37 = vector.shape_cast %36 : vector<16x4xf32> to vector<16x1x4xf32>
    %38 = tpu.reciprocal %37 {approx = true} : vector<16x1x4xf32> -> vector<16x1x4xf32>
    %39 = vector.broadcast %38 : vector<16x1x4xf32> to vector<16x8x4xf32>
    %40 = arith.mulf %35, %39 : vector<16x8x4xf32>
    %41 = vector.extract_strided_slice %40 {offsets = [0, 0, 0], sizes = [16, 8, 1], strides = [1, 1, 1]} : vector<16x8x4xf32> to vector<16x8x1xf32>
    %42 = vector.broadcast %41 : vector<16x8x1xf32> to vector<16x8x32xf32>
    %43 = arith.mulf %42, %10 : vector<16x8x32xf32>
    %cst_18 = arith.constant dense<0.000000e+00> : vector<16x32xf32>
    %44 = vector.multi_reduction <add>, %43, %cst_18 [1] : vector<16x8x32xf32> to vector<16x32xf32>
    %45 = vector.extract_strided_slice %40 {offsets = [0, 0, 1], sizes = [16, 8, 1], strides = [1, 1, 1]} : vector<16x8x4xf32> to vector<16x8x1xf32>
    %46 = vector.broadcast %45 : vector<16x8x1xf32> to vector<16x8x32xf32>
    %47 = arith.mulf %46, %10 : vector<16x8x32xf32>
    %cst_19 = arith.constant dense<0.000000e+00> : vector<16x32xf32>
    %48 = vector.multi_reduction <add>, %47, %cst_19 [1] : vector<16x8x32xf32> to vector<16x32xf32>
    %49 = vector.extract_strided_slice %40 {offsets = [0, 0, 2], sizes = [16, 8, 1], strides = [1, 1, 1]} : vector<16x8x4xf32> to vector<16x8x1xf32>
    %50 = vector.broadcast %49 : vector<16x8x1xf32> to vector<16x8x32xf32>
    %51 = arith.mulf %50, %10 : vector<16x8x32xf32>
    %cst_20 = arith.constant dense<0.000000e+00> : vector<16x32xf32>
    %52 = vector.multi_reduction <add>, %51, %cst_20 [1] : vector<16x8x32xf32> to vector<16x32xf32>
    %53 = vector.extract_strided_slice %40 {offsets = [0, 0, 3], sizes = [16, 8, 1], strides = [1, 1, 1]} : vector<16x8x4xf32> to vector<16x8x1xf32>
    %54 = vector.broadcast %53 : vector<16x8x1xf32> to vector<16x8x32xf32>
    %55 = arith.mulf %54, %10 : vector<16x8x32xf32>
    %cst_21 = arith.constant dense<0.000000e+00> : vector<16x32xf32>
    %56 = vector.multi_reduction <add>, %55, %cst_21 [1] : vector<16x8x32xf32> to vector<16x32xf32>
    %57 = tpu.concatenate %44, %48, %52, %56 in 1 : vector<16x32xf32>, vector<16x32xf32>, vector<16x32xf32>, vector<16x32xf32> -> vector<16x128xf32>
    %c0_22 = arith.constant 0 : index
    %c0_23 = arith.constant 0 : index
    %58 = vector.load %arg8[%c0_22, %c0_23] : memref<16x128xf32, #tpu.memory_space<vmem>>, vector<16x128xf32>
    tpu.vector_store %arg8[%c0_22, %c0_23], %57 {strides = array<i32>} : memref<16x128xf32, #tpu.memory_space<vmem>>, vector<16x128xf32>,
    return
  }
  func.func @transform_0(%arg0: i32) -> (i32, i32, i32) {
    %c0_i32 = arith.constant 0 : i32
    %c0_i32_0 = arith.constant 0 : i32
    %c0_i32_1 = arith.constant 0 : i32
    return %arg0, %c0_i32, %c0_i32_0 : i32, i32, i32
  }
  func.func @transform_1(%arg0: i32) -> (i32, i32) {
    %c0_i32 = arith.constant 0 : i32
    %c0_i32_0 = arith.constant 0 : i32
    %c0_i32_1 = arith.constant 0 : i32
    return %c0_i32, %c0_i32_0 : i32, i32
  }
  func.func @transform_2(%arg0: i32) -> (i32, i32) {
    %c0_i32 = arith.constant 0 : i32
    %c0_i32_0 = arith.constant 0 : i32
    %c0_i32_1 = arith.constant 0 : i32
    return %c0_i32, %c0_i32_0 : i32, i32
  }
  func.func @transform_3(%arg0: i32) -> (i32, i32) {
    %c0_i32 = arith.constant 0 : i32
    %c0_i32_0 = arith.constant 0 : i32
    %c0_i32_1 = arith.constant 0 : i32
    return %c0_i32, %c0_i32_0 : i32, i32
  }
  func.func @transform_4(%arg0: i32) -> (i32, i32) {
    %c0_i32 = arith.constant 0 : i32
    %c0_i32_0 = arith.constant 0 : i32
    %c0_i32_1 = arith.constant 0 : i32
    return %c0_i32, %c0_i32_0 : i32, i32
  }
  func.func @transform_5(%arg0: i32) -> (i32, i32) {
    %c0_i32 = arith.constant 0 : i32
    %c0_i32_0 = arith.constant 0 : i32
    %c0_i32_1 = arith.constant 0 : i32
    return %c0_i32, %c0_i32_0 : i32, i32
  }
  func.func @transform_6(%arg0: i32) -> (i32, i32) {
    %c0_i32 = arith.constant 0 : i32
    %c0_i32_0 = arith.constant 0 : i32
    %c0_i32_1 = arith.constant 0 : i32
    return %c0_i32, %c0_i32_0 : i32, i32
  }
  func.func @transform_7(%arg0: i32) -> (i32, i32) {
    %c0_i32 = arith.constant 0 : i32
    %c0_i32_0 = arith.constant 0 : i32
    return %arg0, %c0_i32 : i32, i32
  }
}

module attributes {stable_mosaic.version = 11 : i64} {
  func.func @pointwise_ffn_kernel(%arg0: i32, %arg1: memref<16x8x32xf32, #tpu.memory_space<vmem>>, %arg2: memref<1x32xf32, #tpu.memory_space<vmem>>, %arg3: memref<1x32xf32, #tpu.memory_space<vmem>>, %arg4: memref<32x16xbf16, #tpu.memory_space<vmem>>, %arg5: memref<1x16xf32, #tpu.memory_space<vmem>>, %arg6: memref<16x4xbf16, #tpu.memory_space<vmem>>, %arg7: memref<1x4xf32, #tpu.memory_space<vmem>>, %arg8: memref<16x128xf32, #tpu.memory_space<vmem>>) attributes {dimension_semantics = [#tpu.dimension_semantics<parallel>], iteration_bounds = array<i64: 1>, scalar_prefetch = 0 : i64, scratch_operands = 0 : i64, tpu.core_type = #tpu.core_type<tc>, window_params = [{transform_indices = @transform_0, window_bounds = array<i64: 16, 8, 32>}, {pipeline_mode = #tpu.pipeline_mode<synchronous>, transform_indices = @transform_1, window_bounds = array<i64: 1, 32>}, {pipeline_mode = #tpu.pipeline_mode<synchronous>, transform_indices = @transform_2, window_bounds = array<i64: 1, 32>}, {pipeline_mode = #tpu.pipeline_mode<synchronous>, transform_indices = @transform_3, window_bounds = array<i64: 32, 16>}, {pipeline_mode = #tpu.pipeline_mode<synchronous>, transform_indices = @transform_4, window_bounds = array<i64: 1, 16>}, {pipeline_mode = #tpu.pipeline_mode<synchronous>, transform_indices = @transform_5, window_bounds = array<i64: 16, 4>}, {pipeline_mode = #tpu.pipeline_mode<synchronous>, transform_indices = @transform_6, window_bounds = array<i64: 1, 4>}, {transform_indices = @transform_7, window_bounds = array<i64: 16, 128>}]} {
    %c0 = arith.constant 0 : index
    %c0_0 = arith.constant 0 : index
    %c0_1 = arith.constant 0 : index
    %0 = vector.load %arg1[%c0, %c0_0, %c0_1] : memref<16x8x32xf32, #tpu.memory_space<vmem>>, vector<16x8x32xf32>
    %c0_2 = arith.constant 0 : index
    %c0_3 = arith.constant 0 : index
    %1 = vector.load %arg2[%c0_2, %c0_3] : memref<1x32xf32, #tpu.memory_space<vmem>>, vector<1x32xf32>
    %2 = vector.shape_cast %1 : vector<1x32xf32> to vector<32xf32>
    %3 = vector.shape_cast %2 : vector<32xf32> to vector<1x1x32xf32>
    %4 = vector.broadcast %3 : vector<1x1x32xf32> to vector<16x8x32xf32>
    %5 = arith.mulf %0, %4 : vector<16x8x32xf32>
    %c0_4 = arith.constant 0 : index
    %c0_5 = arith.constant 0 : index
    %6 = vector.load %arg3[%c0_4, %c0_5] : memref<1x32xf32, #tpu.memory_space<vmem>>, vector<1x32xf32>
    %7 = vector.shape_cast %6 : vector<1x32xf32> to vector<32xf32>
    %8 = vector.shape_cast %7 : vector<32xf32> to vector<1x1x32xf32>
    %9 = vector.broadcast %8 : vector<1x1x32xf32> to vector<16x8x32xf32>
    %10 = arith.addf %5, %9 : vector<16x8x32xf32>
    %11 = vector.shape_cast %10 : vector<16x8x32xf32> to vector<128x32xf32>
    %12 = arith.truncf %11 : vector<128x32xf32> to vector<128x32xbf16>
    %c0_6 = arith.constant 0 : index
    %c0_7 = arith.constant 0 : index
    %13 = vector.load %arg4[%c0_6, %c0_7] : memref<32x16xbf16, #tpu.memory_space<vmem>>, vector<32x16xbf16>
    %cst = arith.constant dense<0.000000e+00> : vector<128x16xf32>
    %14 = tpu.matmul %12, %13, %cst {dimension_numbers = #tpu.dot_dimension_numbers<[1], [0], [0], [1], [0, 0, 1, 1], [], []>} : vector<128x32xbf16>, vector<32x16xbf16>, vector<128x16xf32> -> vector<128x16xf32>
    %c0_8 = arith.constant 0 : index
    %c0_9 = arith.constant 0 : index
    %15 = vector.load %arg5[%c0_8, %c0_9] : memref<1x16xf32, #tpu.memory_space<vmem>>, vector<1x16xf32>
    %16 = vector.shape_cast %15 : vector<1x16xf32> to vector<16xf32>
    %17 = vector.shape_cast %16 : vector<16xf32> to vector<1x16xf32>
    %18 = vector.broadcast %17 : vector<1x16xf32> to vector<128x16xf32>
    %19 = arith.addf %14, %18 : vector<128x16xf32>
    %cst_10 = arith.constant 0.000000e+00 : f32
    %20 = vector.broadcast %cst_10 : f32 to vector<128x16xf32>
    %21 = arith.maximumf %19, %20 : vector<128x16xf32>
    %22 = arith.truncf %21 : vector<128x16xf32> to vector<128x16xbf16>
    %c0_11 = arith.constant 0 : index
    %c0_12 = arith.constant 0 : index
    %23 = vector.load %arg6[%c0_11, %c0_12] : memref<16x4xbf16, #tpu.memory_space<vmem>>, vector<16x4xbf16>
    %cst_13 = arith.constant dense<0.000000e+00> : vector<128x4xf32>
    %24 = tpu.matmul %22, %23, %cst_13 {dimension_numbers = #tpu.dot_dimension_numbers<[1], [0], [0], [1], [0, 0, 1, 1], [], []>} : vector<128x16xbf16>, vector<16x4xbf16>, vector<128x4xf32> -> vector<128x4xf32>
    %c0_14 = arith.constant 0 : index
    %c0_15 = arith.constant 0 : index
    %25 = vector.load %arg7[%c0_14, %c0_15] : memref<1x4xf32, #tpu.memory_space<vmem>>, vector<1x4xf32>
    %26 = vector.shape_cast %25 : vector<1x4xf32> to vector<4xf32>
    %27 = vector.shape_cast %26 : vector<4xf32> to vector<1x4xf32>
    %28 = vector.broadcast %27 : vector<1x4xf32> to vector<128x4xf32>
    %29 = arith.addf %24, %28 : vector<128x4xf32>
    %30 = vector.shape_cast %29 : vector<128x4xf32> to vector<16x8x4xf32>
    %cst_16 = arith.constant dense<0xFF800000> : vector<16x4xf32>
    %31 = vector.multi_reduction <maximumf>, %30, %cst_16 [1] : vector<16x8x4xf32> to vector<16x4xf32>
    %32 = vector.shape_cast %31 : vector<16x4xf32> to vector<16x1x4xf32>
    %33 = vector.broadcast %32 : vector<16x1x4xf32> to vector<16x8x4xf32>
    %34 = arith.subf %30, %33 : vector<16x8x4xf32>
    %35 = math.exp %34 : vector<16x8x4xf32>
    %cst_17 = arith.constant dense<0.000000e+00> : vector<16x4xf32>
    %36 = vector.multi_reduction <add>, %35, %cst_17 [1] : vector<16x8x4xf32> to vector<16x4xf32>
    %37 = vector.shape_cast %36 : vector<16x4xf32> to vector<16x1x4xf32>
    %38 = tpu.reciprocal %37 {approx = true} : vector<16x1x4xf32> -> vector<16x1x4xf32>
    %39 = vector.broadcast %38 : vector<16x1x4xf32> to vector<16x8x4xf32>
    %40 = arith.mulf %35, %39 : vector<16x8x4xf32>
    %41 = vector.extract_strided_slice %40 {offsets = [0, 0, 0], sizes = [16, 8, 1], strides = [1, 1, 1]} : vector<16x8x4xf32> to vector<16x8x1xf32>
    %42 = vector.broadcast %41 : vector<16x8x1xf32> to vector<16x8x32xf32>
    %43 = arith.mulf %42, %10 : vector<16x8x32xf32>
    %cst_18 = arith.constant dense<0.000000e+00> : vector<16x32xf32>
    %44 = vector.multi_reduction <add>, %43, %cst_18 [1] : vector<16x8x32xf32> to vector<16x32xf32>
    %45 = vector.extract_strided_slice %40 {offsets = [0, 0, 1], sizes = [16, 8, 1], strides = [1, 1, 1]} : vector<16x8x4xf32> to vector<16x8x1xf32>
    %46 = vector.broadcast %45 : vector<16x8x1xf32> to vector<16x8x32xf32>
    %47 = arith.mulf %46, %10 : vector<16x8x32xf32>
    %cst_19 = arith.constant dense<0.000000e+00> : vector<16x32xf32>
    %48 = vector.multi_reduction <add>, %47, %cst_19 [1] : vector<16x8x32xf32> to vector<16x32xf32>
    %49 = vector.extract_strided_slice %40 {offsets = [0, 0, 2], sizes = [16, 8, 1], strides = [1, 1, 1]} : vector<16x8x4xf32> to vector<16x8x1xf32>
    %50 = vector.broadcast %49 : vector<16x8x1xf32> to vector<16x8x32xf32>
    %51 = arith.mulf %50, %10 : vector<16x8x32xf32>
    %cst_20 = arith.constant dense<0.000000e+00> : vector<16x32xf32>
    %52 = vector.multi_reduction <add>, %51, %cst_20 [1] : vector<16x8x32xf32> to vector<16x32xf32>
    %53 = vector.extract_strided_slice %40 {offsets = [0, 0, 3], sizes = [16, 8, 1], strides = [1, 1, 1]} : vector<16x8x4xf32> to vector<16x8x1xf32>
    %54 = vector.broadcast %53 : vector<16x8x1xf32> to vector<16x8x32xf32>
    %55 = arith.mulf %54, %10 : vector<16x8x32xf32>
    %cst_21 = arith.constant dense<0.000000e+00> : vector<16x32xf32>
    %56 = vector.multi_reduction <add>, %55, %cst_21 [1] : vector<16x8x32xf32> to vector<16x32xf32>
    %57 = tpu.concatenate %44, %48, %52, %56 in 1 : vector<16x32xf32>, vector<16x32xf32>, vector<16x32xf32>, vector<16x32xf32> -> vector<16x128xf32>
    %c0_22 = arith.constant 0 : index
    %c0_23 = arith.constant 0 : index
    %58 = vector.load %arg8[%c0_22, %c0_23] : memref<16x128xf32, #tpu.memory_space<vmem>>, vector<16x128xf32>
    tpu.vector_store %arg8[%c0_22, %c0_23], %57 {strides = array<i32>} : memref<16x128xf32, #tpu.memory_space<vmem>>, vector<16x128xf32>,
    return
  }
  func.func @transform_0(%arg0: i32) -> (i32, i32, i32) {
    %c0_i32 = arith.constant 0 : i32
    %c0_i32_0 = arith.constant 0 : i32
    %c0_i32_1 = arith.constant 0 : i32
    return %arg0, %c0_i32, %c0_i32_0 : i32, i32, i32
  }
  func.func @transform_1(%arg0: i32) -> (i32, i32) {
    %c0_i32 = arith.constant 0 : i32
    %c0_i32_0 = arith.constant 0 : i32
    %c0_i32_1 = arith.constant 0 : i32
    return %c0_i32, %c0_i32_0 : i32, i32
  }
  func.func @transform_2(%arg0: i32) -> (i32, i32) {
    %c0_i32 = arith.constant 0 : i32
    %c0_i32_0 = arith.constant 0 : i32
    %c0_i32_1 = arith.constant 0 : i32
    return %c0_i32, %c0_i32_0 : i32, i32
  }
  func.func @transform_3(%arg0: i32) -> (i32, i32) {
    %c0_i32 = arith.constant 0 : i32
    %c0_i32_0 = arith.constant 0 : i32
    %c0_i32_1 = arith.constant 0 : i32
    return %c0_i32, %c0_i32_0 : i32, i32
  }
  func.func @transform_4(%arg0: i32) -> (i32, i32) {
    %c0_i32 = arith.constant 0 : i32
    %c0_i32_0 = arith.constant 0 : i32
    %c0_i32_1 = arith.constant 0 : i32
    return %c0_i32, %c0_i32_0 : i32, i32
  }
  func.func @transform_5(%arg0: i32) -> (i32, i32) {
    %c0_i32 = arith.constant 0 : i32
    %c0_i32_0 = arith.constant 0 : i32
    %c0_i32_1 = arith.constant 0 : i32
    return %c0_i32, %c0_i32_0 : i32, i32
  }
  func.func @transform_6(%arg0: i32) -> (i32, i32) {
    %c0_i32 = arith.constant 0 : i32
    %c0_i32_0 = arith.constant 0 : i32
    %c0_i32_1 = arith.constant 0 : i32
    return %c0_i32, %c0_i32_0 : i32, i32
  }
  func.func @transform_7(%arg0: i32) -> (i32, i32) {
    %c0_i32 = arith.constant 0 : i32
    %c0_i32_0 = arith.constant 0 : i32
    return %arg0, %c0_i32 : i32, i32
  }
}

</mosaic_0001>

<llo_original>
// kernel: tpu_custom_call.1
$region0: #{tpu_custom_call.1}
  #allocation0 [shape = 'u32[]', space=smem, size = 0x4, offset = 0x4, fixed_abs, tag = 'smem constant byte address 0x4 - core index']
  #allocation1 [shape = 'u32[144,128]{1,0:T(1,128)}', space=vmem, size = 0x12000, scoped, tag = 'internal scratch']
  %s0 = inlined_call_operand.hbm [shape: f32[16,8,32], index: 0, kind: input, shape index: {}]
  %s1 = inlined_call_operand.vmem [shape: f32[1,32], index: 1, kind: input, shape index: {}]
  %s2 = inlined_call_operand.vmem [shape: f32[1,32], index: 2, kind: input, shape index: {}]
  %s3 = inlined_call_operand.vmem [shape: bf16[32,16], index: 3, kind: input, shape index: {}]
  %s4 = inlined_call_operand.vmem [shape: f32[1,16], index: 4, kind: input, shape index: {}]
  %s5 = inlined_call_operand.vmem [shape: bf16[16,4], index: 5, kind: input, shape index: {}]
  %s6 = inlined_call_operand.vmem [shape: f32[1,4], index: 6, kind: input, shape index: {}]
  %s7 = inlined_call_operand.hbm [shape: f32[16,128], index: 7, kind: output, shape index: {}]
  %s8 = sld [smem:[#allocation0]]
  $region42: #{tpu_custom_call.1} parent=0
    _
  %s10 = ssub.s32 1, %s8
  %s11 = scalar_select 0, %s10, %s8
  $region1: #{tpu_custom_call.1} parent=0
    #allocation2 [shape = 'u8[65536]{0}', space=vmem, size = 0x10000, scoped, tag = 'input window, operand 0, single buffered']
    #allocation3 [shape = 's32[1]{0}', space=sflag, size = 0x4, scoped, tag = 'scoped memory for tpu_custom_call.1']
    #allocation4 [shape = 's32[1]{0}', space=sflag, size = 0x4, scoped, tag = 'scoped memory for tpu_custom_call.1']
    #allocation5 [shape = 'u8[8192]{0}', space=vmem, size = 0x2000, scoped, tag = 'output window, operand 0, single buffered']
    %12 = vsyncpa [#allocation3], 0
    %13 = vsyncpa [#allocation4], 0
    // Predicated region
    $region2: #{tpu_custom_call.1} parent=1 // pred_check
      _
    $region3: #{tpu_custom_call.1} parent=1 // pred_check_branch
      %15 = sbr.rel (0) target = $region5
    $region4: #{tpu_custom_call.1} parent=1 // pred_region
      %s17 = ssub.s32 2048, 2048
      %18 = vsyncadd [#allocation3], %s17
      %s19 = sshll.u32 [#allocation2], 4
      %s20 = int_to_ptr.vmem [resolvable:$true] %s19
      %25 = dma.hbm_to_vmem [thread:$0]  %s0, 2048, %s20, [#allocation3], 128, 128, 8
    $region5: #{tpu_custom_call.1} parent=1 // pred_fallthru
      _
    // Predicated region
    $region6: #{tpu_custom_call.1} parent=1 // pred_check
      _
    $region7: #{tpu_custom_call.1} parent=1 // pred_check_branch
      %27 = sbr.rel (0) target = $region9
    $region8: #{tpu_custom_call.1} parent=1 // pred_region
      _
    $region9: #{tpu_custom_call.1} parent=1 // pred_fallthru
      _
    // Predicated region
    $region10: #{tpu_custom_call.1} parent=1 // pred_check
      _
    $region11: #{tpu_custom_call.1} parent=1 // pred_check_branch
      %29 = sbr.rel (0) target = $region13
    $region12: #{tpu_custom_call.1} parent=1 // pred_region
      _
    $region13: #{tpu_custom_call.1} parent=1 // pred_fallthru
      _
    // Predicated region
    $region14: #{tpu_custom_call.1} parent=1 // pred_check
      _
    $region15: #{tpu_custom_call.1} parent=1 // pred_check_branch
      %31 = sbr.rel (0) target = $region17
    $region16: #{tpu_custom_call.1} parent=1 // pred_region
      _
    $region17: #{tpu_custom_call.1} parent=1 // pred_fallthru
      _
    // Predicated region
    $region18: #{tpu_custom_call.1} parent=1 // pred_check
      _
    $region19: #{tpu_custom_call.1} parent=1 // pred_check_branch
      %33 = sbr.rel (0) target = $region21
    $region20: #{tpu_custom_call.1} parent=1 // pred_region
      _
    $region21: #{tpu_custom_call.1} parent=1 // pred_fallthru
      _
    // Predicated region
    $region22: #{tpu_custom_call.1} parent=1 // pred_check
      _
    $region23: #{tpu_custom_call.1} parent=1 // pred_check_branch
      %35 = sbr.rel (0) target = $region25
    $region24: #{tpu_custom_call.1} parent=1 // pred_region
      _
    $region25: #{tpu_custom_call.1} parent=1 // pred_fallthru
      _
    // Predicated region
    $region26: #{tpu_custom_call.1} parent=1 // pred_check
      _
    $region27: #{tpu_custom_call.1} parent=1 // pred_check_branch
      %37 = sbr.rel (0) target = $region29
    $region28: #{tpu_custom_call.1} parent=1 // pred_region
      _
    $region29: #{tpu_custom_call.1} parent=1 // pred_fallthru
      _
    // Predicated region
    $region30: #{tpu_custom_call.1} parent=1 // pred_check
      _
    $region31: #{tpu_custom_call.1} parent=1 // pred_check_branch
      %39 = sbr.rel (0) target = $region33
    $region32: #{tpu_custom_call.1} parent=1 // pred_region
      %40 = dma.done [#allocation3], 2048
    $region33: #{tpu_custom_call.1} parent=1 // pred_fallthru
      _
    %v42 = vld [vmem:[#allocation2] sm:$0xff]
    %v43 = vld [vmem:[#allocation2 + $0x8] sm:$0xff]
    %v44 = vld [vmem:[#allocation2 + $0x10] sm:$0xff]
    %v45 = vld [vmem:[#allocation2 + $0x18] sm:$0xff]
    %v46 = vld [vmem:[#allocation2 + $0x20] sm:$0xff]
    %v47 = vld [vmem:[#allocation2 + $0x28] sm:$0xff]
    %v48 = vld [vmem:[#allocation2 + $0x30] sm:$0xff]
    %v49 = vld [vmem:[#allocation2 + $0x38] sm:$0xff]
    %v50 = vld [vmem:[#allocation2 + $0x40] sm:$0xff]
    %v51 = vld [vmem:[#allocation2 + $0x48] sm:$0xff]
    %v52 = vld [vmem:[#allocation2 + $0x50] sm:$0xff]
    %v53 = vld [vmem:[#allocation2 + $0x58] sm:$0xff]
    %v54 = vld [vmem:[#allocation2 + $0x60] sm:$0xff]
    %v55 = vld [vmem:[#allocation2 + $0x68] sm:$0xff]
    %v56 = vld [vmem:[#allocation2 + $0x70] sm:$0xff]
    %v57 = vld [vmem:[#allocation2 + $0x78] sm:$0xff]
    %v58 = vld [vmem:[%s1] sm:$0x1]
    %v60 = vlaneseq
    %v61 = vshrl.u32 %v60, 7
    %v62 = vsub.s32 0, %v61
    %v63 = vrot.slane %v58, %v62
    %v65 = vmul.f32 %v42, %v63
    %v66 = vmul.f32 %v43, %v63
    %v67 = vmul.f32 %v44, %v63
    %v68 = vmul.f32 %v45, %v63
    %v69 = vmul.f32 %v46, %v63
    %v70 = vmul.f32 %v47, %v63
    %v71 = vmul.f32 %v48, %v63
    %v72 = vmul.f32 %v49, %v63
    %v73 = vmul.f32 %v50, %v63
    %v74 = vmul.f32 %v51, %v63
    %v75 = vmul.f32 %v52, %v63
    %v76 = vmul.f32 %v53, %v63
    %v77 = vmul.f32 %v54, %v63
    %v78 = vmul.f32 %v55, %v63
    %v79 = vmul.f32 %v56, %v63
    %v80 = vmul.f32 %v57, %v63
    %v81 = vld [vmem:[%s2] sm:$0x1]
    %v83 = vlaneseq
    %v84 = vshrl.u32 %v83, 7
    %v85 = vsub.s32 0, %v84
    %v86 = vrot.slane %v81, %v85
    %v88 = vadd.f32 %v65, %v86
    %v89 = vadd.f32 %v66, %v86
    %v90 = vadd.f32 %v67, %v86
    %v91 = vadd.f32 %v68, %v86
    %v92 = vadd.f32 %v69, %v86
    %v93 = vadd.f32 %v70, %v86
    %v94 = vadd.f32 %v71, %v86
    %v95 = vadd.f32 %v72, %v86
    %v96 = vadd.f32 %v73, %v86
    %v97 = vadd.f32 %v74, %v86
    %v98 = vadd.f32 %v75, %v86
    %v99 = vadd.f32 %v76, %v86
    %v100 = vadd.f32 %v77, %v86
    %v101 = vadd.f32 %v78, %v86
    %v102 = vadd.f32 %v79, %v86
    %v103 = vadd.f32 %v80, %v86
    %v104 = vpack.c.bf16 %v89, %v88
    %v105 = vpack.c.bf16 %v91, %v90
    %v106 = vpack.c.bf16 %v93, %v92
    %v107 = vpack.c.bf16 %v95, %v94
    %v108 = vpack.c.bf16 %v97, %v96
    %v109 = vpack.c.bf16 %v99, %v98
    %v110 = vpack.c.bf16 %v101, %v100
    %v111 = vpack.c.bf16 %v103, %v102
    %v112 = vld [vmem:[%s3] sm:$0xf]
    %v113 = vld [vmem:[%s3 + $0x4] sm:$0xf]
    %v114 = vld [vmem:[%s3 + $0x8] sm:$0xf]
    %v115 = vld [vmem:[%s3 + $0xc] sm:$0xf]
    %v116 = vld [vmem:[%s4] sm:$0x1]
    %v118 = vlaneseq
    %v119 = vshrl.u32 %v118, 7
    %v120 = vsub.s32 0, %v119
    %v121 = vrot.slane %v116, %v120
    %v127 = vunpack.c.l.b16 %v112
    %v128 = vunpack.c.l.b16 %v113
    %v129 = vunpack.c.l.b16 %v114
    %v130 = vunpack.c.l.b16 %v115
    %v131 = vpack.c.b16 %v128, %v127
    %v132 = vpack.c.b16 %v130, %v129
    %vm135 = vcmask 261120
    %v137 = vsel %vm135, %v104, 0
    %v140 = vsel %vm135, %v105, 0
    %v143 = vsel %vm135, %v106, 0
    %v146 = vsel %vm135, %v107, 0
    %v149 = vsel %vm135, %v108, 0
    %v152 = vsel %vm135, %v109, 0
    %v155 = vsel %vm135, %v110, 0
    %v158 = vsel %vm135, %v111, 0
    %160 = vmatprep.subr.bf16.mxu0 0
    %161 = vmatpush1.bf16.msra.mxu0 0
    %162 = vmatprep.subr.bf16.mxu0 0
    %163 = vmatpush1.bf16.msra.mxu0 0
    %164 = vmatprep.subr.bf16.mxu0 0
    %165 = vmatpush1.bf16.msra.mxu0 0
    %166 = vmatprep.subr.bf16.mxu0 0
    %167 = vmatpush1.bf16.msra.mxu0 0
    %168 = vmatprep.subr.bf16.mxu0 0
    %169 = vmatpush1.bf16.msra.mxu0 0
    %170 = vmatprep.subr.bf16.mxu0 0
    %171 = vmatpush1.bf16.msra.mxu0 0
    %172 = vmatprep.subr.bf16.mxu0 0
    %173 = vmatpush1.bf16.msra.mxu0 %v132
    %174 = vmatprep.subr.bf16.mxu0 0
    %175 = vmatpush1.bf16.msra.mxu0 %v131
    %176 = vmatprep.subr.bf16.mxu0 0
    %177 = vmatpush2.bf16.msra.mxu0 0
    %178 = vmatprep.subr.bf16.mxu0 0
    %179 = vmatpush2.bf16.msra.mxu0 0
    %180 = vmatprep.subr.bf16.mxu0 0
    %181 = vmatpush2.bf16.msra.mxu0 0
    %182 = vmatprep.subr.bf16.mxu0 0
    %183 = vmatpush2.bf16.msra.mxu0 0
    %184 = vmatprep.subr.bf16.mxu0 0
    %185 = vmatpush2.bf16.msra.mxu0 0
    %186 = vmatprep.subr.bf16.mxu0 0
    %187 = vmatpush2.bf16.msra.mxu0 0
    %188 = vmatprep.subr.bf16.mxu0 0
    %189 = vmatpush2.bf16.msra.mxu0 0
    %190 = vmatprep.subr.bf16.mxu0 0
    %191 = vmatpush2.bf16.msra.mxu0 0
    %192 = vmatprep.mubr.bf16.mxu0 0
    %193 = vmatmul.mubr.bf16.gmra.mxu0 %v137
    %v194 = vpop.f32.mrf.mxu0
    %v195 = vadd.f32 %v121, %v194
    %v196 = vpop.f32.mrf.mxu0
    %v197 = vpop.f32.mrf.mxu0
    %v198 = vadd.f32 %v121, %v197
    %v199 = vpop.f32.mrf.mxu0
    %200 = vmatprep.mubr.bf16.mxu0 0
    %201 = vmatmul.mubr.bf16.gmra.mxu0 %v140
    %v202 = vpop.f32.mrf.mxu0
    %v203 = vadd.f32 %v121, %v202
    %v204 = vpop.f32.mrf.mxu0
    %v205 = vpop.f32.mrf.mxu0
    %v206 = vadd.f32 %v121, %v205
    %v207 = vpop.f32.mrf.mxu0
    %208 = vmatprep.mubr.bf16.mxu0 0
    %209 = vmatmul.mubr.bf16.gmra.mxu0 %v143
    %v210 = vpop.f32.mrf.mxu0
    %v211 = vadd.f32 %v121, %v210
    %v212 = vpop.f32.mrf.mxu0
    %v213 = vpop.f32.mrf.mxu0
    %v214 = vadd.f32 %v121, %v213
    %v215 = vpop.f32.mrf.mxu0
    %216 = vmatprep.mubr.bf16.mxu0 0
    %217 = vmatmul.mubr.bf16.gmra.mxu0 %v146
    %v218 = vpop.f32.mrf.mxu0
    %v219 = vadd.f32 %v121, %v218
    %v220 = vpop.f32.mrf.mxu0
    %v221 = vpop.f32.mrf.mxu0
    %v222 = vadd.f32 %v121, %v221
    %v223 = vpop.f32.mrf.mxu0
    %224 = vmatprep.mubr.bf16.mxu0 0
    %225 = vmatmul.mubr.bf16.gmra.mxu0 %v149
    %v226 = vpop.f32.mrf.mxu0
    %v227 = vadd.f32 %v121, %v226
    %v228 = vpop.f32.mrf.mxu0
    %v229 = vpop.f32.mrf.mxu0
    %v230 = vadd.f32 %v121, %v229
    %v231 = vpop.f32.mrf.mxu0
    %232 = vmatprep.mubr.bf16.mxu0 0
    %233 = vmatmul.mubr.bf16.gmra.mxu0 %v152
    %v234 = vpop.f32.mrf.mxu0
    %v235 = vadd.f32 %v121, %v234
    %v236 = vpop.f32.mrf.mxu0
    %v237 = vpop.f32.mrf.mxu0
    %v238 = vadd.f32 %v121, %v237
    %v239 = vpop.f32.mrf.mxu0
    %240 = vmatprep.mubr.bf16.mxu0 0
    %241 = vmatmul.mubr.bf16.gmra.mxu0 %v155
    %v242 = vpop.f32.mrf.mxu0
    %v243 = vadd.f32 %v121, %v242
    %v244 = vpop.f32.mrf.mxu0
    %v245 = vpop.f32.mrf.mxu0
    %v246 = vadd.f32 %v121, %v245
    %v247 = vpop.f32.mrf.mxu0
    %248 = vmatprep.mubr.bf16.mxu0 0
    %249 = vmatmul.mubr.bf16.gmra.mxu0 %v158
    %v250 = vpop.f32.mrf.mxu0
    %v251 = vadd.f32 %v121, %v250
    %v252 = vpop.f32.mrf.mxu0
    %v253 = vpop.f32.mrf.mxu0
    %v254 = vadd.f32 %v121, %v253
    %v255 = vpop.f32.mrf.mxu0
    %256 = vdwg.mxu0
    %v257 = vmax.f32 %v195, 0.0
    %v258 = vmax.f32 %v198, 0.0
    %v259 = vmax.f32 %v203, 0.0
    %v260 = vmax.f32 %v206, 0.0
    %v261 = vmax.f32 %v211, 0.0
    %v262 = vmax.f32 %v214, 0.0
    %v263 = vmax.f32 %v219, 0.0
    %v264 = vmax.f32 %v222, 0.0
    %v265 = vmax.f32 %v227, 0.0
    %v266 = vmax.f32 %v230, 0.0
    %v267 = vmax.f32 %v235, 0.0
    %v268 = vmax.f32 %v238, 0.0
    %v269 = vmax.f32 %v243, 0.0
    %v270 = vmax.f32 %v246, 0.0
    %v271 = vmax.f32 %v251, 0.0
    %v272 = vmax.f32 %v254, 0.0
    %v273 = vpack.c.bf16 %v258, %v257
    %v274 = vpack.c.bf16 %v260, %v259
    %v275 = vpack.c.bf16 %v262, %v261
    %v276 = vpack.c.bf16 %v264, %v263
    %v277 = vpack.c.bf16 %v266, %v265
    %v278 = vpack.c.bf16 %v268, %v267
    %v279 = vpack.c.bf16 %v270, %v269
    %v280 = vpack.c.bf16 %v272, %v271
    %v281 = vld [vmem:[%s5] sm:$0xf]
    %v282 = vld [vmem:[%s5 + $0x4] sm:$0xf]
    %v283 = vld [vmem:[%s6] sm:$0x1]
    %v285 = vlaneseq
    %v286 = vshrl.u32 %v285, 7
    %v287 = vsub.s32 0, %v286
    %v288 = vrot.slane %v283, %v287
    %v292 = vunpack.c.l.b16 %v281
    %v293 = vunpack.c.l.b16 %v282
    %v294 = vpack.c.b16 %v293, %v292
    %vm296 = vcmask 130048
    %v298 = vsel %vm296, %v273, 0
    %v301 = vsel %vm296, %v274, 0
    %v304 = vsel %vm296, %v275, 0
    %v307 = vsel %vm296, %v276, 0
    %v310 = vsel %vm296, %v277, 0
    %v313 = vsel %vm296, %v278, 0
    %v316 = vsel %vm296, %v279, 0
    %v319 = vsel %vm296, %v280, 0
    %321 = vmatprep.subr.bf16.mxu0 0
    %322 = vmatpush1.bf16.msra.mxu0 0
    %323 = vmatprep.subr.bf16.mxu0 0
    %324 = vmatpush1.bf16.msra.mxu0 0
    %325 = vmatprep.subr.bf16.mxu0 0
    %326 = vmatpush1.bf16.msra.mxu0 0
    %327 = vmatprep.subr.bf16.mxu0 0
    %328 = vmatpush1.bf16.msra.mxu0 0
    %329 = vmatprep.subr.bf16.mxu0 0
    %330 = vmatpush1.bf16.msra.mxu0 0
    %331 = vmatprep.subr.bf16.mxu0 0
    %332 = vmatpush1.bf16.msra.mxu0 0
    %333 = vmatprep.subr.bf16.mxu0 0
    %334 = vmatpush1.bf16.msra.mxu0 0
    %335 = vmatprep.subr.bf16.mxu0 0
    %336 = vmatpush1.bf16.msra.mxu0 %v294
    %337 = vmatprep.subr.bf16.mxu0 0
    %338 = vmatpush2.bf16.msra.mxu0 0
    %339 = vmatprep.subr.bf16.mxu0 0
    %340 = vmatpush2.bf16.msra.mxu0 0
    %341 = vmatprep.subr.bf16.mxu0 0
    %342 = vmatpush2.bf16.msra.mxu0 0
    %343 = vmatprep.subr.bf16.mxu0 0
    %344 = vmatpush2.bf16.msra.mxu0 0
    %345 = vmatprep.subr.bf16.mxu0 0
    %346 = vmatpush2.bf16.msra.mxu0 0
    %347 = vmatprep.subr.bf16.mxu0 0
    %348 = vmatpush2.bf16.msra.mxu0 0
    %349 = vmatprep.subr.bf16.mxu0 0
    %350 = vmatpush2.bf16.msra.mxu0 0
    %351 = vmatprep.subr.bf16.mxu0 0
    %352 = vmatpush2.bf16.msra.mxu0 0
    %353 = vmatprep.mubr.bf16.mxu0 0
    %354 = vmatmul.mubr.bf16.gmra.mxu0 %v298
    %v355 = vpop.f32.mrf.mxu0
    %v356 = vadd.f32 %v288, %v355
    %v357 = vpop.f32.mrf.mxu0
    %v358 = vpop.f32.mrf.mxu0
    %v359 = vadd.f32 %v288, %v358
    %v360 = vpop.f32.mrf.mxu0
    %361 = vmatprep.mubr.bf16.mxu0 0
    %362 = vmatmul.mubr.bf16.gmra.mxu0 %v301
    %v363 = vpop.f32.mrf.mxu0
    %v364 = vadd.f32 %v288, %v363
    %v365 = vpop.f32.mrf.mxu0
    %v366 = vpop.f32.mrf.mxu0
    %v367 = vadd.f32 %v288, %v366
    %v368 = vpop.f32.mrf.mxu0
    %369 = vmatprep.mubr.bf16.mxu0 0
    %370 = vmatmul.mubr.bf16.gmra.mxu0 %v304
    %v371 = vpop.f32.mrf.mxu0
    %v372 = vadd.f32 %v288, %v371
    %v373 = vpop.f32.mrf.mxu0
    %v374 = vpop.f32.mrf.mxu0
    %v375 = vadd.f32 %v288, %v374
    %v376 = vpop.f32.mrf.mxu0
    %377 = vmatprep.mubr.bf16.mxu0 0
    %378 = vmatmul.mubr.bf16.gmra.mxu0 %v307
    %v379 = vpop.f32.mrf.mxu0
    %v380 = vadd.f32 %v288, %v379
    %v381 = vpop.f32.mrf.mxu0
    %v382 = vpop.f32.mrf.mxu0
    %v383 = vadd.f32 %v288, %v382
    %v384 = vpop.f32.mrf.mxu0
    %385 = vmatprep.mubr.bf16.mxu0 0
    %386 = vmatmul.mubr.bf16.gmra.mxu0 %v310
    %v387 = vpop.f32.mrf.mxu0
    %v388 = vadd.f32 %v288, %v387
    %v389 = vpop.f32.mrf.mxu0
    %v390 = vpop.f32.mrf.mxu0
    %v391 = vadd.f32 %v288, %v390
    %v392 = vpop.f32.mrf.mxu0
    %393 = vmatprep.mubr.bf16.mxu0 0
    %394 = vmatmul.mubr.bf16.gmra.mxu0 %v313
    %v395 = vpop.f32.mrf.mxu0
    %v396 = vadd.f32 %v288, %v395
    %v397 = vpop.f32.mrf.mxu0
    %v398 = vpop.f32.mrf.mxu0
    %v399 = vadd.f32 %v288, %v398
    %v400 = vpop.f32.mrf.mxu0
    %401 = vmatprep.mubr.bf16.mxu0 0
    %402 = vmatmul.mubr.bf16.gmra.mxu0 %v316
    %v403 = vpop.f32.mrf.mxu0
    %v404 = vadd.f32 %v288, %v403
    %v405 = vpop.f32.mrf.mxu0
    %v406 = vpop.f32.mrf.mxu0
    %v407 = vadd.f32 %v288, %v406
    %v408 = vpop.f32.mrf.mxu0
    %409 = vmatprep.mubr.bf16.mxu0 0
    %410 = vmatmul.mubr.bf16.gmra.mxu0 %v319
    %v411 = vpop.f32.mrf.mxu0
    %v412 = vadd.f32 %v288, %v411
    %v413 = vpop.f32.mrf.mxu0
    %v414 = vpop.f32.mrf.mxu0
    %v415 = vadd.f32 %v288, %v414
    %v416 = vpop.f32.mrf.mxu0
    %417 = vdwg.mxu0
    %vm418 = vcmask 31744
    %v419 = vsel %vm418, %v356, -inf
    %v420 = vrot.slane %v419, 4
    %v421 = vmax.f32 %v419, %v420
    %v422 = vrot.slane %v421, 2
    %v423 = vmax.f32 %v421, %v422
    %v424 = vrot.slane %v423, 1
    %v425 = vmax.f32 %v423, %v424
    %v426 = vsel %vm418, %v359, -inf
    %v427 = vrot.slane %v426, 4
    %v428 = vmax.f32 %v426, %v427
    %v429 = vrot.slane %v428, 2
    %v430 = vmax.f32 %v428, %v429
    %v431 = vrot.slane %v430, 1
    %v432 = vmax.f32 %v430, %v431
    %v433 = vsel %vm418, %v364, -inf
    %v434 = vrot.slane %v433, 4
    %v435 = vmax.f32 %v433, %v434
    %v436 = vrot.slane %v435, 2
    %v437 = vmax.f32 %v435, %v436
    %v438 = vrot.slane %v437, 1
    %v439 = vmax.f32 %v437, %v438
    %v440 = vsel %vm418, %v367, -inf
    %v441 = vrot.slane %v440, 4
    %v442 = vmax.f32 %v440, %v441
    %v443 = vrot.slane %v442, 2
    %v444 = vmax.f32 %v442, %v443
    %v445 = vrot.slane %v444, 1
    %v446 = vmax.f32 %v444, %v445
    %v447 = vsel %vm418, %v372, -inf
    %v448 = vrot.slane %v447, 4
    %v449 = vmax.f32 %v447, %v448
    %v450 = vrot.slane %v449, 2
    %v451 = vmax.f32 %v449, %v450
    %v452 = vrot.slane %v451, 1
    %v453 = vmax.f32 %v451, %v452
    %v454 = vsel %vm418, %v375, -inf
    %v455 = vrot.slane %v454, 4
    %v456 = vmax.f32 %v454, %v455
    %v457 = vrot.slane %v456, 2
    %v458 = vmax.f32 %v456, %v457
    %v459 = vrot.slane %v458, 1
    %v460 = vmax.f32 %v458, %v459
    %v461 = vsel %vm418, %v380, -inf
    %v462 = vrot.slane %v461, 4
    %v463 = vmax.f32 %v461, %v462
    %v464 = vrot.slane %v463, 2
    %v465 = vmax.f32 %v463, %v464
    %v466 = vrot.slane %v465, 1
    %v467 = vmax.f32 %v465, %v466
    %v468 = vsel %vm418, %v383, -inf
    %v469 = vrot.slane %v468, 4
    %v470 = vmax.f32 %v468, %v469
    %v471 = vrot.slane %v470, 2
    %v472 = vmax.f32 %v470, %v471
    %v473 = vrot.slane %v472, 1
    %v474 = vmax.f32 %v472, %v473
    %v475 = vsel %vm418, %v388, -inf
    %v476 = vrot.slane %v475, 4
    %v477 = vmax.f32 %v475, %v476
    %v478 = vrot.slane %v477, 2
    %v479 = vmax.f32 %v477, %v478
    %v480 = vrot.slane %v479, 1
    %v481 = vmax.f32 %v479, %v480
    %v482 = vsel %vm418, %v391, -inf
    %v483 = vrot.slane %v482, 4
    %v484 = vmax.f32 %v482, %v483
    %v485 = vrot.slane %v484, 2
    %v486 = vmax.f32 %v484, %v485
    %v487 = vrot.slane %v486, 1
    %v488 = vmax.f32 %v486, %v487
    %v489 = vsel %vm418, %v396, -inf
    %v490 = vrot.slane %v489, 4
    %v491 = vmax.f32 %v489, %v490
    %v492 = vrot.slane %v491, 2
    %v493 = vmax.f32 %v491, %v492
    %v494 = vrot.slane %v493, 1
    %v495 = vmax.f32 %v493, %v494
    %v496 = vsel %vm418, %v399, -inf
    %v497 = vrot.slane %v496, 4
    %v498 = vmax.f32 %v496, %v497
    %v499 = vrot.slane %v498, 2
    %v500 = vmax.f32 %v498, %v499
    %v501 = vrot.slane %v500, 1
    %v502 = vmax.f32 %v500, %v501
    %v503 = vsel %vm418, %v404, -inf
    %v504 = vrot.slane %v503, 4
    %v505 = vmax.f32 %v503, %v504
    %v506 = vrot.slane %v505, 2
    %v507 = vmax.f32 %v505, %v506
    %v508 = vrot.slane %v507, 1
    %v509 = vmax.f32 %v507, %v508
    %v510 = vsel %vm418, %v407, -inf
    %v511 = vrot.slane %v510, 4
    %v512 = vmax.f32 %v510, %v511
    %v513 = vrot.slane %v512, 2
    %v514 = vmax.f32 %v512, %v513
    %v515 = vrot.slane %v514, 1
    %v516 = vmax.f32 %v514, %v515
    %v517 = vsel %vm418, %v412, -inf
    %v518 = vrot.slane %v517, 4
    %v519 = vmax.f32 %v517, %v518
    %v520 = vrot.slane %v519, 2
    %v521 = vmax.f32 %v519, %v520
    %v522 = vrot.slane %v521, 1
    %v523 = vmax.f32 %v521, %v522
    %v524 = vsel %vm418, %v415, -inf
    %v525 = vrot.slane %v524, 4
    %v526 = vmax.f32 %v524, %v525
    %v527 = vrot.slane %v526, 2
    %v528 = vmax.f32 %v526, %v527
    %v529 = vrot.slane %v528, 1
    %v530 = vmax.f32 %v528, %v529
    %v531 = vsub.f32 %v356, %v425
    %v532 = vsub.f32 %v359, %v432
    %v533 = vsub.f32 %v364, %v439
    %v534 = vsub.f32 %v367, %v446
    %v535 = vsub.f32 %v372, %v453
    %v536 = vsub.f32 %v375, %v460
    %v537 = vsub.f32 %v380, %v467
    %v538 = vsub.f32 %v383, %v474
    %v539 = vsub.f32 %v388, %v481
    %v540 = vsub.f32 %v391, %v488
    %v541 = vsub.f32 %v396, %v495
    %v542 = vsub.f32 %v399, %v502
    %v543 = vsub.f32 %v404, %v509
    %v544 = vsub.f32 %v407, %v516
    %v545 = vsub.f32 %v412, %v523
    %v546 = vsub.f32 %v415, %v530
    %v547 = vmul.f32 %v531, 1.442695
    %v548 = vpow.pop %v547
    %v549 = vmul.f32 %v532, 1.442695
    %v550 = vpow.pop %v549
    %v551 = vmul.f32 %v533, 1.442695
    %v552 = vpow.pop %v551
    %v553 = vmul.f32 %v534, 1.442695
    %v554 = vpow.pop %v553
    %v555 = vmul.f32 %v535, 1.442695
    %v556 = vpow.pop %v555
    %v557 = vmul.f32 %v536, 1.442695
    %v558 = vpow.pop %v557
    %v559 = vmul.f32 %v537, 1.442695
    %v560 = vpow.pop %v559
    %v561 = vmul.f32 %v538, 1.442695
    %v562 = vpow.pop %v561
    %v563 = vmul.f32 %v539, 1.442695
    %v564 = vpow.pop %v563
    %v565 = vmul.f32 %v540, 1.442695
    %v566 = vpow.pop %v565
    %v567 = vmul.f32 %v541, 1.442695
    %v568 = vpow.pop %v567
    %v569 = vmul.f32 %v542, 1.442695
    %v570 = vpow.pop %v569
    %v571 = vmul.f32 %v543, 1.442695
    %v572 = vpow.pop %v571
    %v573 = vmul.f32 %v544, 1.442695
    %v574 = vpow.pop %v573
    %v575 = vmul.f32 %v545, 1.442695
    %v576 = vpow.pop %v575
    %v577 = vmul.f32 %v546, 1.442695
    %v578 = vpow.pop %v577
    %v579 = vsel %vm418, %v548, 0.0
    %v580 = vrot.slane %v579, 4
    %v581 = vadd.f32 %v579, %v580
    %v582 = vrot.slane %v581, 2
    %v583 = vadd.f32 %v581, %v582
    %v584 = vrot.slane %v583, 1
    %v585 = vadd.f32 %v583, %v584
    %v586 = vsel %vm418, %v550, 0.0
    %v587 = vrot.slane %v586, 4
    %v588 = vadd.f32 %v586, %v587
    %v589 = vrot.slane %v588, 2
    %v590 = vadd.f32 %v588, %v589
    %v591 = vrot.slane %v590, 1
    %v592 = vadd.f32 %v590, %v591
    %v593 = vsel %vm418, %v552, 0.0
    %v594 = vrot.slane %v593, 4
    %v595 = vadd.f32 %v593, %v594
    %v596 = vrot.slane %v595, 2
    %v597 = vadd.f32 %v595, %v596
    %v598 = vrot.slane %v597, 1
    %v599 = vadd.f32 %v597, %v598
    %v600 = vsel %vm418, %v554, 0.0
    %v601 = vrot.slane %v600, 4
    %v602 = vadd.f32 %v600, %v601
    %v603 = vrot.slane %v602, 2
    %v604 = vadd.f32 %v602, %v603
    %v605 = vrot.slane %v604, 1
    %v606 = vadd.f32 %v604, %v605
    %v607 = vsel %vm418, %v556, 0.0
    %v608 = vrot.slane %v607, 4
    %v609 = vadd.f32 %v607, %v608
    %v610 = vrot.slane %v609, 2
    %v611 = vadd.f32 %v609, %v610
    %v612 = vrot.slane %v611, 1
    %v613 = vadd.f32 %v611, %v612
    %v614 = vsel %vm418, %v558, 0.0
    %v615 = vrot.slane %v614, 4
    %v616 = vadd.f32 %v614, %v615
    %v617 = vrot.slane %v616, 2
    %v618 = vadd.f32 %v616, %v617
    %v619 = vrot.slane %v618, 1
    %v620 = vadd.f32 %v618, %v619
    %v621 = vsel %vm418, %v560, 0.0
    %v622 = vrot.slane %v621, 4
    %v623 = vadd.f32 %v621, %v622
    %v624 = vrot.slane %v623, 2
    %v625 = vadd.f32 %v623, %v624
    %v626 = vrot.slane %v625, 1
    %v627 = vadd.f32 %v625, %v626
    %v628 = vsel %vm418, %v562, 0.0
    %v629 = vrot.slane %v628, 4
    %v630 = vadd.f32 %v628, %v629
    %v631 = vrot.slane %v630, 2
    %v632 = vadd.f32 %v630, %v631
    %v633 = vrot.slane %v632, 1
    %v634 = vadd.f32 %v632, %v633
    %v635 = vsel %vm418, %v564, 0.0
    %v636 = vrot.slane %v635, 4
    %v637 = vadd.f32 %v635, %v636
    %v638 = vrot.slane %v637, 2
    %v639 = vadd.f32 %v637, %v638
    %v640 = vrot.slane %v639, 1
    %v641 = vadd.f32 %v639, %v640
    %v642 = vsel %vm418, %v566, 0.0
    %v643 = vrot.slane %v642, 4
    %v644 = vadd.f32 %v642, %v643
    %v645 = vrot.slane %v644, 2
    %v646 = vadd.f32 %v644, %v645
    %v647 = vrot.slane %v646, 1
    %v648 = vadd.f32 %v646, %v647
    %v649 = vsel %vm418, %v568, 0.0
    %v650 = vrot.slane %v649, 4
    %v651 = vadd.f32 %v649, %v650
    %v652 = vrot.slane %v651, 2
    %v653 = vadd.f32 %v651, %v652
    %v654 = vrot.slane %v653, 1
    %v655 = vadd.f32 %v653, %v654
    %v656 = vsel %vm418, %v570, 0.0
    %v657 = vrot.slane %v656, 4
    %v658 = vadd.f32 %v656, %v657
    %v659 = vrot.slane %v658, 2
    %v660 = vadd.f32 %v658, %v659
    %v661 = vrot.slane %v660, 1
    %v662 = vadd.f32 %v660, %v661
    %v663 = vsel %vm418, %v572, 0.0
    %v664 = vrot.slane %v663, 4
    %v665 = vadd.f32 %v663, %v664
    %v666 = vrot.slane %v665, 2
    %v667 = vadd.f32 %v665, %v666
    %v668 = vrot.slane %v667, 1
    %v669 = vadd.f32 %v667, %v668
    %v670 = vsel %vm418, %v574, 0.0
    %v671 = vrot.slane %v670, 4
    %v672 = vadd.f32 %v670, %v671
    %v673 = vrot.slane %v672, 2
    %v674 = vadd.f32 %v672, %v673
    %v675 = vrot.slane %v674, 1
    %v676 = vadd.f32 %v674, %v675
    %v677 = vsel %vm418, %v576, 0.0
    %v678 = vrot.slane %v677, 4
    %v679 = vadd.f32 %v677, %v678
    %v680 = vrot.slane %v679, 2
    %v681 = vadd.f32 %v679, %v680
    %v682 = vrot.slane %v681, 1
    %v683 = vadd.f32 %v681, %v682
    %v684 = vsel %vm418, %v578, 0.0
    %v685 = vrot.slane %v684, 4
    %v686 = vadd.f32 %v684, %v685
    %v687 = vrot.slane %v686, 2
    %v688 = vadd.f32 %v686, %v687
    %v689 = vrot.slane %v688, 1
    %v690 = vadd.f32 %v688, %v689
    %v691 = vrcp.pop %v585
    %v692 = vrcp.pop %v592
    %v693 = vrcp.pop %v599
    %v694 = vrcp.pop %v606
    %v695 = vrcp.pop %v613
    %v696 = vrcp.pop %v620
    %v697 = vrcp.pop %v627
    %v698 = vrcp.pop %v634
    %v699 = vrcp.pop %v641
    %v700 = vrcp.pop %v648
    %v701 = vrcp.pop %v655
    %v702 = vrcp.pop %v662
    %v703 = vrcp.pop %v669
    %v704 = vrcp.pop %v676
    %v705 = vrcp.pop %v683
    %v706 = vrcp.pop %v690
    %v707 = vmul.f32 %v548, %v691
    %v708 = vmul.f32 %v550, %v692
    %v709 = vmul.f32 %v552, %v693
    %v710 = vmul.f32 %v554, %v694
    %v711 = vmul.f32 %v556, %v695
    %v712 = vmul.f32 %v558, %v696
    %v713 = vmul.f32 %v560, %v697
    %v714 = vmul.f32 %v562, %v698
    %v715 = vmul.f32 %v564, %v699
    %v716 = vmul.f32 %v566, %v700
    %v717 = vmul.f32 %v568, %v701
    %v718 = vmul.f32 %v570, %v702
    %v719 = vmul.f32 %v572, %v703
    %v720 = vmul.f32 %v574, %v704
    %v721 = vmul.f32 %v576, %v705
    %v722 = vmul.f32 %v578, %v706
    %724 = vset.pattern.permute.xlu0 0
    %725 = vperm.xlu0 %724, %v707
    %v726 = vpop.permute.xlu0 %725
    %729 = vset.pattern.permute.xlu0 0
    %730 = vperm.xlu0 %729, %v708
    %v731 = vpop.permute.xlu0 %730
    %734 = vset.pattern.permute.xlu0 0
    %735 = vperm.xlu0 %734, %v709
    %v736 = vpop.permute.xlu0 %735
    %739 = vset.pattern.permute.xlu0 0
    %740 = vperm.xlu0 %739, %v710
    %v741 = vpop.permute.xlu0 %740
    %744 = vset.pattern.permute.xlu0 0
    %745 = vperm.xlu0 %744, %v711
    %v746 = vpop.permute.xlu0 %745
    %749 = vset.pattern.permute.xlu0 0
    %750 = vperm.xlu0 %749, %v712
    %v751 = vpop.permute.xlu0 %750
    %754 = vset.pattern.permute.xlu0 0
    %755 = vperm.xlu0 %754, %v713
    %v756 = vpop.permute.xlu0 %755
    %759 = vset.pattern.permute.xlu0 0
    %760 = vperm.xlu0 %759, %v714
    %v761 = vpop.permute.xlu0 %760
    %764 = vset.pattern.permute.xlu0 0
    %765 = vperm.xlu0 %764, %v715
    %v766 = vpop.permute.xlu0 %765
    %769 = vset.pattern.permute.xlu0 0
    %770 = vperm.xlu0 %769, %v716
    %v771 = vpop.permute.xlu0 %770
    %774 = vset.pattern.permute.xlu0 0
    %775 = vperm.xlu0 %774, %v717
    %v776 = vpop.permute.xlu0 %775
    %779 = vset.pattern.permute.xlu0 0
    %780 = vperm.xlu0 %779, %v718
    %v781 = vpop.permute.xlu0 %780
    %784 = vset.pattern.permute.xlu0 0
    %785 = vperm.xlu0 %784, %v719
    %v786 = vpop.permute.xlu0 %785
    %789 = vset.pattern.permute.xlu0 0
    %790 = vperm.xlu0 %789, %v720
    %v791 = vpop.permute.xlu0 %790
    %794 = vset.pattern.permute.xlu0 0
    %795 = vperm.xlu0 %794, %v721
    %v796 = vpop.permute.xlu0 %795
    %799 = vset.pattern.permute.xlu0 0
    %800 = vperm.xlu0 %799, %v722
    %v801 = vpop.permute.xlu0 %800
    %v803 = vmul.f32 %v726, %v88
    %v804 = vmul.f32 %v731, %v89
    %v805 = vmul.f32 %v736, %v90
    %v806 = vmul.f32 %v741, %v91
    %v807 = vmul.f32 %v746, %v92
    %v808 = vmul.f32 %v751, %v93
    %v809 = vmul.f32 %v756, %v94
    %v810 = vmul.f32 %v761, %v95
    %v811 = vmul.f32 %v766, %v96
    %v812 = vmul.f32 %v771, %v97
    %v813 = vmul.f32 %v776, %v98
    %v814 = vmul.f32 %v781, %v99
    %v815 = vmul.f32 %v786, %v100
    %v816 = vmul.f32 %v791, %v101
    %v817 = vmul.f32 %v796, %v102
    %v818 = vmul.f32 %v801, %v103
    %v819 = vsel %vm135, %v803, 0.0
    %v820 = vrot.slane %v819, 4
    %v821 = vadd.f32 %v819, %v820
    %v822 = vrot.slane %v821, 2
    %v823 = vadd.f32 %v821, %v822
    %v824 = vrot.slane %v823, 1
    %v825 = vadd.f32 %v823, %v824
    %v826 = vsel %vm135, %v804, 0.0
    %v827 = vrot.slane %v826, 4
    %v828 = vadd.f32 %v826, %v827
    %v829 = vrot.slane %v828, 2
    %v830 = vadd.f32 %v828, %v829
    %v831 = vrot.slane %v830, 1
    %v832 = vadd.f32 %v830, %v831
    %v833 = vsel %vm135, %v805, 0.0
    %v834 = vrot.slane %v833, 4
    %v835 = vadd.f32 %v833, %v834
    %v836 = vrot.slane %v835, 2
    %v837 = vadd.f32 %v835, %v836
    %v838 = vrot.slane %v837, 1
    %v839 = vadd.f32 %v837, %v838
    %v840 = vsel %vm135, %v806, 0.0
    %v841 = vrot.slane %v840, 4
    %v842 = vadd.f32 %v840, %v841
    %v843 = vrot.slane %v842, 2
    %v844 = vadd.f32 %v842, %v843
    %v845 = vrot.slane %v844, 1
    %v846 = vadd.f32 %v844, %v845
    %v847 = vsel %vm135, %v807, 0.0
    %v848 = vrot.slane %v847, 4
    %v849 = vadd.f32 %v847, %v848
    %v850 = vrot.slane %v849, 2
    %v851 = vadd.f32 %v849, %v850
    %v852 = vrot.slane %v851, 1
    %v853 = vadd.f32 %v851, %v852
    %v854 = vsel %vm135, %v808, 0.0
    %v855 = vrot.slane %v854, 4
    %v856 = vadd.f32 %v854, %v855
    %v857 = vrot.slane %v856, 2
    %v858 = vadd.f32 %v856, %v857
    %v859 = vrot.slane %v858, 1
    %v860 = vadd.f32 %v858, %v859
    %v861 = vsel %vm135, %v809, 0.0
    %v862 = vrot.slane %v861, 4
    %v863 = vadd.f32 %v861, %v862
    %v864 = vrot.slane %v863, 2
    %v865 = vadd.f32 %v863, %v864
    %v866 = vrot.slane %v865, 1
    %v867 = vadd.f32 %v865, %v866
    %v868 = vsel %vm135, %v810, 0.0
    %v869 = vrot.slane %v868, 4
    %v870 = vadd.f32 %v868, %v869
    %v871 = vrot.slane %v870, 2
    %v872 = vadd.f32 %v870, %v871
    %v873 = vrot.slane %v872, 1
    %v874 = vadd.f32 %v872, %v873
    %v875 = vsel %vm135, %v811, 0.0
    %v876 = vrot.slane %v875, 4
    %v877 = vadd.f32 %v875, %v876
    %v878 = vrot.slane %v877, 2
    %v879 = vadd.f32 %v877, %v878
    %v880 = vrot.slane %v879, 1
    %v881 = vadd.f32 %v879, %v880
    %v882 = vsel %vm135, %v812, 0.0
    %v883 = vrot.slane %v882, 4
    %v884 = vadd.f32 %v882, %v883
    %v885 = vrot.slane %v884, 2
    %v886 = vadd.f32 %v884, %v885
    %v887 = vrot.slane %v886, 1
    %v888 = vadd.f32 %v886, %v887
    %v889 = vsel %vm135, %v813, 0.0
    %v890 = vrot.slane %v889, 4
    %v891 = vadd.f32 %v889, %v890
    %v892 = vrot.slane %v891, 2
    %v893 = vadd.f32 %v891, %v892
    %v894 = vrot.slane %v893, 1
    %v895 = vadd.f32 %v893, %v894
    %v896 = vsel %vm135, %v814, 0.0
    %v897 = vrot.slane %v896, 4
    %v898 = vadd.f32 %v896, %v897
    %v899 = vrot.slane %v898, 2
    %v900 = vadd.f32 %v898, %v899
    %v901 = vrot.slane %v900, 1
    %v902 = vadd.f32 %v900, %v901
    %v903 = vsel %vm135, %v815, 0.0
    %v904 = vrot.slane %v903, 4
    %v905 = vadd.f32 %v903, %v904
    %v906 = vrot.slane %v905, 2
    %v907 = vadd.f32 %v905, %v906
    %v908 = vrot.slane %v907, 1
    %v909 = vadd.f32 %v907, %v908
    %v910 = vsel %vm135, %v816, 0.0
    %v911 = vrot.slane %v910, 4
    %v912 = vadd.f32 %v910, %v911
    %v913 = vrot.slane %v912, 2
    %v914 = vadd.f32 %v912, %v913
    %v915 = vrot.slane %v914, 1
    %v916 = vadd.f32 %v914, %v915
    %v917 = vsel %vm135, %v817, 0.0
    %v918 = vrot.slane %v917, 4
    %v919 = vadd.f32 %v917, %v918
    %v920 = vrot.slane %v919, 2
    %v921 = vadd.f32 %v919, %v920
    %v922 = vrot.slane %v921, 1
    %v923 = vadd.f32 %v921, %v922
    %v924 = vsel %vm135, %v818, 0.0
    %v925 = vrot.slane %v924, 4
    %v926 = vadd.f32 %v924, %v925
    %v927 = vrot.slane %v926, 2
    %v928 = vadd.f32 %v926, %v927
    %v929 = vrot.slane %v928, 1
    %v930 = vadd.f32 %v928, %v929
    %931 = vset.pattern.permute.xlu0 1
    %932 = vperm.xlu0 %931, %v707
    %v933 = vpop.permute.xlu0 %932
    %935 = vset.pattern.permute.xlu0 1
    %936 = vperm.xlu0 %935, %v708
    %v937 = vpop.permute.xlu0 %936
    %939 = vset.pattern.permute.xlu0 1
    %940 = vperm.xlu0 %939, %v709
    %v941 = vpop.permute.xlu0 %940
    %943 = vset.pattern.permute.xlu0 1
    %944 = vperm.xlu0 %943, %v710
    %v945 = vpop.permute.xlu0 %944
    %947 = vset.pattern.permute.xlu0 1
    %948 = vperm.xlu0 %947, %v711
    %v949 = vpop.permute.xlu0 %948
    %951 = vset.pattern.permute.xlu0 1
    %952 = vperm.xlu0 %951, %v712
    %v953 = vpop.permute.xlu0 %952
    %955 = vset.pattern.permute.xlu0 1
    %956 = vperm.xlu0 %955, %v713
    %v957 = vpop.permute.xlu0 %956
    %959 = vset.pattern.permute.xlu0 1
    %960 = vperm.xlu0 %959, %v714
    %v961 = vpop.permute.xlu0 %960
    %963 = vset.pattern.permute.xlu0 1
    %964 = vperm.xlu0 %963, %v715
    %v965 = vpop.permute.xlu0 %964
    %967 = vset.pattern.permute.xlu0 1
    %968 = vperm.xlu0 %967, %v716
    %v969 = vpop.permute.xlu0 %968
    %971 = vset.pattern.permute.xlu0 1
    %972 = vperm.xlu0 %971, %v717
    %v973 = vpop.permute.xlu0 %972
    %975 = vset.pattern.permute.xlu0 1
    %976 = vperm.xlu0 %975, %v718
    %v977 = vpop.permute.xlu0 %976
    %979 = vset.pattern.permute.xlu0 1
    %980 = vperm.xlu0 %979, %v719
    %v981 = vpop.permute.xlu0 %980
    %983 = vset.pattern.permute.xlu0 1
    %984 = vperm.xlu0 %983, %v720
    %v985 = vpop.permute.xlu0 %984
    %987 = vset.pattern.permute.xlu0 1
    %988 = vperm.xlu0 %987, %v721
    %v989 = vpop.permute.xlu0 %988
    %991 = vset.pattern.permute.xlu0 1
    %992 = vperm.xlu0 %991, %v722
    %v993 = vpop.permute.xlu0 %992
    %v995 = vmul.f32 %v933, %v88
    %v996 = vmul.f32 %v937, %v89
    %v997 = vmul.f32 %v941, %v90
    %v998 = vmul.f32 %v945, %v91
    %v999 = vmul.f32 %v949, %v92
    %v1000 = vmul.f32 %v953, %v93
    %v1001 = vmul.f32 %v957, %v94
    %v1002 = vmul.f32 %v961, %v95
    %v1003 = vmul.f32 %v965, %v96
    %v1004 = vmul.f32 %v969, %v97
    %v1005 = vmul.f32 %v973, %v98
    %v1006 = vmul.f32 %v977, %v99
    %v1007 = vmul.f32 %v981, %v100
    %v1008 = vmul.f32 %v985, %v101
    %v1009 = vmul.f32 %v989, %v102
    %v1010 = vmul.f32 %v993, %v103
    %v1011 = vsel %vm135, %v995, 0.0
    %v1012 = vrot.slane %v1011, 4
    %v1013 = vadd.f32 %v1011, %v1012
    %v1014 = vrot.slane %v1013, 2
    %v1015 = vadd.f32 %v1013, %v1014
    %v1016 = vrot.slane %v1015, 1
    %v1017 = vadd.f32 %v1015, %v1016
    %v1018 = vsel %vm135, %v996, 0.0
    %v1019 = vrot.slane %v1018, 4
    %v1020 = vadd.f32 %v1018, %v1019
    %v1021 = vrot.slane %v1020, 2
    %v1022 = vadd.f32 %v1020, %v1021
    %v1023 = vrot.slane %v1022, 1
    %v1024 = vadd.f32 %v1022, %v1023
    %v1025 = vsel %vm135, %v997, 0.0
    %v1026 = vrot.slane %v1025, 4
    %v1027 = vadd.f32 %v1025, %v1026
    %v1028 = vrot.slane %v1027, 2
    %v1029 = vadd.f32 %v1027, %v1028
    %v1030 = vrot.slane %v1029, 1
    %v1031 = vadd.f32 %v1029, %v1030
    %v1032 = vsel %vm135, %v998, 0.0
    %v1033 = vrot.slane %v1032, 4
    %v1034 = vadd.f32 %v1032, %v1033
    %v1035 = vrot.slane %v1034, 2
    %v1036 = vadd.f32 %v1034, %v1035
    %v1037 = vrot.slane %v1036, 1
    %v1038 = vadd.f32 %v1036, %v1037
    %v1039 = vsel %vm135, %v999, 0.0
    %v1040 = vrot.slane %v1039, 4
    %v1041 = vadd.f32 %v1039, %v1040
    %v1042 = vrot.slane %v1041, 2
    %v1043 = vadd.f32 %v1041, %v1042
    %v1044 = vrot.slane %v1043, 1
    %v1045 = vadd.f32 %v1043, %v1044
    %v1046 = vsel %vm135, %v1000, 0.0
    %v1047 = vrot.slane %v1046, 4
    %v1048 = vadd.f32 %v1046, %v1047
    %v1049 = vrot.slane %v1048, 2
    %v1050 = vadd.f32 %v1048, %v1049
    %v1051 = vrot.slane %v1050, 1
    %v1052 = vadd.f32 %v1050, %v1051
    %v1053 = vsel %vm135, %v1001, 0.0
    %v1054 = vrot.slane %v1053, 4
    %v1055 = vadd.f32 %v1053, %v1054
    %v1056 = vrot.slane %v1055, 2
    %v1057 = vadd.f32 %v1055, %v1056
    %v1058 = vrot.slane %v1057, 1
    %v1059 = vadd.f32 %v1057, %v1058
    %v1060 = vsel %vm135, %v1002, 0.0
    %v1061 = vrot.slane %v1060, 4
    %v1062 = vadd.f32 %v1060, %v1061
    %v1063 = vrot.slane %v1062, 2
    %v1064 = vadd.f32 %v1062, %v1063
    %v1065 = vrot.slane %v1064, 1
    %v1066 = vadd.f32 %v1064, %v1065
    %v1067 = vsel %vm135, %v1003, 0.0
    %v1068 = vrot.slane %v1067, 4
    %v1069 = vadd.f32 %v1067, %v1068
    %v1070 = vrot.slane %v1069, 2
    %v1071 = vadd.f32 %v1069, %v1070
    %v1072 = vrot.slane %v1071, 1
    %v1073 = vadd.f32 %v1071, %v1072
    %v1074 = vsel %vm135, %v1004, 0.0
    %v1075 = vrot.slane %v1074, 4
    %v1076 = vadd.f32 %v1074, %v1075
    %v1077 = vrot.slane %v1076, 2
    %v1078 = vadd.f32 %v1076, %v1077
    %v1079 = vrot.slane %v1078, 1
    %v1080 = vadd.f32 %v1078, %v1079
    %v1081 = vsel %vm135, %v1005, 0.0
    %v1082 = vrot.slane %v1081, 4
    %v1083 = vadd.f32 %v1081, %v1082
    %v1084 = vrot.slane %v1083, 2
    %v1085 = vadd.f32 %v1083, %v1084
    %v1086 = vrot.slane %v1085, 1
    %v1087 = vadd.f32 %v1085, %v1086
    %v1088 = vsel %vm135, %v1006, 0.0
    %v1089 = vrot.slane %v1088, 4
    %v1090 = vadd.f32 %v1088, %v1089
    %v1091 = vrot.slane %v1090, 2
    %v1092 = vadd.f32 %v1090, %v1091
    %v1093 = vrot.slane %v1092, 1
    %v1094 = vadd.f32 %v1092, %v1093
    %v1095 = vsel %vm135, %v1007, 0.0
    %v1096 = vrot.slane %v1095, 4
    %v1097 = vadd.f32 %v1095, %v1096
    %v1098 = vrot.slane %v1097, 2
    %v1099 = vadd.f32 %v1097, %v1098
    %v1100 = vrot.slane %v1099, 1
    %v1101 = vadd.f32 %v1099, %v1100
    %v1102 = vsel %vm135, %v1008, 0.0
    %v1103 = vrot.slane %v1102, 4
    %v1104 = vadd.f32 %v1102, %v1103
    %v1105 = vrot.slane %v1104, 2
    %v1106 = vadd.f32 %v1104, %v1105
    %v1107 = vrot.slane %v1106, 1
    %v1108 = vadd.f32 %v1106, %v1107
    %v1109 = vsel %vm135, %v1009, 0.0
    %v1110 = vrot.slane %v1109, 4
    %v1111 = vadd.f32 %v1109, %v1110
    %v1112 = vrot.slane %v1111, 2
    %v1113 = vadd.f32 %v1111, %v1112
    %v1114 = vrot.slane %v1113, 1
    %v1115 = vadd.f32 %v1113, %v1114
    %v1116 = vsel %vm135, %v1010, 0.0
    %v1117 = vrot.slane %v1116, 4
    %v1118 = vadd.f32 %v1116, %v1117
    %v1119 = vrot.slane %v1118, 2
    %v1120 = vadd.f32 %v1118, %v1119
    %v1121 = vrot.slane %v1120, 1
    %v1122 = vadd.f32 %v1120, %v1121
    %1123 = vset.pattern.permute.xlu0 2
    %1124 = vperm.xlu0 %1123, %v707
    %v1125 = vpop.permute.xlu0 %1124
    %1127 = vset.pattern.permute.xlu0 2
    %1128 = vperm.xlu0 %1127, %v708
    %v1129 = vpop.permute.xlu0 %1128
    %1131 = vset.pattern.permute.xlu0 2
    %1132 = vperm.xlu0 %1131, %v709
    %v1133 = vpop.permute.xlu0 %1132
    %1135 = vset.pattern.permute.xlu0 2
    %1136 = vperm.xlu0 %1135, %v710
    %v1137 = vpop.permute.xlu0 %1136
    %1139 = vset.pattern.permute.xlu0 2
    %1140 = vperm.xlu0 %1139, %v711
    %v1141 = vpop.permute.xlu0 %1140
    %1143 = vset.pattern.permute.xlu0 2
    %1144 = vperm.xlu0 %1143, %v712
    %v1145 = vpop.permute.xlu0 %1144
    %1147 = vset.pattern.permute.xlu0 2
    %1148 = vperm.xlu0 %1147, %v713
    %v1149 = vpop.permute.xlu0 %1148
    %1151 = vset.pattern.permute.xlu0 2
    %1152 = vperm.xlu0 %1151, %v714
    %v1153 = vpop.permute.xlu0 %1152
    %1155 = vset.pattern.permute.xlu0 2
    %1156 = vperm.xlu0 %1155, %v715
    %v1157 = vpop.permute.xlu0 %1156
    %1159 = vset.pattern.permute.xlu0 2
    %1160 = vperm.xlu0 %1159, %v716
    %v1161 = vpop.permute.xlu0 %1160
    %1163 = vset.pattern.permute.xlu0 2
    %1164 = vperm.xlu0 %1163, %v717
    %v1165 = vpop.permute.xlu0 %1164
    %1167 = vset.pattern.permute.xlu0 2
    %1168 = vperm.xlu0 %1167, %v718
    %v1169 = vpop.permute.xlu0 %1168
    %1171 = vset.pattern.permute.xlu0 2
    %1172 = vperm.xlu0 %1171, %v719
    %v1173 = vpop.permute.xlu0 %1172
    %1175 = vset.pattern.permute.xlu0 2
    %1176 = vperm.xlu0 %1175, %v720
    %v1177 = vpop.permute.xlu0 %1176
    %1179 = vset.pattern.permute.xlu0 2
    %1180 = vperm.xlu0 %1179, %v721
    %v1181 = vpop.permute.xlu0 %1180
    %1183 = vset.pattern.permute.xlu0 2
    %1184 = vperm.xlu0 %1183, %v722
    %v1185 = vpop.permute.xlu0 %1184
    %v1187 = vmul.f32 %v1125, %v88
    %v1188 = vmul.f32 %v1129, %v89
    %v1189 = vmul.f32 %v1133, %v90
    %v1190 = vmul.f32 %v1137, %v91
    %v1191 = vmul.f32 %v1141, %v92
    %v1192 = vmul.f32 %v1145, %v93
    %v1193 = vmul.f32 %v1149, %v94
    %v1194 = vmul.f32 %v1153, %v95
    %v1195 = vmul.f32 %v1157, %v96
    %v1196 = vmul.f32 %v1161, %v97
    %v1197 = vmul.f32 %v1165, %v98
    %v1198 = vmul.f32 %v1169, %v99
    %v1199 = vmul.f32 %v1173, %v100
    %v1200 = vmul.f32 %v1177, %v101
    %v1201 = vmul.f32 %v1181, %v102
    %v1202 = vmul.f32 %v1185, %v103
    %v1203 = vsel %vm135, %v1187, 0.0
    %v1204 = vrot.slane %v1203, 4
    %v1205 = vadd.f32 %v1203, %v1204
    %v1206 = vrot.slane %v1205, 2
    %v1207 = vadd.f32 %v1205, %v1206
    %v1208 = vrot.slane %v1207, 1
    %v1209 = vadd.f32 %v1207, %v1208
    %v1210 = vsel %vm135, %v1188, 0.0
    %v1211 = vrot.slane %v1210, 4
    %v1212 = vadd.f32 %v1210, %v1211
    %v1213 = vrot.slane %v1212, 2
    %v1214 = vadd.f32 %v1212, %v1213
    %v1215 = vrot.slane %v1214, 1
    %v1216 = vadd.f32 %v1214, %v1215
    %v1217 = vsel %vm135, %v1189, 0.0
    %v1218 = vrot.slane %v1217, 4
    %v1219 = vadd.f32 %v1217, %v1218
    %v1220 = vrot.slane %v1219, 2
    %v1221 = vadd.f32 %v1219, %v1220
    %v1222 = vrot.slane %v1221, 1
    %v1223 = vadd.f32 %v1221, %v1222
    %v1224 = vsel %vm135, %v1190, 0.0
    %v1225 = vrot.slane %v1224, 4
    %v1226 = vadd.f32 %v1224, %v1225
    %v1227 = vrot.slane %v1226, 2
    %v1228 = vadd.f32 %v1226, %v1227
    %v1229 = vrot.slane %v1228, 1
    %v1230 = vadd.f32 %v1228, %v1229
    %v1231 = vsel %vm135, %v1191, 0.0
    %v1232 = vrot.slane %v1231, 4
    %v1233 = vadd.f32 %v1231, %v1232
    %v1234 = vrot.slane %v1233, 2
    %v1235 = vadd.f32 %v1233, %v1234
    %v1236 = vrot.slane %v1235, 1
    %v1237 = vadd.f32 %v1235, %v1236
    %v1238 = vsel %vm135, %v1192, 0.0
    %v1239 = vrot.slane %v1238, 4
    %v1240 = vadd.f32 %v1238, %v1239
    %v1241 = vrot.slane %v1240, 2
    %v1242 = vadd.f32 %v1240, %v1241
    %v1243 = vrot.slane %v1242, 1
    %v1244 = vadd.f32 %v1242, %v1243
    %v1245 = vsel %vm135, %v1193, 0.0
    %v1246 = vrot.slane %v1245, 4
    %v1247 = vadd.f32 %v1245, %v1246
    %v1248 = vrot.slane %v1247, 2
    %v1249 = vadd.f32 %v1247, %v1248
    %v1250 = vrot.slane %v1249, 1
    %v1251 = vadd.f32 %v1249, %v1250
    %v1252 = vsel %vm135, %v1194, 0.0
    %v1253 = vrot.slane %v1252, 4
    %v1254 = vadd.f32 %v1252, %v1253
    %v1255 = vrot.slane %v1254, 2
    %v1256 = vadd.f32 %v1254, %v1255
    %v1257 = vrot.slane %v1256, 1
    %v1258 = vadd.f32 %v1256, %v1257
    %v1259 = vsel %vm135, %v1195, 0.0
    %v1260 = vrot.slane %v1259, 4
    %v1261 = vadd.f32 %v1259, %v1260
    %v1262 = vrot.slane %v1261, 2
    %v1263 = vadd.f32 %v1261, %v1262
    %v1264 = vrot.slane %v1263, 1
    %v1265 = vadd.f32 %v1263, %v1264
    %v1266 = vsel %vm135, %v1196, 0.0
    %v1267 = vrot.slane %v1266, 4
    %v1268 = vadd.f32 %v1266, %v1267
    %v1269 = vrot.slane %v1268, 2
    %v1270 = vadd.f32 %v1268, %v1269
    %v1271 = vrot.slane %v1270, 1
    %v1272 = vadd.f32 %v1270, %v1271
    %v1273 = vsel %vm135, %v1197, 0.0
    %v1274 = vrot.slane %v1273, 4
    %v1275 = vadd.f32 %v1273, %v1274
    %v1276 = vrot.slane %v1275, 2
    %v1277 = vadd.f32 %v1275, %v1276
    %v1278 = vrot.slane %v1277, 1
    %v1279 = vadd.f32 %v1277, %v1278
    %v1280 = vsel %vm135, %v1198, 0.0
    %v1281 = vrot.slane %v1280, 4
    %v1282 = vadd.f32 %v1280, %v1281
    %v1283 = vrot.slane %v1282, 2
    %v1284 = vadd.f32 %v1282, %v1283
    %v1285 = vrot.slane %v1284, 1
    %v1286 = vadd.f32 %v1284, %v1285
    %v1287 = vsel %vm135, %v1199, 0.0
    %v1288 = vrot.slane %v1287, 4
    %v1289 = vadd.f32 %v1287, %v1288
    %v1290 = vrot.slane %v1289, 2
    %v1291 = vadd.f32 %v1289, %v1290
    %v1292 = vrot.slane %v1291, 1
    %v1293 = vadd.f32 %v1291, %v1292
    %v1294 = vsel %vm135, %v1200, 0.0
    %v1295 = vrot.slane %v1294, 4
    %v1296 = vadd.f32 %v1294, %v1295
    %v1297 = vrot.slane %v1296, 2
    %v1298 = vadd.f32 %v1296, %v1297
    %v1299 = vrot.slane %v1298, 1
    %v1300 = vadd.f32 %v1298, %v1299
    %v1301 = vsel %vm135, %v1201, 0.0
    %v1302 = vrot.slane %v1301, 4
    %v1303 = vadd.f32 %v1301, %v1302
    %v1304 = vrot.slane %v1303, 2
    %v1305 = vadd.f32 %v1303, %v1304
    %v1306 = vrot.slane %v1305, 1
    %v1307 = vadd.f32 %v1305, %v1306
    %v1308 = vsel %vm135, %v1202, 0.0
    %v1309 = vrot.slane %v1308, 4
    %v1310 = vadd.f32 %v1308, %v1309
    %v1311 = vrot.slane %v1310, 2
    %v1312 = vadd.f32 %v1310, %v1311
    %v1313 = vrot.slane %v1312, 1
    %v1314 = vadd.f32 %v1312, %v1313
    %1315 = vset.pattern.permute.xlu0 3
    %1316 = vperm.xlu0 %1315, %v707
    %v1317 = vpop.permute.xlu0 %1316
    %1319 = vset.pattern.permute.xlu0 3
    %1320 = vperm.xlu0 %1319, %v708
    %v1321 = vpop.permute.xlu0 %1320
    %1323 = vset.pattern.permute.xlu0 3
    %1324 = vperm.xlu0 %1323, %v709
    %v1325 = vpop.permute.xlu0 %1324
    %1327 = vset.pattern.permute.xlu0 3
    %1328 = vperm.xlu0 %1327, %v710
    %v1329 = vpop.permute.xlu0 %1328
    %1331 = vset.pattern.permute.xlu0 3
    %1332 = vperm.xlu0 %1331, %v711
    %v1333 = vpop.permute.xlu0 %1332
    %1335 = vset.pattern.permute.xlu0 3
    %1336 = vperm.xlu0 %1335, %v712
    %v1337 = vpop.permute.xlu0 %1336
    %1339 = vset.pattern.permute.xlu0 3
    %1340 = vperm.xlu0 %1339, %v713
    %v1341 = vpop.permute.xlu0 %1340
    %1343 = vset.pattern.permute.xlu0 3
    %1344 = vperm.xlu0 %1343, %v714
    %v1345 = vpop.permute.xlu0 %1344
    %1347 = vset.pattern.permute.xlu0 3
    %1348 = vperm.xlu0 %1347, %v715
    %v1349 = vpop.permute.xlu0 %1348
    %1351 = vset.pattern.permute.xlu0 3
    %1352 = vperm.xlu0 %1351, %v716
    %v1353 = vpop.permute.xlu0 %1352
    %1355 = vset.pattern.permute.xlu0 3
    %1356 = vperm.xlu0 %1355, %v717
    %v1357 = vpop.permute.xlu0 %1356
    %1359 = vset.pattern.permute.xlu0 3
    %1360 = vperm.xlu0 %1359, %v718
    %v1361 = vpop.permute.xlu0 %1360
    %1363 = vset.pattern.permute.xlu0 3
    %1364 = vperm.xlu0 %1363, %v719
    %v1365 = vpop.permute.xlu0 %1364
    %1367 = vset.pattern.permute.xlu0 3
    %1368 = vperm.xlu0 %1367, %v720
    %v1369 = vpop.permute.xlu0 %1368
    %1371 = vset.pattern.permute.xlu0 3
    %1372 = vperm.xlu0 %1371, %v721
    %v1373 = vpop.permute.xlu0 %1372
    %1375 = vset.pattern.permute.xlu0 3
    %1376 = vperm.xlu0 %1375, %v722
    %v1377 = vpop.permute.xlu0 %1376
    %v1379 = vmul.f32 %v1317, %v88
    %v1380 = vmul.f32 %v1321, %v89
    %v1381 = vmul.f32 %v1325, %v90
    %v1382 = vmul.f32 %v1329, %v91
    %v1383 = vmul.f32 %v1333, %v92
    %v1384 = vmul.f32 %v1337, %v93
    %v1385 = vmul.f32 %v1341, %v94
    %v1386 = vmul.f32 %v1345, %v95
    %v1387 = vmul.f32 %v1349, %v96
    %v1388 = vmul.f32 %v1353, %v97
    %v1389 = vmul.f32 %v1357, %v98
    %v1390 = vmul.f32 %v1361, %v99
    %v1391 = vmul.f32 %v1365, %v100
    %v1392 = vmul.f32 %v1369, %v101
    %v1393 = vmul.f32 %v1373, %v102
    %v1394 = vmul.f32 %v1377, %v103
    %v1395 = vsel %vm135, %v1379, 0.0
    %v1396 = vrot.slane %v1395, 4
    %v1397 = vadd.f32 %v1395, %v1396
    %v1398 = vrot.slane %v1397, 2
    %v1399 = vadd.f32 %v1397, %v1398
    %v1400 = vrot.slane %v1399, 1
    %v1401 = vadd.f32 %v1399, %v1400
    %v1402 = vsel %vm135, %v1380, 0.0
    %v1403 = vrot.slane %v1402, 4
    %v1404 = vadd.f32 %v1402, %v1403
    %v1405 = vrot.slane %v1404, 2
    %v1406 = vadd.f32 %v1404, %v1405
    %v1407 = vrot.slane %v1406, 1
    %v1408 = vadd.f32 %v1406, %v1407
    %v1409 = vsel %vm135, %v1381, 0.0
    %v1410 = vrot.slane %v1409, 4
    %v1411 = vadd.f32 %v1409, %v1410
    %v1412 = vrot.slane %v1411, 2
    %v1413 = vadd.f32 %v1411, %v1412
    %v1414 = vrot.slane %v1413, 1
    %v1415 = vadd.f32 %v1413, %v1414
    %v1416 = vsel %vm135, %v1382, 0.0
    %v1417 = vrot.slane %v1416, 4
    %v1418 = vadd.f32 %v1416, %v1417
    %v1419 = vrot.slane %v1418, 2
    %v1420 = vadd.f32 %v1418, %v1419
    %v1421 = vrot.slane %v1420, 1
    %v1422 = vadd.f32 %v1420, %v1421
    %v1423 = vsel %vm135, %v1383, 0.0
    %v1424 = vrot.slane %v1423, 4
    %v1425 = vadd.f32 %v1423, %v1424
    %v1426 = vrot.slane %v1425, 2
    %v1427 = vadd.f32 %v1425, %v1426
    %v1428 = vrot.slane %v1427, 1
    %v1429 = vadd.f32 %v1427, %v1428
    %v1430 = vsel %vm135, %v1384, 0.0
    %v1431 = vrot.slane %v1430, 4
    %v1432 = vadd.f32 %v1430, %v1431
    %v1433 = vrot.slane %v1432, 2
    %v1434 = vadd.f32 %v1432, %v1433
    %v1435 = vrot.slane %v1434, 1
    %v1436 = vadd.f32 %v1434, %v1435
    %v1437 = vsel %vm135, %v1385, 0.0
    %v1438 = vrot.slane %v1437, 4
    %v1439 = vadd.f32 %v1437, %v1438
    %v1440 = vrot.slane %v1439, 2
    %v1441 = vadd.f32 %v1439, %v1440
    %v1442 = vrot.slane %v1441, 1
    %v1443 = vadd.f32 %v1441, %v1442
    %v1444 = vsel %vm135, %v1386, 0.0
    %v1445 = vrot.slane %v1444, 4
    %v1446 = vadd.f32 %v1444, %v1445
    %v1447 = vrot.slane %v1446, 2
    %v1448 = vadd.f32 %v1446, %v1447
    %v1449 = vrot.slane %v1448, 1
    %v1450 = vadd.f32 %v1448, %v1449
    %v1451 = vsel %vm135, %v1387, 0.0
    %v1452 = vrot.slane %v1451, 4
    %v1453 = vadd.f32 %v1451, %v1452
    %v1454 = vrot.slane %v1453, 2
    %v1455 = vadd.f32 %v1453, %v1454
    %v1456 = vrot.slane %v1455, 1
    %v1457 = vadd.f32 %v1455, %v1456
    %v1458 = vsel %vm135, %v1388, 0.0
    %v1459 = vrot.slane %v1458, 4
    %v1460 = vadd.f32 %v1458, %v1459
    %v1461 = vrot.slane %v1460, 2
    %v1462 = vadd.f32 %v1460, %v1461
    %v1463 = vrot.slane %v1462, 1
    %v1464 = vadd.f32 %v1462, %v1463
    %v1465 = vsel %vm135, %v1389, 0.0
    %v1466 = vrot.slane %v1465, 4
    %v1467 = vadd.f32 %v1465, %v1466
    %v1468 = vrot.slane %v1467, 2
    %v1469 = vadd.f32 %v1467, %v1468
    %v1470 = vrot.slane %v1469, 1
    %v1471 = vadd.f32 %v1469, %v1470
    %v1472 = vsel %vm135, %v1390, 0.0
    %v1473 = vrot.slane %v1472, 4
    %v1474 = vadd.f32 %v1472, %v1473
    %v1475 = vrot.slane %v1474, 2
    %v1476 = vadd.f32 %v1474, %v1475
    %v1477 = vrot.slane %v1476, 1
    %v1478 = vadd.f32 %v1476, %v1477
    %v1479 = vsel %vm135, %v1391, 0.0
    %v1480 = vrot.slane %v1479, 4
    %v1481 = vadd.f32 %v1479, %v1480
    %v1482 = vrot.slane %v1481, 2
    %v1483 = vadd.f32 %v1481, %v1482
    %v1484 = vrot.slane %v1483, 1
    %v1485 = vadd.f32 %v1483, %v1484
    %v1486 = vsel %vm135, %v1392, 0.0
    %v1487 = vrot.slane %v1486, 4
    %v1488 = vadd.f32 %v1486, %v1487
    %v1489 = vrot.slane %v1488, 2
    %v1490 = vadd.f32 %v1488, %v1489
    %v1491 = vrot.slane %v1490, 1
    %v1492 = vadd.f32 %v1490, %v1491
    %v1493 = vsel %vm135, %v1393, 0.0
    %v1494 = vrot.slane %v1493, 4
    %v1495 = vadd.f32 %v1493, %v1494
    %v1496 = vrot.slane %v1495, 2
    %v1497 = vadd.f32 %v1495, %v1496
    %v1498 = vrot.slane %v1497, 1
    %v1499 = vadd.f32 %v1497, %v1498
    %v1500 = vsel %vm135, %v1394, 0.0
    %v1501 = vrot.slane %v1500, 4
    %v1502 = vadd.f32 %v1500, %v1501
    %v1503 = vrot.slane %v1502, 2
    %v1504 = vadd.f32 %v1502, %v1503
    %v1505 = vrot.slane %v1504, 1
    %v1506 = vadd.f32 %v1504, %v1505
    %vm1523 = vcmask 1041409
    %v1524 = vsel %vm1523, %v832, %v825
    %vm1525 = vcmask 1042434
    %v1526 = vsel %vm1525, %v839, %v1524
    %vm1527 = vcmask 1043459
    %v1528 = vsel %vm1527, %v846, %v1526
    %vm1529 = vcmask 1044484
    %v1530 = vsel %vm1529, %v853, %v1528
    %vm1531 = vcmask 1045509
    %v1532 = vsel %vm1531, %v860, %v1530
    %vm1533 = vcmask 1046534
    %v1534 = vsel %vm1533, %v867, %v1532
    %vm1535 = vcmask 1047559
    %v1536 = vsel %vm1535, %v874, %v1534
    %v1537 = vsel %vm1523, %v888, %v881
    %v1538 = vsel %vm1525, %v895, %v1537
    %v1539 = vsel %vm1527, %v902, %v1538
    %v1540 = vsel %vm1529, %v909, %v1539
    %v1541 = vsel %vm1531, %v916, %v1540
    %v1542 = vsel %vm1533, %v923, %v1541
    %v1543 = vsel %vm1535, %v930, %v1542
    %v1562 = vsel %vm1523, %v1024, %v1017
    %v1563 = vsel %vm1525, %v1031, %v1562
    %v1564 = vsel %vm1527, %v1038, %v1563
    %v1565 = vsel %vm1529, %v1045, %v1564
    %v1566 = vsel %vm1531, %v1052, %v1565
    %v1567 = vsel %vm1533, %v1059, %v1566
    %v1568 = vsel %vm1535, %v1066, %v1567
    %v1569 = vsel %vm1523, %v1080, %v1073
    %v1570 = vsel %vm1525, %v1087, %v1569
    %v1571 = vsel %vm1527, %v1094, %v1570
    %v1572 = vsel %vm1529, %v1101, %v1571
    %v1573 = vsel %vm1531, %v1108, %v1572
    %v1574 = vsel %vm1533, %v1115, %v1573
    %v1575 = vsel %vm1535, %v1122, %v1574
    %1576 = vrot.lane.b32.xlu0 %v1568, 32
    %v1577 = vpop.permute.xlu0 %1576
    %1578 = vrot.lane.b32.xlu0 %v1575, 32
    %v1579 = vpop.permute.xlu0 %1578
    %v1598 = vsel %vm1523, %v1216, %v1209
    %v1599 = vsel %vm1525, %v1223, %v1598
    %v1600 = vsel %vm1527, %v1230, %v1599
    %v1601 = vsel %vm1529, %v1237, %v1600
    %v1602 = vsel %vm1531, %v1244, %v1601
    %v1603 = vsel %vm1533, %v1251, %v1602
    %v1604 = vsel %vm1535, %v1258, %v1603
    %v1605 = vsel %vm1523, %v1272, %v1265
    %v1606 = vsel %vm1525, %v1279, %v1605
    %v1607 = vsel %vm1527, %v1286, %v1606
    %v1608 = vsel %vm1529, %v1293, %v1607
    %v1609 = vsel %vm1531, %v1300, %v1608
    %v1610 = vsel %vm1533, %v1307, %v1609
    %v1611 = vsel %vm1535, %v1314, %v1610
    %1612 = vrot.lane.b32.xlu0 %v1604, 64
    %v1613 = vpop.permute.xlu0 %1612
    %1614 = vrot.lane.b32.xlu0 %v1611, 64
    %v1615 = vpop.permute.xlu0 %1614
    %v1634 = vsel %vm1523, %v1408, %v1401
    %v1635 = vsel %vm1525, %v1415, %v1634
    %v1636 = vsel %vm1527, %v1422, %v1635
    %v1637 = vsel %vm1529, %v1429, %v1636
    %v1638 = vsel %vm1531, %v1436, %v1637
    %v1639 = vsel %vm1533, %v1443, %v1638
    %v1640 = vsel %vm1535, %v1450, %v1639
    %v1641 = vsel %vm1523, %v1464, %v1457
    %v1642 = vsel %vm1525, %v1471, %v1641
    %v1643 = vsel %vm1527, %v1478, %v1642
    %v1644 = vsel %vm1529, %v1485, %v1643
    %v1645 = vsel %vm1531, %v1492, %v1644
    %v1646 = vsel %vm1533, %v1499, %v1645
    %v1647 = vsel %vm1535, %v1506, %v1646
    %1648 = vrot.lane.b32.xlu0 %v1640, 96
    %v1649 = vpop.permute.xlu0 %1648
    %1650 = vrot.lane.b32.xlu0 %v1647, 96
    %v1651 = vpop.permute.xlu0 %1650
    %v1654 = vsel %vm135, %v1536, %v1577
    %v1655 = vsel %vm135, %v1543, %v1579
    %vm1656 = vcmask 523264
    %v1657 = vsel %vm1656, %v1654, %v1613
    %v1658 = vsel %vm1656, %v1655, %v1615
    %vm1659 = vcmask 785408
    %v1660 = vsel %vm1659, %v1657, %v1649
    %v1661 = vsel %vm1659, %v1658, %v1651
    %1662 = vst [vmem:[#allocation5] sm:$0xff] %v1660
    %1663 = vst [vmem:[#allocation5 + $0x8] sm:$0xff] %v1661
    // Predicated region
    $region34: #{tpu_custom_call.1} parent=1 // pred_check
      _
    $region35: #{tpu_custom_call.1} parent=1 // pred_check_branch
      %1665 = sbr.rel (0) target = $region37
    $region36: #{tpu_custom_call.1} parent=1 // pred_region
      %s1667 = ssub.s32 256, 256
      %1668 = vsyncadd [#allocation4], %s1667
      %s1669 = sshll.u32 [#allocation5], 4
      %s1670 = int_to_ptr.vmem [resolvable:$true] %s1669
      %1675 = dma.vmem_to_hbm [thread:$0]  %s1670, 256, %s7, [#allocation4], 128, 128, 8
    $region37: #{tpu_custom_call.1} parent=1 // pred_fallthru
      _
    // Predicated region
    $region38: #{tpu_custom_call.1} parent=1 // pred_check
      _
    $region39: #{tpu_custom_call.1} parent=1 // pred_check_branch
      %1677 = sbr.rel (0) target = $region41
    $region40: #{tpu_custom_call.1} parent=1 // pred_region
      %1678 = dma.done [#allocation4], 256
    $region41: #{tpu_custom_call.1} parent=1 // pred_fallthru
      _
    %1679 = vsyncpa [#allocation3], 1
    %1680 = vsyncpa [#allocation4], 1

// kernel: tpu_custom_call.1
$region0: #{tpu_custom_call.1}
  #allocation0 [shape = 'u32[]', space=smem, size = 0x4, offset = 0x4, fixed_abs, tag = 'smem constant byte address 0x4 - core index']
  #allocation1 [shape = 'u32[144,128]{1,0:T(1,128)}', space=vmem, size = 0x12000, scoped, tag = 'internal scratch']
  %s0 = inlined_call_operand.hbm [shape: f32[16,8,32], index: 0, kind: input, shape index: {}]
  %s1 = inlined_call_operand.vmem [shape: f32[1,32], index: 1, kind: input, shape index: {}]
  %s2 = inlined_call_operand.vmem [shape: f32[1,32], index: 2, kind: input, shape index: {}]
  %s3 = inlined_call_operand.vmem [shape: bf16[32,16], index: 3, kind: input, shape index: {}]
  %s4 = inlined_call_operand.vmem [shape: f32[1,16], index: 4, kind: input, shape index: {}]
  %s5 = inlined_call_operand.vmem [shape: bf16[16,4], index: 5, kind: input, shape index: {}]
  %s6 = inlined_call_operand.vmem [shape: f32[1,4], index: 6, kind: input, shape index: {}]
  %s7 = inlined_call_operand.hbm [shape: f32[16,128], index: 7, kind: output, shape index: {}]
  %s8 = sld [smem:[#allocation0]]
  $region42: #{tpu_custom_call.1} parent=0
    _
  %s10 = ssub.s32 1, %s8
  %s11 = scalar_select 0, %s10, %s8
  $region1: #{tpu_custom_call.1} parent=0
    #allocation2 [shape = 'u8[65536]{0}', space=vmem, size = 0x10000, scoped, tag = 'input window, operand 0, single buffered']
    #allocation3 [shape = 's32[1]{0}', space=sflag, size = 0x4, scoped, tag = 'scoped memory for tpu_custom_call.1']
    #allocation4 [shape = 's32[1]{0}', space=sflag, size = 0x4, scoped, tag = 'scoped memory for tpu_custom_call.1']
    #allocation5 [shape = 'u8[8192]{0}', space=vmem, size = 0x2000, scoped, tag = 'output window, operand 0, single buffered']
    %12 = vsyncpa [#allocation3], 0
    %13 = vsyncpa [#allocation4], 0
    // Predicated region
    $region2: #{tpu_custom_call.1} parent=1 // pred_check
      _
    $region3: #{tpu_custom_call.1} parent=1 // pred_check_branch
      %15 = sbr.rel (0) target = $region5
    $region4: #{tpu_custom_call.1} parent=1 // pred_region
      %s17 = ssub.s32 2048, 2048
      %18 = vsyncadd [#allocation3], %s17
      %s19 = sshll.u32 [#allocation2], 4
      %s20 = int_to_ptr.vmem [resolvable:$true] %s19
      %25 = dma.hbm_to_vmem [thread:$0]  %s0, 2048, %s20, [#allocation3], 128, 128, 8
    $region5: #{tpu_custom_call.1} parent=1 // pred_fallthru
      _
    // Predicated region
    $region6: #{tpu_custom_call.1} parent=1 // pred_check
      _
    $region7: #{tpu_custom_call.1} parent=1 // pred_check_branch
      %27 = sbr.rel (0) target = $region9
    $region8: #{tpu_custom_call.1} parent=1 // pred_region
      _
    $region9: #{tpu_custom_call.1} parent=1 // pred_fallthru
      _
    // Predicated region
    $region10: #{tpu_custom_call.1} parent=1 // pred_check
      _
    $region11: #{tpu_custom_call.1} parent=1 // pred_check_branch
      %29 = sbr.rel (0) target = $region13
    $region12: #{tpu_custom_call.1} parent=1 // pred_region
      _
    $region13: #{tpu_custom_call.1} parent=1 // pred_fallthru
      _
    // Predicated region
    $region14: #{tpu_custom_call.1} parent=1 // pred_check
      _
    $region15: #{tpu_custom_call.1} parent=1 // pred_check_branch
      %31 = sbr.rel (0) target = $region17
    $region16: #{tpu_custom_call.1} parent=1 // pred_region
      _
    $region17: #{tpu_custom_call.1} parent=1 // pred_fallthru
      _
    // Predicated region
    $region18: #{tpu_custom_call.1} parent=1 // pred_check
      _
    $region19: #{tpu_custom_call.1} parent=1 // pred_check_branch
      %33 = sbr.rel (0) target = $region21
    $region20: #{tpu_custom_call.1} parent=1 // pred_region
      _
    $region21: #{tpu_custom_call.1} parent=1 // pred_fallthru
      _
    // Predicated region
    $region22: #{tpu_custom_call.1} parent=1 // pred_check
      _
    $region23: #{tpu_custom_call.1} parent=1 // pred_check_branch
      %35 = sbr.rel (0) target = $region25
    $region24: #{tpu_custom_call.1} parent=1 // pred_region
      _
    $region25: #{tpu_custom_call.1} parent=1 // pred_fallthru
      _
    // Predicated region
    $region26: #{tpu_custom_call.1} parent=1 // pred_check
      _
    $region27: #{tpu_custom_call.1} parent=1 // pred_check_branch
      %37 = sbr.rel (0) target = $region29
    $region28: #{tpu_custom_call.1} parent=1 // pred_region
      _
    $region29: #{tpu_custom_call.1} parent=1 // pred_fallthru
      _
    // Predicated region
    $region30: #{tpu_custom_call.1} parent=1 // pred_check
      _
    $region31: #{tpu_custom_call.1} parent=1 // pred_check_branch
      %39 = sbr.rel (0) target = $region33
    $region32: #{tpu_custom_call.1} parent=1 // pred_region
      %40 = dma.done [#allocation3], 2048
    $region33: #{tpu_custom_call.1} parent=1 // pred_fallthru
      _
    %v42 = vld [vmem:[#allocation2] sm:$0xff]
    %v43 = vld [vmem:[#allocation2 + $0x8] sm:$0xff]
    %v44 = vld [vmem:[#allocation2 + $0x10] sm:$0xff]
    %v45 = vld [vmem:[#allocation2 + $0x18] sm:$0xff]
    %v46 = vld [vmem:[#allocation2 + $0x20] sm:$0xff]
    %v47 = vld [vmem:[#allocation2 + $0x28] sm:$0xff]
    %v48 = vld [vmem:[#allocation2 + $0x30] sm:$0xff]
    %v49 = vld [vmem:[#allocation2 + $0x38] sm:$0xff]
    %v50 = vld [vmem:[#allocation2 + $0x40] sm:$0xff]
    %v51 = vld [vmem:[#allocation2 + $0x48] sm:$0xff]
    %v52 = vld [vmem:[#allocation2 + $0x50] sm:$0xff]
    %v53 = vld [vmem:[#allocation2 + $0x58] sm:$0xff]
    %v54 = vld [vmem:[#allocation2 + $0x60] sm:$0xff]
    %v55 = vld [vmem:[#allocation2 + $0x68] sm:$0xff]
    %v56 = vld [vmem:[#allocation2 + $0x70] sm:$0xff]
    %v57 = vld [vmem:[#allocation2 + $0x78] sm:$0xff]
    %v58 = vld [vmem:[%s1] sm:$0x1]
    %v60 = vlaneseq
    %v61 = vshrl.u32 %v60, 7
    %v62 = vsub.s32 0, %v61
    %v63 = vrot.slane %v58, %v62
    %v65 = vmul.f32 %v42, %v63
    %v66 = vmul.f32 %v43, %v63
    %v67 = vmul.f32 %v44, %v63
    %v68 = vmul.f32 %v45, %v63
    %v69 = vmul.f32 %v46, %v63
    %v70 = vmul.f32 %v47, %v63
    %v71 = vmul.f32 %v48, %v63
    %v72 = vmul.f32 %v49, %v63
    %v73 = vmul.f32 %v50, %v63
    %v74 = vmul.f32 %v51, %v63
    %v75 = vmul.f32 %v52, %v63
    %v76 = vmul.f32 %v53, %v63
    %v77 = vmul.f32 %v54, %v63
    %v78 = vmul.f32 %v55, %v63
    %v79 = vmul.f32 %v56, %v63
    %v80 = vmul.f32 %v57, %v63
    %v81 = vld [vmem:[%s2] sm:$0x1]
    %v83 = vlaneseq
    %v84 = vshrl.u32 %v83, 7
    %v85 = vsub.s32 0, %v84
    %v86 = vrot.slane %v81, %v85
    %v88 = vadd.f32 %v65, %v86
    %v89 = vadd.f32 %v66, %v86
    %v90 = vadd.f32 %v67, %v86
    %v91 = vadd.f32 %v68, %v86
    %v92 = vadd.f32 %v69, %v86
    %v93 = vadd.f32 %v70, %v86
    %v94 = vadd.f32 %v71, %v86
    %v95 = vadd.f32 %v72, %v86
    %v96 = vadd.f32 %v73, %v86
    %v97 = vadd.f32 %v74, %v86
    %v98 = vadd.f32 %v75, %v86
    %v99 = vadd.f32 %v76, %v86
    %v100 = vadd.f32 %v77, %v86
    %v101 = vadd.f32 %v78, %v86
    %v102 = vadd.f32 %v79, %v86
    %v103 = vadd.f32 %v80, %v86
    %v104 = vpack.c.bf16 %v89, %v88
    %v105 = vpack.c.bf16 %v91, %v90
    %v106 = vpack.c.bf16 %v93, %v92
    %v107 = vpack.c.bf16 %v95, %v94
    %v108 = vpack.c.bf16 %v97, %v96
    %v109 = vpack.c.bf16 %v99, %v98
    %v110 = vpack.c.bf16 %v101, %v100
    %v111 = vpack.c.bf16 %v103, %v102
    %v112 = vld [vmem:[%s3] sm:$0xf]
    %v113 = vld [vmem:[%s3 + $0x4] sm:$0xf]
    %v114 = vld [vmem:[%s3 + $0x8] sm:$0xf]
    %v115 = vld [vmem:[%s3 + $0xc] sm:$0xf]
    %v116 = vld [vmem:[%s4] sm:$0x1]
    %v118 = vlaneseq
    %v119 = vshrl.u32 %v118, 7
    %v120 = vsub.s32 0, %v119
    %v121 = vrot.slane %v116, %v120
    %v127 = vunpack.c.l.b16 %v112
    %v128 = vunpack.c.l.b16 %v113
    %v129 = vunpack.c.l.b16 %v114
    %v130 = vunpack.c.l.b16 %v115
    %v131 = vpack.c.b16 %v128, %v127
    %v132 = vpack.c.b16 %v130, %v129
    %vm135 = vcmask 261120
    %v137 = vsel %vm135, %v104, 0
    %v140 = vsel %vm135, %v105, 0
    %v143 = vsel %vm135, %v106, 0
    %v146 = vsel %vm135, %v107, 0
    %v149 = vsel %vm135, %v108, 0
    %v152 = vsel %vm135, %v109, 0
    %v155 = vsel %vm135, %v110, 0
    %v158 = vsel %vm135, %v111, 0
    %160 = vmatprep.subr.bf16.mxu0 0
    %161 = vmatpush1.bf16.msra.mxu0 0
    %162 = vmatprep.subr.bf16.mxu0 0
    %163 = vmatpush1.bf16.msra.mxu0 0
    %164 = vmatprep.subr.bf16.mxu0 0
    %165 = vmatpush1.bf16.msra.mxu0 0
    %166 = vmatprep.subr.bf16.mxu0 0
    %167 = vmatpush1.bf16.msra.mxu0 0
    %168 = vmatprep.subr.bf16.mxu0 0
    %169 = vmatpush1.bf16.msra.mxu0 0
    %170 = vmatprep.subr.bf16.mxu0 0
    %171 = vmatpush1.bf16.msra.mxu0 0
    %172 = vmatprep.subr.bf16.mxu0 0
    %173 = vmatpush1.bf16.msra.mxu0 %v132
    %174 = vmatprep.subr.bf16.mxu0 0
    %175 = vmatpush1.bf16.msra.mxu0 %v131
    %176 = vmatprep.subr.bf16.mxu0 0
    %177 = vmatpush2.bf16.msra.mxu0 0
    %178 = vmatprep.subr.bf16.mxu0 0
    %179 = vmatpush2.bf16.msra.mxu0 0
    %180 = vmatprep.subr.bf16.mxu0 0
    %181 = vmatpush2.bf16.msra.mxu0 0
    %182 = vmatprep.subr.bf16.mxu0 0
    %183 = vmatpush2.bf16.msra.mxu0 0
    %184 = vmatprep.subr.bf16.mxu0 0
    %185 = vmatpush2.bf16.msra.mxu0 0
    %186 = vmatprep.subr.bf16.mxu0 0
    %187 = vmatpush2.bf16.msra.mxu0 0
    %188 = vmatprep.subr.bf16.mxu0 0
    %189 = vmatpush2.bf16.msra.mxu0 0
    %190 = vmatprep.subr.bf16.mxu0 0
    %191 = vmatpush2.bf16.msra.mxu0 0
    %192 = vmatprep.mubr.bf16.mxu0 0
    %193 = vmatmul.mubr.bf16.gmra.mxu0 %v137
    %v194 = vpop.f32.mrf.mxu0
    %v195 = vadd.f32 %v121, %v194
    %v196 = vpop.f32.mrf.mxu0
    %v197 = vpop.f32.mrf.mxu0
    %v198 = vadd.f32 %v121, %v197
    %v199 = vpop.f32.mrf.mxu0
    %200 = vmatprep.mubr.bf16.mxu0 0
    %201 = vmatmul.mubr.bf16.gmra.mxu0 %v140
    %v202 = vpop.f32.mrf.mxu0
    %v203 = vadd.f32 %v121, %v202
    %v204 = vpop.f32.mrf.mxu0
    %v205 = vpop.f32.mrf.mxu0
    %v206 = vadd.f32 %v121, %v205
    %v207 = vpop.f32.mrf.mxu0
    %208 = vmatprep.mubr.bf16.mxu0 0
    %209 = vmatmul.mubr.bf16.gmra.mxu0 %v143
    %v210 = vpop.f32.mrf.mxu0
    %v211 = vadd.f32 %v121, %v210
    %v212 = vpop.f32.mrf.mxu0
    %v213 = vpop.f32.mrf.mxu0
    %v214 = vadd.f32 %v121, %v213
    %v215 = vpop.f32.mrf.mxu0
    %216 = vmatprep.mubr.bf16.mxu0 0
    %217 = vmatmul.mubr.bf16.gmra.mxu0 %v146
    %v218 = vpop.f32.mrf.mxu0
    %v219 = vadd.f32 %v121, %v218
    %v220 = vpop.f32.mrf.mxu0
    %v221 = vpop.f32.mrf.mxu0
    %v222 = vadd.f32 %v121, %v221
    %v223 = vpop.f32.mrf.mxu0
    %224 = vmatprep.mubr.bf16.mxu0 0
    %225 = vmatmul.mubr.bf16.gmra.mxu0 %v149
    %v226 = vpop.f32.mrf.mxu0
    %v227 = vadd.f32 %v121, %v226
    %v228 = vpop.f32.mrf.mxu0
    %v229 = vpop.f32.mrf.mxu0
    %v230 = vadd.f32 %v121, %v229
    %v231 = vpop.f32.mrf.mxu0
    %232 = vmatprep.mubr.bf16.mxu0 0
    %233 = vmatmul.mubr.bf16.gmra.mxu0 %v152
    %v234 = vpop.f32.mrf.mxu0
    %v235 = vadd.f32 %v121, %v234
    %v236 = vpop.f32.mrf.mxu0
    %v237 = vpop.f32.mrf.mxu0
    %v238 = vadd.f32 %v121, %v237
    %v239 = vpop.f32.mrf.mxu0
    %240 = vmatprep.mubr.bf16.mxu0 0
    %241 = vmatmul.mubr.bf16.gmra.mxu0 %v155
    %v242 = vpop.f32.mrf.mxu0
    %v243 = vadd.f32 %v121, %v242
    %v244 = vpop.f32.mrf.mxu0
    %v245 = vpop.f32.mrf.mxu0
    %v246 = vadd.f32 %v121, %v245
    %v247 = vpop.f32.mrf.mxu0
    %248 = vmatprep.mubr.bf16.mxu0 0
    %249 = vmatmul.mubr.bf16.gmra.mxu0 %v158
    %v250 = vpop.f32.mrf.mxu0
    %v251 = vadd.f32 %v121, %v250
    %v252 = vpop.f32.mrf.mxu0
    %v253 = vpop.f32.mrf.mxu0
    %v254 = vadd.f32 %v121, %v253
    %v255 = vpop.f32.mrf.mxu0
    %256 = vdwg.mxu0
    %v257 = vmax.f32 %v195, 0.0
    %v258 = vmax.f32 %v198, 0.0
    %v259 = vmax.f32 %v203, 0.0
    %v260 = vmax.f32 %v206, 0.0
    %v261 = vmax.f32 %v211, 0.0
    %v262 = vmax.f32 %v214, 0.0
    %v263 = vmax.f32 %v219, 0.0
    %v264 = vmax.f32 %v222, 0.0
    %v265 = vmax.f32 %v227, 0.0
    %v266 = vmax.f32 %v230, 0.0
    %v267 = vmax.f32 %v235, 0.0
    %v268 = vmax.f32 %v238, 0.0
    %v269 = vmax.f32 %v243, 0.0
    %v270 = vmax.f32 %v246, 0.0
    %v271 = vmax.f32 %v251, 0.0
    %v272 = vmax.f32 %v254, 0.0
    %v273 = vpack.c.bf16 %v258, %v257
    %v274 = vpack.c.bf16 %v260, %v259
    %v275 = vpack.c.bf16 %v262, %v261
    %v276 = vpack.c.bf16 %v264, %v263
    %v277 = vpack.c.bf16 %v266, %v265
    %v278 = vpack.c.bf16 %v268, %v267
    %v279 = vpack.c.bf16 %v270, %v269
    %v280 = vpack.c.bf16 %v272, %v271
    %v281 = vld [vmem:[%s5] sm:$0xf]
    %v282 = vld [vmem:[%s5 + $0x4] sm:$0xf]
    %v283 = vld [vmem:[%s6] sm:$0x1]
    %v285 = vlaneseq
    %v286 = vshrl.u32 %v285, 7
    %v287 = vsub.s32 0, %v286
    %v288 = vrot.slane %v283, %v287
    %v292 = vunpack.c.l.b16 %v281
    %v293 = vunpack.c.l.b16 %v282
    %v294 = vpack.c.b16 %v293, %v292
    %vm296 = vcmask 130048
    %v298 = vsel %vm296, %v273, 0
    %v301 = vsel %vm296, %v274, 0
    %v304 = vsel %vm296, %v275, 0
    %v307 = vsel %vm296, %v276, 0
    %v310 = vsel %vm296, %v277, 0
    %v313 = vsel %vm296, %v278, 0
    %v316 = vsel %vm296, %v279, 0
    %v319 = vsel %vm296, %v280, 0
    %321 = vmatprep.subr.bf16.mxu0 0
    %322 = vmatpush1.bf16.msra.mxu0 0
    %323 = vmatprep.subr.bf16.mxu0 0
    %324 = vmatpush1.bf16.msra.mxu0 0
    %325 = vmatprep.subr.bf16.mxu0 0
    %326 = vmatpush1.bf16.msra.mxu0 0
    %327 = vmatprep.subr.bf16.mxu0 0
    %328 = vmatpush1.bf16.msra.mxu0 0
    %329 = vmatprep.subr.bf16.mxu0 0
    %330 = vmatpush1.bf16.msra.mxu0 0
    %331 = vmatprep.subr.bf16.mxu0 0
    %332 = vmatpush1.bf16.msra.mxu0 0
    %333 = vmatprep.subr.bf16.mxu0 0
    %334 = vmatpush1.bf16.msra.mxu0 0
    %335 = vmatprep.subr.bf16.mxu0 0
    %336 = vmatpush1.bf16.msra.mxu0 %v294
    %337 = vmatprep.subr.bf16.mxu0 0
    %338 = vmatpush2.bf16.msra.mxu0 0
    %339 = vmatprep.subr.bf16.mxu0 0
    %340 = vmatpush2.bf16.msra.mxu0 0
    %341 = vmatprep.subr.bf16.mxu0 0
    %342 = vmatpush2.bf16.msra.mxu0 0
    %343 = vmatprep.subr.bf16.mxu0 0
    %344 = vmatpush2.bf16.msra.mxu0 0
    %345 = vmatprep.subr.bf16.mxu0 0
    %346 = vmatpush2.bf16.msra.mxu0 0
    %347 = vmatprep.subr.bf16.mxu0 0
    %348 = vmatpush2.bf16.msra.mxu0 0
    %349 = vmatprep.subr.bf16.mxu0 0
    %350 = vmatpush2.bf16.msra.mxu0 0
    %351 = vmatprep.subr.bf16.mxu0 0
    %352 = vmatpush2.bf16.msra.mxu0 0
    %353 = vmatprep.mubr.bf16.mxu0 0
    %354 = vmatmul.mubr.bf16.gmra.mxu0 %v298
    %v355 = vpop.f32.mrf.mxu0
    %v356 = vadd.f32 %v288, %v355
    %v357 = vpop.f32.mrf.mxu0
    %v358 = vpop.f32.mrf.mxu0
    %v359 = vadd.f32 %v288, %v358
    %v360 = vpop.f32.mrf.mxu0
    %361 = vmatprep.mubr.bf16.mxu0 0
    %362 = vmatmul.mubr.bf16.gmra.mxu0 %v301
    %v363 = vpop.f32.mrf.mxu0
    %v364 = vadd.f32 %v288, %v363
    %v365 = vpop.f32.mrf.mxu0
    %v366 = vpop.f32.mrf.mxu0
    %v367 = vadd.f32 %v288, %v366
    %v368 = vpop.f32.mrf.mxu0
    %369 = vmatprep.mubr.bf16.mxu0 0
    %370 = vmatmul.mubr.bf16.gmra.mxu0 %v304
    %v371 = vpop.f32.mrf.mxu0
    %v372 = vadd.f32 %v288, %v371
    %v373 = vpop.f32.mrf.mxu0
    %v374 = vpop.f32.mrf.mxu0
    %v375 = vadd.f32 %v288, %v374
    %v376 = vpop.f32.mrf.mxu0
    %377 = vmatprep.mubr.bf16.mxu0 0
    %378 = vmatmul.mubr.bf16.gmra.mxu0 %v307
    %v379 = vpop.f32.mrf.mxu0
    %v380 = vadd.f32 %v288, %v379
    %v381 = vpop.f32.mrf.mxu0
    %v382 = vpop.f32.mrf.mxu0
    %v383 = vadd.f32 %v288, %v382
    %v384 = vpop.f32.mrf.mxu0
    %385 = vmatprep.mubr.bf16.mxu0 0
    %386 = vmatmul.mubr.bf16.gmra.mxu0 %v310
    %v387 = vpop.f32.mrf.mxu0
    %v388 = vadd.f32 %v288, %v387
    %v389 = vpop.f32.mrf.mxu0
    %v390 = vpop.f32.mrf.mxu0
    %v391 = vadd.f32 %v288, %v390
    %v392 = vpop.f32.mrf.mxu0
    %393 = vmatprep.mubr.bf16.mxu0 0
    %394 = vmatmul.mubr.bf16.gmra.mxu0 %v313
    %v395 = vpop.f32.mrf.mxu0
    %v396 = vadd.f32 %v288, %v395
    %v397 = vpop.f32.mrf.mxu0
    %v398 = vpop.f32.mrf.mxu0
    %v399 = vadd.f32 %v288, %v398
    %v400 = vpop.f32.mrf.mxu0
    %401 = vmatprep.mubr.bf16.mxu0 0
    %402 = vmatmul.mubr.bf16.gmra.mxu0 %v316
    %v403 = vpop.f32.mrf.mxu0
    %v404 = vadd.f32 %v288, %v403
    %v405 = vpop.f32.mrf.mxu0
    %v406 = vpop.f32.mrf.mxu0
    %v407 = vadd.f32 %v288, %v406
    %v408 = vpop.f32.mrf.mxu0
    %409 = vmatprep.mubr.bf16.mxu0 0
    %410 = vmatmul.mubr.bf16.gmra.mxu0 %v319
    %v411 = vpop.f32.mrf.mxu0
    %v412 = vadd.f32 %v288, %v411
    %v413 = vpop.f32.mrf.mxu0
    %v414 = vpop.f32.mrf.mxu0
    %v415 = vadd.f32 %v288, %v414
    %v416 = vpop.f32.mrf.mxu0
    %417 = vdwg.mxu0
    %vm418 = vcmask 31744
    %v419 = vsel %vm418, %v356, -inf
    %v420 = vrot.slane %v419, 4
    %v421 = vmax.f32 %v419, %v420
    %v422 = vrot.slane %v421, 2
    %v423 = vmax.f32 %v421, %v422
    %v424 = vrot.slane %v423, 1
    %v425 = vmax.f32 %v423, %v424
    %v426 = vsel %vm418, %v359, -inf
    %v427 = vrot.slane %v426, 4
    %v428 = vmax.f32 %v426, %v427
    %v429 = vrot.slane %v428, 2
    %v430 = vmax.f32 %v428, %v429
    %v431 = vrot.slane %v430, 1
    %v432 = vmax.f32 %v430, %v431
    %v433 = vsel %vm418, %v364, -inf
    %v434 = vrot.slane %v433, 4
    %v435 = vmax.f32 %v433, %v434
    %v436 = vrot.slane %v435, 2
    %v437 = vmax.f32 %v435, %v436
    %v438 = vrot.slane %v437, 1
    %v439 = vmax.f32 %v437, %v438
    %v440 = vsel %vm418, %v367, -inf
    %v441 = vrot.slane %v440, 4
    %v442 = vmax.f32 %v440, %v441
    %v443 = vrot.slane %v442, 2
    %v444 = vmax.f32 %v442, %v443
    %v445 = vrot.slane %v444, 1
    %v446 = vmax.f32 %v444, %v445
    %v447 = vsel %vm418, %v372, -inf
    %v448 = vrot.slane %v447, 4
    %v449 = vmax.f32 %v447, %v448
    %v450 = vrot.slane %v449, 2
    %v451 = vmax.f32 %v449, %v450
    %v452 = vrot.slane %v451, 1
    %v453 = vmax.f32 %v451, %v452
    %v454 = vsel %vm418, %v375, -inf
    %v455 = vrot.slane %v454, 4
    %v456 = vmax.f32 %v454, %v455
    %v457 = vrot.slane %v456, 2
    %v458 = vmax.f32 %v456, %v457
    %v459 = vrot.slane %v458, 1
    %v460 = vmax.f32 %v458, %v459
    %v461 = vsel %vm418, %v380, -inf
    %v462 = vrot.slane %v461, 4
    %v463 = vmax.f32 %v461, %v462
    %v464 = vrot.slane %v463, 2
    %v465 = vmax.f32 %v463, %v464
    %v466 = vrot.slane %v465, 1
    %v467 = vmax.f32 %v465, %v466
    %v468 = vsel %vm418, %v383, -inf
    %v469 = vrot.slane %v468, 4
    %v470 = vmax.f32 %v468, %v469
    %v471 = vrot.slane %v470, 2
    %v472 = vmax.f32 %v470, %v471
    %v473 = vrot.slane %v472, 1
    %v474 = vmax.f32 %v472, %v473
    %v475 = vsel %vm418, %v388, -inf
    %v476 = vrot.slane %v475, 4
    %v477 = vmax.f32 %v475, %v476
    %v478 = vrot.slane %v477, 2
    %v479 = vmax.f32 %v477, %v478
    %v480 = vrot.slane %v479, 1
    %v481 = vmax.f32 %v479, %v480
    %v482 = vsel %vm418, %v391, -inf
    %v483 = vrot.slane %v482, 4
    %v484 = vmax.f32 %v482, %v483
    %v485 = vrot.slane %v484, 2
    %v486 = vmax.f32 %v484, %v485
    %v487 = vrot.slane %v486, 1
    %v488 = vmax.f32 %v486, %v487
    %v489 = vsel %vm418, %v396, -inf
    %v490 = vrot.slane %v489, 4
    %v491 = vmax.f32 %v489, %v490
    %v492 = vrot.slane %v491, 2
    %v493 = vmax.f32 %v491, %v492
    %v494 = vrot.slane %v493, 1
    %v495 = vmax.f32 %v493, %v494
    %v496 = vsel %vm418, %v399, -inf
    %v497 = vrot.slane %v496, 4
    %v498 = vmax.f32 %v496, %v497
    %v499 = vrot.slane %v498, 2
    %v500 = vmax.f32 %v498, %v499
    %v501 = vrot.slane %v500, 1
    %v502 = vmax.f32 %v500, %v501
    %v503 = vsel %vm418, %v404, -inf
    %v504 = vrot.slane %v503, 4
    %v505 = vmax.f32 %v503, %v504
    %v506 = vrot.slane %v505, 2
    %v507 = vmax.f32 %v505, %v506
    %v508 = vrot.slane %v507, 1
    %v509 = vmax.f32 %v507, %v508
    %v510 = vsel %vm418, %v407, -inf
    %v511 = vrot.slane %v510, 4
    %v512 = vmax.f32 %v510, %v511
    %v513 = vrot.slane %v512, 2
    %v514 = vmax.f32 %v512, %v513
    %v515 = vrot.slane %v514, 1
    %v516 = vmax.f32 %v514, %v515
    %v517 = vsel %vm418, %v412, -inf
    %v518 = vrot.slane %v517, 4
    %v519 = vmax.f32 %v517, %v518
    %v520 = vrot.slane %v519, 2
    %v521 = vmax.f32 %v519, %v520
    %v522 = vrot.slane %v521, 1
    %v523 = vmax.f32 %v521, %v522
    %v524 = vsel %vm418, %v415, -inf
    %v525 = vrot.slane %v524, 4
    %v526 = vmax.f32 %v524, %v525
    %v527 = vrot.slane %v526, 2
    %v528 = vmax.f32 %v526, %v527
    %v529 = vrot.slane %v528, 1
    %v530 = vmax.f32 %v528, %v529
    %v531 = vsub.f32 %v356, %v425
    %v532 = vsub.f32 %v359, %v432
    %v533 = vsub.f32 %v364, %v439
    %v534 = vsub.f32 %v367, %v446
    %v535 = vsub.f32 %v372, %v453
    %v536 = vsub.f32 %v375, %v460
    %v537 = vsub.f32 %v380, %v467
    %v538 = vsub.f32 %v383, %v474
    %v539 = vsub.f32 %v388, %v481
    %v540 = vsub.f32 %v391, %v488
    %v541 = vsub.f32 %v396, %v495
    %v542 = vsub.f32 %v399, %v502
    %v543 = vsub.f32 %v404, %v509
    %v544 = vsub.f32 %v407, %v516
    %v545 = vsub.f32 %v412, %v523
    %v546 = vsub.f32 %v415, %v530
    %v547 = vmul.f32 %v531, 1.442695
    %v548 = vpow.pop %v547
    %v549 = vmul.f32 %v532, 1.442695
    %v550 = vpow.pop %v549
    %v551 = vmul.f32 %v533, 1.442695
    %v552 = vpow.pop %v551
    %v553 = vmul.f32 %v534, 1.442695
    %v554 = vpow.pop %v553
    %v555 = vmul.f32 %v535, 1.442695
    %v556 = vpow.pop %v555
    %v557 = vmul.f32 %v536, 1.442695
    %v558 = vpow.pop %v557
    %v559 = vmul.f32 %v537, 1.442695
    %v560 = vpow.pop %v559
    %v561 = vmul.f32 %v538, 1.442695
    %v562 = vpow.pop %v561
    %v563 = vmul.f32 %v539, 1.442695
    %v564 = vpow.pop %v563
    %v565 = vmul.f32 %v540, 1.442695
    %v566 = vpow.pop %v565
    %v567 = vmul.f32 %v541, 1.442695
    %v568 = vpow.pop %v567
    %v569 = vmul.f32 %v542, 1.442695
    %v570 = vpow.pop %v569
    %v571 = vmul.f32 %v543, 1.442695
    %v572 = vpow.pop %v571
    %v573 = vmul.f32 %v544, 1.442695
    %v574 = vpow.pop %v573
    %v575 = vmul.f32 %v545, 1.442695
    %v576 = vpow.pop %v575
    %v577 = vmul.f32 %v546, 1.442695
    %v578 = vpow.pop %v577
    %v579 = vsel %vm418, %v548, 0.0
    %v580 = vrot.slane %v579, 4
    %v581 = vadd.f32 %v579, %v580
    %v582 = vrot.slane %v581, 2
    %v583 = vadd.f32 %v581, %v582
    %v584 = vrot.slane %v583, 1
    %v585 = vadd.f32 %v583, %v584
    %v586 = vsel %vm418, %v550, 0.0
    %v587 = vrot.slane %v586, 4
    %v588 = vadd.f32 %v586, %v587
    %v589 = vrot.slane %v588, 2
    %v590 = vadd.f32 %v588, %v589
    %v591 = vrot.slane %v590, 1
    %v592 = vadd.f32 %v590, %v591
    %v593 = vsel %vm418, %v552, 0.0
    %v594 = vrot.slane %v593, 4
    %v595 = vadd.f32 %v593, %v594
    %v596 = vrot.slane %v595, 2
    %v597 = vadd.f32 %v595, %v596
    %v598 = vrot.slane %v597, 1
    %v599 = vadd.f32 %v597, %v598
    %v600 = vsel %vm418, %v554, 0.0
    %v601 = vrot.slane %v600, 4
    %v602 = vadd.f32 %v600, %v601
    %v603 = vrot.slane %v602, 2
    %v604 = vadd.f32 %v602, %v603
    %v605 = vrot.slane %v604, 1
    %v606 = vadd.f32 %v604, %v605
    %v607 = vsel %vm418, %v556, 0.0
    %v608 = vrot.slane %v607, 4
    %v609 = vadd.f32 %v607, %v608
    %v610 = vrot.slane %v609, 2
    %v611 = vadd.f32 %v609, %v610
    %v612 = vrot.slane %v611, 1
    %v613 = vadd.f32 %v611, %v612
    %v614 = vsel %vm418, %v558, 0.0
    %v615 = vrot.slane %v614, 4
    %v616 = vadd.f32 %v614, %v615
    %v617 = vrot.slane %v616, 2
    %v618 = vadd.f32 %v616, %v617
    %v619 = vrot.slane %v618, 1
    %v620 = vadd.f32 %v618, %v619
    %v621 = vsel %vm418, %v560, 0.0
    %v622 = vrot.slane %v621, 4
    %v623 = vadd.f32 %v621, %v622
    %v624 = vrot.slane %v623, 2
    %v625 = vadd.f32 %v623, %v624
    %v626 = vrot.slane %v625, 1
    %v627 = vadd.f32 %v625, %v626
    %v628 = vsel %vm418, %v562, 0.0
    %v629 = vrot.slane %v628, 4
    %v630 = vadd.f32 %v628, %v629
    %v631 = vrot.slane %v630, 2
    %v632 = vadd.f32 %v630, %v631
    %v633 = vrot.slane %v632, 1
    %v634 = vadd.f32 %v632, %v633
    %v635 = vsel %vm418, %v564, 0.0
    %v636 = vrot.slane %v635, 4
    %v637 = vadd.f32 %v635, %v636
    %v638 = vrot.slane %v637, 2
    %v639 = vadd.f32 %v637, %v638
    %v640 = vrot.slane %v639, 1
    %v641 = vadd.f32 %v639, %v640
    %v642 = vsel %vm418, %v566, 0.0
    %v643 = vrot.slane %v642, 4
    %v644 = vadd.f32 %v642, %v643
    %v645 = vrot.slane %v644, 2
    %v646 = vadd.f32 %v644, %v645
    %v647 = vrot.slane %v646, 1
    %v648 = vadd.f32 %v646, %v647
    %v649 = vsel %vm418, %v568, 0.0
    %v650 = vrot.slane %v649, 4
    %v651 = vadd.f32 %v649, %v650
    %v652 = vrot.slane %v651, 2
    %v653 = vadd.f32 %v651, %v652
    %v654 = vrot.slane %v653, 1
    %v655 = vadd.f32 %v653, %v654
    %v656 = vsel %vm418, %v570, 0.0
    %v657 = vrot.slane %v656, 4
    %v658 = vadd.f32 %v656, %v657
    %v659 = vrot.slane %v658, 2
    %v660 = vadd.f32 %v658, %v659
    %v661 = vrot.slane %v660, 1
    %v662 = vadd.f32 %v660, %v661
    %v663 = vsel %vm418, %v572, 0.0
    %v664 = vrot.slane %v663, 4
    %v665 = vadd.f32 %v663, %v664
    %v666 = vrot.slane %v665, 2
    %v667 = vadd.f32 %v665, %v666
    %v668 = vrot.slane %v667, 1
    %v669 = vadd.f32 %v667, %v668
    %v670 = vsel %vm418, %v574, 0.0
    %v671 = vrot.slane %v670, 4
    %v672 = vadd.f32 %v670, %v671
    %v673 = vrot.slane %v672, 2
    %v674 = vadd.f32 %v672, %v673
    %v675 = vrot.slane %v674, 1
    %v676 = vadd.f32 %v674, %v675
    %v677 = vsel %vm418, %v576, 0.0
    %v678 = vrot.slane %v677, 4
    %v679 = vadd.f32 %v677, %v678
    %v680 = vrot.slane %v679, 2
    %v681 = vadd.f32 %v679, %v680
    %v682 = vrot.slane %v681, 1
    %v683 = vadd.f32 %v681, %v682
    %v684 = vsel %vm418, %v578, 0.0
    %v685 = vrot.slane %v684, 4
    %v686 = vadd.f32 %v684, %v685
    %v687 = vrot.slane %v686, 2
    %v688 = vadd.f32 %v686, %v687
    %v689 = vrot.slane %v688, 1
    %v690 = vadd.f32 %v688, %v689
    %v691 = vrcp.pop %v585
    %v692 = vrcp.pop %v592
    %v693 = vrcp.pop %v599
    %v694 = vrcp.pop %v606
    %v695 = vrcp.pop %v613
    %v696 = vrcp.pop %v620
    %v697 = vrcp.pop %v627
    %v698 = vrcp.pop %v634
    %v699 = vrcp.pop %v641
    %v700 = vrcp.pop %v648
    %v701 = vrcp.pop %v655
    %v702 = vrcp.pop %v662
    %v703 = vrcp.pop %v669
    %v704 = vrcp.pop %v676
    %v705 = vrcp.pop %v683
    %v706 = vrcp.pop %v690
    %v707 = vmul.f32 %v548, %v691
    %v708 = vmul.f32 %v550, %v692
    %v709 = vmul.f32 %v552, %v693
    %v710 = vmul.f32 %v554, %v694
    %v711 = vmul.f32 %v556, %v695
    %v712 = vmul.f32 %v558, %v696
    %v713 = vmul.f32 %v560, %v697
    %v714 = vmul.f32 %v562, %v698
    %v715 = vmul.f32 %v564, %v699
    %v716 = vmul.f32 %v566, %v700
    %v717 = vmul.f32 %v568, %v701
    %v718 = vmul.f32 %v570, %v702
    %v719 = vmul.f32 %v572, %v703
    %v720 = vmul.f32 %v574, %v704
    %v721 = vmul.f32 %v576, %v705
    %v722 = vmul.f32 %v578, %v706
    %724 = vset.pattern.permute.xlu0 0
    %725 = vperm.xlu0 %724, %v707
    %v726 = vpop.permute.xlu0 %725
    %729 = vset.pattern.permute.xlu0 0
    %730 = vperm.xlu0 %729, %v708
    %v731 = vpop.permute.xlu0 %730
    %734 = vset.pattern.permute.xlu0 0
    %735 = vperm.xlu0 %734, %v709
    %v736 = vpop.permute.xlu0 %735
    %739 = vset.pattern.permute.xlu0 0
    %740 = vperm.xlu0 %739, %v710
    %v741 = vpop.permute.xlu0 %740
    %744 = vset.pattern.permute.xlu0 0
    %745 = vperm.xlu0 %744, %v711
    %v746 = vpop.permute.xlu0 %745
    %749 = vset.pattern.permute.xlu0 0
    %750 = vperm.xlu0 %749, %v712
    %v751 = vpop.permute.xlu0 %750
    %754 = vset.pattern.permute.xlu0 0
    %755 = vperm.xlu0 %754, %v713
    %v756 = vpop.permute.xlu0 %755
    %759 = vset.pattern.permute.xlu0 0
    %760 = vperm.xlu0 %759, %v714
    %v761 = vpop.permute.xlu0 %760
    %764 = vset.pattern.permute.xlu0 0
    %765 = vperm.xlu0 %764, %v715
    %v766 = vpop.permute.xlu0 %765
    %769 = vset.pattern.permute.xlu0 0
    %770 = vperm.xlu0 %769, %v716
    %v771 = vpop.permute.xlu0 %770
    %774 = vset.pattern.permute.xlu0 0
    %775 = vperm.xlu0 %774, %v717
    %v776 = vpop.permute.xlu0 %775
    %779 = vset.pattern.permute.xlu0 0
    %780 = vperm.xlu0 %779, %v718
    %v781 = vpop.permute.xlu0 %780
    %784 = vset.pattern.permute.xlu0 0
    %785 = vperm.xlu0 %784, %v719
    %v786 = vpop.permute.xlu0 %785
    %789 = vset.pattern.permute.xlu0 0
    %790 = vperm.xlu0 %789, %v720
    %v791 = vpop.permute.xlu0 %790
    %794 = vset.pattern.permute.xlu0 0
    %795 = vperm.xlu0 %794, %v721
    %v796 = vpop.permute.xlu0 %795
    %799 = vset.pattern.permute.xlu0 0
    %800 = vperm.xlu0 %799, %v722
    %v801 = vpop.permute.xlu0 %800
    %v803 = vmul.f32 %v726, %v88
    %v804 = vmul.f32 %v731, %v89
    %v805 = vmul.f32 %v736, %v90
    %v806 = vmul.f32 %v741, %v91
    %v807 = vmul.f32 %v746, %v92
    %v808 = vmul.f32 %v751, %v93
    %v809 = vmul.f32 %v756, %v94
    %v810 = vmul.f32 %v761, %v95
    %v811 = vmul.f32 %v766, %v96
    %v812 = vmul.f32 %v771, %v97
    %v813 = vmul.f32 %v776, %v98
    %v814 = vmul.f32 %v781, %v99
    %v815 = vmul.f32 %v786, %v100
    %v816 = vmul.f32 %v791, %v101
    %v817 = vmul.f32 %v796, %v102
    %v818 = vmul.f32 %v801, %v103
    %v819 = vsel %vm135, %v803, 0.0
    %v820 = vrot.slane %v819, 4
    %v821 = vadd.f32 %v819, %v820
    %v822 = vrot.slane %v821, 2
    %v823 = vadd.f32 %v821, %v822
    %v824 = vrot.slane %v823, 1
    %v825 = vadd.f32 %v823, %v824
    %v826 = vsel %vm135, %v804, 0.0
    %v827 = vrot.slane %v826, 4
    %v828 = vadd.f32 %v826, %v827
    %v829 = vrot.slane %v828, 2
    %v830 = vadd.f32 %v828, %v829
    %v831 = vrot.slane %v830, 1
    %v832 = vadd.f32 %v830, %v831
    %v833 = vsel %vm135, %v805, 0.0
    %v834 = vrot.slane %v833, 4
    %v835 = vadd.f32 %v833, %v834
    %v836 = vrot.slane %v835, 2
    %v837 = vadd.f32 %v835, %v836
    %v838 = vrot.slane %v837, 1
    %v839 = vadd.f32 %v837, %v838
    %v840 = vsel %vm135, %v806, 0.0
    %v841 = vrot.slane %v840, 4
    %v842 = vadd.f32 %v840, %v841
    %v843 = vrot.slane %v842, 2
    %v844 = vadd.f32 %v842, %v843
    %v845 = vrot.slane %v844, 1
    %v846 = vadd.f32 %v844, %v845
    %v847 = vsel %vm135, %v807, 0.0
    %v848 = vrot.slane %v847, 4
    %v849 = vadd.f32 %v847, %v848
    %v850 = vrot.slane %v849, 2
    %v851 = vadd.f32 %v849, %v850
    %v852 = vrot.slane %v851, 1
    %v853 = vadd.f32 %v851, %v852
    %v854 = vsel %vm135, %v808, 0.0
    %v855 = vrot.slane %v854, 4
    %v856 = vadd.f32 %v854, %v855
    %v857 = vrot.slane %v856, 2
    %v858 = vadd.f32 %v856, %v857
    %v859 = vrot.slane %v858, 1
    %v860 = vadd.f32 %v858, %v859
    %v861 = vsel %vm135, %v809, 0.0
    %v862 = vrot.slane %v861, 4
    %v863 = vadd.f32 %v861, %v862
    %v864 = vrot.slane %v863, 2
    %v865 = vadd.f32 %v863, %v864
    %v866 = vrot.slane %v865, 1
    %v867 = vadd.f32 %v865, %v866
    %v868 = vsel %vm135, %v810, 0.0
    %v869 = vrot.slane %v868, 4
    %v870 = vadd.f32 %v868, %v869
    %v871 = vrot.slane %v870, 2
    %v872 = vadd.f32 %v870, %v871
    %v873 = vrot.slane %v872, 1
    %v874 = vadd.f32 %v872, %v873
    %v875 = vsel %vm135, %v811, 0.0
    %v876 = vrot.slane %v875, 4
    %v877 = vadd.f32 %v875, %v876
    %v878 = vrot.slane %v877, 2
    %v879 = vadd.f32 %v877, %v878
    %v880 = vrot.slane %v879, 1
    %v881 = vadd.f32 %v879, %v880
    %v882 = vsel %vm135, %v812, 0.0
    %v883 = vrot.slane %v882, 4
    %v884 = vadd.f32 %v882, %v883
    %v885 = vrot.slane %v884, 2
    %v886 = vadd.f32 %v884, %v885
    %v887 = vrot.slane %v886, 1
    %v888 = vadd.f32 %v886, %v887
    %v889 = vsel %vm135, %v813, 0.0
    %v890 = vrot.slane %v889, 4
    %v891 = vadd.f32 %v889, %v890
    %v892 = vrot.slane %v891, 2
    %v893 = vadd.f32 %v891, %v892
    %v894 = vrot.slane %v893, 1
    %v895 = vadd.f32 %v893, %v894
    %v896 = vsel %vm135, %v814, 0.0
    %v897 = vrot.slane %v896, 4
    %v898 = vadd.f32 %v896, %v897
    %v899 = vrot.slane %v898, 2
    %v900 = vadd.f32 %v898, %v899
    %v901 = vrot.slane %v900, 1
    %v902 = vadd.f32 %v900, %v901
    %v903 = vsel %vm135, %v815, 0.0
    %v904 = vrot.slane %v903, 4
    %v905 = vadd.f32 %v903, %v904
    %v906 = vrot.slane %v905, 2
    %v907 = vadd.f32 %v905, %v906
    %v908 = vrot.slane %v907, 1
    %v909 = vadd.f32 %v907, %v908
    %v910 = vsel %vm135, %v816, 0.0
    %v911 = vrot.slane %v910, 4
    %v912 = vadd.f32 %v910, %v911
    %v913 = vrot.slane %v912, 2
    %v914 = vadd.f32 %v912, %v913
    %v915 = vrot.slane %v914, 1
    %v916 = vadd.f32 %v914, %v915
    %v917 = vsel %vm135, %v817, 0.0
    %v918 = vrot.slane %v917, 4
    %v919 = vadd.f32 %v917, %v918
    %v920 = vrot.slane %v919, 2
    %v921 = vadd.f32 %v919, %v920
    %v922 = vrot.slane %v921, 1
    %v923 = vadd.f32 %v921, %v922
    %v924 = vsel %vm135, %v818, 0.0
    %v925 = vrot.slane %v924, 4
    %v926 = vadd.f32 %v924, %v925
    %v927 = vrot.slane %v926, 2
    %v928 = vadd.f32 %v926, %v927
    %v929 = vrot.slane %v928, 1
    %v930 = vadd.f32 %v928, %v929
    %931 = vset.pattern.permute.xlu0 1
    %932 = vperm.xlu0 %931, %v707
    %v933 = vpop.permute.xlu0 %932
    %935 = vset.pattern.permute.xlu0 1
    %936 = vperm.xlu0 %935, %v708
    %v937 = vpop.permute.xlu0 %936
    %939 = vset.pattern.permute.xlu0 1
    %940 = vperm.xlu0 %939, %v709
    %v941 = vpop.permute.xlu0 %940
    %943 = vset.pattern.permute.xlu0 1
    %944 = vperm.xlu0 %943, %v710
    %v945 = vpop.permute.xlu0 %944
    %947 = vset.pattern.permute.xlu0 1
    %948 = vperm.xlu0 %947, %v711
    %v949 = vpop.permute.xlu0 %948
    %951 = vset.pattern.permute.xlu0 1
    %952 = vperm.xlu0 %951, %v712
    %v953 = vpop.permute.xlu0 %952
    %955 = vset.pattern.permute.xlu0 1
    %956 = vperm.xlu0 %955, %v713
    %v957 = vpop.permute.xlu0 %956
    %959 = vset.pattern.permute.xlu0 1
    %960 = vperm.xlu0 %959, %v714
    %v961 = vpop.permute.xlu0 %960
    %963 = vset.pattern.permute.xlu0 1
    %964 = vperm.xlu0 %963, %v715
    %v965 = vpop.permute.xlu0 %964
    %967 = vset.pattern.permute.xlu0 1
    %968 = vperm.xlu0 %967, %v716
    %v969 = vpop.permute.xlu0 %968
    %971 = vset.pattern.permute.xlu0 1
    %972 = vperm.xlu0 %971, %v717
    %v973 = vpop.permute.xlu0 %972
    %975 = vset.pattern.permute.xlu0 1
    %976 = vperm.xlu0 %975, %v718
    %v977 = vpop.permute.xlu0 %976
    %979 = vset.pattern.permute.xlu0 1
    %980 = vperm.xlu0 %979, %v719
    %v981 = vpop.permute.xlu0 %980
    %983 = vset.pattern.permute.xlu0 1
    %984 = vperm.xlu0 %983, %v720
    %v985 = vpop.permute.xlu0 %984
    %987 = vset.pattern.permute.xlu0 1
    %988 = vperm.xlu0 %987, %v721
    %v989 = vpop.permute.xlu0 %988
    %991 = vset.pattern.permute.xlu0 1
    %992 = vperm.xlu0 %991, %v722
    %v993 = vpop.permute.xlu0 %992
    %v995 = vmul.f32 %v933, %v88
    %v996 = vmul.f32 %v937, %v89
    %v997 = vmul.f32 %v941, %v90
    %v998 = vmul.f32 %v945, %v91
    %v999 = vmul.f32 %v949, %v92
    %v1000 = vmul.f32 %v953, %v93
    %v1001 = vmul.f32 %v957, %v94
    %v1002 = vmul.f32 %v961, %v95
    %v1003 = vmul.f32 %v965, %v96
    %v1004 = vmul.f32 %v969, %v97
    %v1005 = vmul.f32 %v973, %v98
    %v1006 = vmul.f32 %v977, %v99
    %v1007 = vmul.f32 %v981, %v100
    %v1008 = vmul.f32 %v985, %v101
    %v1009 = vmul.f32 %v989, %v102
    %v1010 = vmul.f32 %v993, %v103
    %v1011 = vsel %vm135, %v995, 0.0
    %v1012 = vrot.slane %v1011, 4
    %v1013 = vadd.f32 %v1011, %v1012
    %v1014 = vrot.slane %v1013, 2
    %v1015 = vadd.f32 %v1013, %v1014
    %v1016 = vrot.slane %v1015, 1
    %v1017 = vadd.f32 %v1015, %v1016
    %v1018 = vsel %vm135, %v996, 0.0
    %v1019 = vrot.slane %v1018, 4
    %v1020 = vadd.f32 %v1018, %v1019
    %v1021 = vrot.slane %v1020, 2
    %v1022 = vadd.f32 %v1020, %v1021
    %v1023 = vrot.slane %v1022, 1
    %v1024 = vadd.f32 %v1022, %v1023
    %v1025 = vsel %vm135, %v997, 0.0
    %v1026 = vrot.slane %v1025, 4
    %v1027 = vadd.f32 %v1025, %v1026
    %v1028 = vrot.slane %v1027, 2
    %v1029 = vadd.f32 %v1027, %v1028
    %v1030 = vrot.slane %v1029, 1
    %v1031 = vadd.f32 %v1029, %v1030
    %v1032 = vsel %vm135, %v998, 0.0
    %v1033 = vrot.slane %v1032, 4
    %v1034 = vadd.f32 %v1032, %v1033
    %v1035 = vrot.slane %v1034, 2
    %v1036 = vadd.f32 %v1034, %v1035
    %v1037 = vrot.slane %v1036, 1
    %v1038 = vadd.f32 %v1036, %v1037
    %v1039 = vsel %vm135, %v999, 0.0
    %v1040 = vrot.slane %v1039, 4
    %v1041 = vadd.f32 %v1039, %v1040
    %v1042 = vrot.slane %v1041, 2
    %v1043 = vadd.f32 %v1041, %v1042
    %v1044 = vrot.slane %v1043, 1
    %v1045 = vadd.f32 %v1043, %v1044
    %v1046 = vsel %vm135, %v1000, 0.0
    %v1047 = vrot.slane %v1046, 4
    %v1048 = vadd.f32 %v1046, %v1047
    %v1049 = vrot.slane %v1048, 2
    %v1050 = vadd.f32 %v1048, %v1049
    %v1051 = vrot.slane %v1050, 1
    %v1052 = vadd.f32 %v1050, %v1051
    %v1053 = vsel %vm135, %v1001, 0.0
    %v1054 = vrot.slane %v1053, 4
    %v1055 = vadd.f32 %v1053, %v1054
    %v1056 = vrot.slane %v1055, 2
    %v1057 = vadd.f32 %v1055, %v1056
    %v1058 = vrot.slane %v1057, 1
    %v1059 = vadd.f32 %v1057, %v1058
    %v1060 = vsel %vm135, %v1002, 0.0
    %v1061 = vrot.slane %v1060, 4
    %v1062 = vadd.f32 %v1060, %v1061
    %v1063 = vrot.slane %v1062, 2
    %v1064 = vadd.f32 %v1062, %v1063
    %v1065 = vrot.slane %v1064, 1
    %v1066 = vadd.f32 %v1064, %v1065
    %v1067 = vsel %vm135, %v1003, 0.0
    %v1068 = vrot.slane %v1067, 4
    %v1069 = vadd.f32 %v1067, %v1068
    %v1070 = vrot.slane %v1069, 2
    %v1071 = vadd.f32 %v1069, %v1070
    %v1072 = vrot.slane %v1071, 1
    %v1073 = vadd.f32 %v1071, %v1072
    %v1074 = vsel %vm135, %v1004, 0.0
    %v1075 = vrot.slane %v1074, 4
    %v1076 = vadd.f32 %v1074, %v1075
    %v1077 = vrot.slane %v1076, 2
    %v1078 = vadd.f32 %v1076, %v1077
    %v1079 = vrot.slane %v1078, 1
    %v1080 = vadd.f32 %v1078, %v1079
    %v1081 = vsel %vm135, %v1005, 0.0
    %v1082 = vrot.slane %v1081, 4
    %v1083 = vadd.f32 %v1081, %v1082
    %v1084 = vrot.slane %v1083, 2
    %v1085 = vadd.f32 %v1083, %v1084
    %v1086 = vrot.slane %v1085, 1
    %v1087 = vadd.f32 %v1085, %v1086
    %v1088 = vsel %vm135, %v1006, 0.0
    %v1089 = vrot.slane %v1088, 4
    %v1090 = vadd.f32 %v1088, %v1089
    %v1091 = vrot.slane %v1090, 2
    %v1092 = vadd.f32 %v1090, %v1091
    %v1093 = vrot.slane %v1092, 1
    %v1094 = vadd.f32 %v1092, %v1093
    %v1095 = vsel %vm135, %v1007, 0.0
    %v1096 = vrot.slane %v1095, 4
    %v1097 = vadd.f32 %v1095, %v1096
    %v1098 = vrot.slane %v1097, 2
    %v1099 = vadd.f32 %v1097, %v1098
    %v1100 = vrot.slane %v1099, 1
    %v1101 = vadd.f32 %v1099, %v1100
    %v1102 = vsel %vm135, %v1008, 0.0
    %v1103 = vrot.slane %v1102, 4
    %v1104 = vadd.f32 %v1102, %v1103
    %v1105 = vrot.slane %v1104, 2
    %v1106 = vadd.f32 %v1104, %v1105
    %v1107 = vrot.slane %v1106, 1
    %v1108 = vadd.f32 %v1106, %v1107
    %v1109 = vsel %vm135, %v1009, 0.0
    %v1110 = vrot.slane %v1109, 4
    %v1111 = vadd.f32 %v1109, %v1110
    %v1112 = vrot.slane %v1111, 2
    %v1113 = vadd.f32 %v1111, %v1112
    %v1114 = vrot.slane %v1113, 1
    %v1115 = vadd.f32 %v1113, %v1114
    %v1116 = vsel %vm135, %v1010, 0.0
    %v1117 = vrot.slane %v1116, 4
    %v1118 = vadd.f32 %v1116, %v1117
    %v1119 = vrot.slane %v1118, 2
    %v1120 = vadd.f32 %v1118, %v1119
    %v1121 = vrot.slane %v1120, 1
    %v1122 = vadd.f32 %v1120, %v1121
    %1123 = vset.pattern.permute.xlu0 2
    %1124 = vperm.xlu0 %1123, %v707
    %v1125 = vpop.permute.xlu0 %1124
    %1127 = vset.pattern.permute.xlu0 2
    %1128 = vperm.xlu0 %1127, %v708
    %v1129 = vpop.permute.xlu0 %1128
    %1131 = vset.pattern.permute.xlu0 2
    %1132 = vperm.xlu0 %1131, %v709
    %v1133 = vpop.permute.xlu0 %1132
    %1135 = vset.pattern.permute.xlu0 2
    %1136 = vperm.xlu0 %1135, %v710
    %v1137 = vpop.permute.xlu0 %1136
    %1139 = vset.pattern.permute.xlu0 2
    %1140 = vperm.xlu0 %1139, %v711
    %v1141 = vpop.permute.xlu0 %1140
    %1143 = vset.pattern.permute.xlu0 2
    %1144 = vperm.xlu0 %1143, %v712
    %v1145 = vpop.permute.xlu0 %1144
    %1147 = vset.pattern.permute.xlu0 2
    %1148 = vperm.xlu0 %1147, %v713
    %v1149 = vpop.permute.xlu0 %1148
    %1151 = vset.pattern.permute.xlu0 2
    %1152 = vperm.xlu0 %1151, %v714
    %v1153 = vpop.permute.xlu0 %1152
    %1155 = vset.pattern.permute.xlu0 2
    %1156 = vperm.xlu0 %1155, %v715
    %v1157 = vpop.permute.xlu0 %1156
    %1159 = vset.pattern.permute.xlu0 2
    %1160 = vperm.xlu0 %1159, %v716
    %v1161 = vpop.permute.xlu0 %1160
    %1163 = vset.pattern.permute.xlu0 2
    %1164 = vperm.xlu0 %1163, %v717
    %v1165 = vpop.permute.xlu0 %1164
    %1167 = vset.pattern.permute.xlu0 2
    %1168 = vperm.xlu0 %1167, %v718
    %v1169 = vpop.permute.xlu0 %1168
    %1171 = vset.pattern.permute.xlu0 2
    %1172 = vperm.xlu0 %1171, %v719
    %v1173 = vpop.permute.xlu0 %1172
    %1175 = vset.pattern.permute.xlu0 2
    %1176 = vperm.xlu0 %1175, %v720
    %v1177 = vpop.permute.xlu0 %1176
    %1179 = vset.pattern.permute.xlu0 2
    %1180 = vperm.xlu0 %1179, %v721
    %v1181 = vpop.permute.xlu0 %1180
    %1183 = vset.pattern.permute.xlu0 2
    %1184 = vperm.xlu0 %1183, %v722
    %v1185 = vpop.permute.xlu0 %1184
    %v1187 = vmul.f32 %v1125, %v88
    %v1188 = vmul.f32 %v1129, %v89
    %v1189 = vmul.f32 %v1133, %v90
    %v1190 = vmul.f32 %v1137, %v91
    %v1191 = vmul.f32 %v1141, %v92
    %v1192 = vmul.f32 %v1145, %v93
    %v1193 = vmul.f32 %v1149, %v94
    %v1194 = vmul.f32 %v1153, %v95
    %v1195 = vmul.f32 %v1157, %v96
    %v1196 = vmul.f32 %v1161, %v97
    %v1197 = vmul.f32 %v1165, %v98
    %v1198 = vmul.f32 %v1169, %v99
    %v1199 = vmul.f32 %v1173, %v100
    %v1200 = vmul.f32 %v1177, %v101
    %v1201 = vmul.f32 %v1181, %v102
    %v1202 = vmul.f32 %v1185, %v103
    %v1203 = vsel %vm135, %v1187, 0.0
    %v1204 = vrot.slane %v1203, 4
    %v1205 = vadd.f32 %v1203, %v1204
    %v1206 = vrot.slane %v1205, 2
    %v1207 = vadd.f32 %v1205, %v1206
    %v1208 = vrot.slane %v1207, 1
    %v1209 = vadd.f32 %v1207, %v1208
    %v1210 = vsel %vm135, %v1188, 0.0
    %v1211 = vrot.slane %v1210, 4
    %v1212 = vadd.f32 %v1210, %v1211
    %v1213 = vrot.slane %v1212, 2
    %v1214 = vadd.f32 %v1212, %v1213
    %v1215 = vrot.slane %v1214, 1
    %v1216 = vadd.f32 %v1214, %v1215
    %v1217 = vsel %vm135, %v1189, 0.0
    %v1218 = vrot.slane %v1217, 4
    %v1219 = vadd.f32 %v1217, %v1218
    %v1220 = vrot.slane %v1219, 2
    %v1221 = vadd.f32 %v1219, %v1220
    %v1222 = vrot.slane %v1221, 1
    %v1223 = vadd.f32 %v1221, %v1222
    %v1224 = vsel %vm135, %v1190, 0.0
    %v1225 = vrot.slane %v1224, 4
    %v1226 = vadd.f32 %v1224, %v1225
    %v1227 = vrot.slane %v1226, 2
    %v1228 = vadd.f32 %v1226, %v1227
    %v1229 = vrot.slane %v1228, 1
    %v1230 = vadd.f32 %v1228, %v1229
    %v1231 = vsel %vm135, %v1191, 0.0
    %v1232 = vrot.slane %v1231, 4
    %v1233 = vadd.f32 %v1231, %v1232
    %v1234 = vrot.slane %v1233, 2
    %v1235 = vadd.f32 %v1233, %v1234
    %v1236 = vrot.slane %v1235, 1
    %v1237 = vadd.f32 %v1235, %v1236
    %v1238 = vsel %vm135, %v1192, 0.0
    %v1239 = vrot.slane %v1238, 4
    %v1240 = vadd.f32 %v1238, %v1239
    %v1241 = vrot.slane %v1240, 2
    %v1242 = vadd.f32 %v1240, %v1241
    %v1243 = vrot.slane %v1242, 1
    %v1244 = vadd.f32 %v1242, %v1243
    %v1245 = vsel %vm135, %v1193, 0.0
    %v1246 = vrot.slane %v1245, 4
    %v1247 = vadd.f32 %v1245, %v1246
    %v1248 = vrot.slane %v1247, 2
    %v1249 = vadd.f32 %v1247, %v1248
    %v1250 = vrot.slane %v1249, 1
    %v1251 = vadd.f32 %v1249, %v1250
    %v1252 = vsel %vm135, %v1194, 0.0
    %v1253 = vrot.slane %v1252, 4
    %v1254 = vadd.f32 %v1252, %v1253
    %v1255 = vrot.slane %v1254, 2
    %v1256 = vadd.f32 %v1254, %v1255
    %v1257 = vrot.slane %v1256, 1
    %v1258 = vadd.f32 %v1256, %v1257
    %v1259 = vsel %vm135, %v1195, 0.0
    %v1260 = vrot.slane %v1259, 4
    %v1261 = vadd.f32 %v1259, %v1260
    %v1262 = vrot.slane %v1261, 2
    %v1263 = vadd.f32 %v1261, %v1262
    %v1264 = vrot.slane %v1263, 1
    %v1265 = vadd.f32 %v1263, %v1264
    %v1266 = vsel %vm135, %v1196, 0.0
    %v1267 = vrot.slane %v1266, 4
    %v1268 = vadd.f32 %v1266, %v1267
    %v1269 = vrot.slane %v1268, 2
    %v1270 = vadd.f32 %v1268, %v1269
    %v1271 = vrot.slane %v1270, 1
    %v1272 = vadd.f32 %v1270, %v1271
    %v1273 = vsel %vm135, %v1197, 0.0
    %v1274 = vrot.slane %v1273, 4
    %v1275 = vadd.f32 %v1273, %v1274
    %v1276 = vrot.slane %v1275, 2
    %v1277 = vadd.f32 %v1275, %v1276
    %v1278 = vrot.slane %v1277, 1
    %v1279 = vadd.f32 %v1277, %v1278
    %v1280 = vsel %vm135, %v1198, 0.0
    %v1281 = vrot.slane %v1280, 4
    %v1282 = vadd.f32 %v1280, %v1281
    %v1283 = vrot.slane %v1282, 2
    %v1284 = vadd.f32 %v1282, %v1283
    %v1285 = vrot.slane %v1284, 1
    %v1286 = vadd.f32 %v1284, %v1285
    %v1287 = vsel %vm135, %v1199, 0.0
    %v1288 = vrot.slane %v1287, 4
    %v1289 = vadd.f32 %v1287, %v1288
    %v1290 = vrot.slane %v1289, 2
    %v1291 = vadd.f32 %v1289, %v1290
    %v1292 = vrot.slane %v1291, 1
    %v1293 = vadd.f32 %v1291, %v1292
    %v1294 = vsel %vm135, %v1200, 0.0
    %v1295 = vrot.slane %v1294, 4
    %v1296 = vadd.f32 %v1294, %v1295
    %v1297 = vrot.slane %v1296, 2
    %v1298 = vadd.f32 %v1296, %v1297
    %v1299 = vrot.slane %v1298, 1
    %v1300 = vadd.f32 %v1298, %v1299
    %v1301 = vsel %vm135, %v1201, 0.0
    %v1302 = vrot.slane %v1301, 4
    %v1303 = vadd.f32 %v1301, %v1302
    %v1304 = vrot.slane %v1303, 2
    %v1305 = vadd.f32 %v1303, %v1304
    %v1306 = vrot.slane %v1305, 1
    %v1307 = vadd.f32 %v1305, %v1306
    %v1308 = vsel %vm135, %v1202, 0.0
    %v1309 = vrot.slane %v1308, 4
    %v1310 = vadd.f32 %v1308, %v1309
    %v1311 = vrot.slane %v1310, 2
    %v1312 = vadd.f32 %v1310, %v1311
    %v1313 = vrot.slane %v1312, 1
    %v1314 = vadd.f32 %v1312, %v1313
    %1315 = vset.pattern.permute.xlu0 3
    %1316 = vperm.xlu0 %1315, %v707
    %v1317 = vpop.permute.xlu0 %1316
    %1319 = vset.pattern.permute.xlu0 3
    %1320 = vperm.xlu0 %1319, %v708
    %v1321 = vpop.permute.xlu0 %1320
    %1323 = vset.pattern.permute.xlu0 3
    %1324 = vperm.xlu0 %1323, %v709
    %v1325 = vpop.permute.xlu0 %1324
    %1327 = vset.pattern.permute.xlu0 3
    %1328 = vperm.xlu0 %1327, %v710
    %v1329 = vpop.permute.xlu0 %1328
    %1331 = vset.pattern.permute.xlu0 3
    %1332 = vperm.xlu0 %1331, %v711
    %v1333 = vpop.permute.xlu0 %1332
    %1335 = vset.pattern.permute.xlu0 3
    %1336 = vperm.xlu0 %1335, %v712
    %v1337 = vpop.permute.xlu0 %1336
    %1339 = vset.pattern.permute.xlu0 3
    %1340 = vperm.xlu0 %1339, %v713
    %v1341 = vpop.permute.xlu0 %1340
    %1343 = vset.pattern.permute.xlu0 3
    %1344 = vperm.xlu0 %1343, %v714
    %v1345 = vpop.permute.xlu0 %1344
    %1347 = vset.pattern.permute.xlu0 3
    %1348 = vperm.xlu0 %1347, %v715
    %v1349 = vpop.permute.xlu0 %1348
    %1351 = vset.pattern.permute.xlu0 3
    %1352 = vperm.xlu0 %1351, %v716
    %v1353 = vpop.permute.xlu0 %1352
    %1355 = vset.pattern.permute.xlu0 3
    %1356 = vperm.xlu0 %1355, %v717
    %v1357 = vpop.permute.xlu0 %1356
    %1359 = vset.pattern.permute.xlu0 3
    %1360 = vperm.xlu0 %1359, %v718
    %v1361 = vpop.permute.xlu0 %1360
    %1363 = vset.pattern.permute.xlu0 3
    %1364 = vperm.xlu0 %1363, %v719
    %v1365 = vpop.permute.xlu0 %1364
    %1367 = vset.pattern.permute.xlu0 3
    %1368 = vperm.xlu0 %1367, %v720
    %v1369 = vpop.permute.xlu0 %1368
    %1371 = vset.pattern.permute.xlu0 3
    %1372 = vperm.xlu0 %1371, %v721
    %v1373 = vpop.permute.xlu0 %1372
    %1375 = vset.pattern.permute.xlu0 3
    %1376 = vperm.xlu0 %1375, %v722
    %v1377 = vpop.permute.xlu0 %1376
    %v1379 = vmul.f32 %v1317, %v88
    %v1380 = vmul.f32 %v1321, %v89
    %v1381 = vmul.f32 %v1325, %v90
    %v1382 = vmul.f32 %v1329, %v91
    %v1383 = vmul.f32 %v1333, %v92
    %v1384 = vmul.f32 %v1337, %v93
    %v1385 = vmul.f32 %v1341, %v94
    %v1386 = vmul.f32 %v1345, %v95
    %v1387 = vmul.f32 %v1349, %v96
    %v1388 = vmul.f32 %v1353, %v97
    %v1389 = vmul.f32 %v1357, %v98
    %v1390 = vmul.f32 %v1361, %v99
    %v1391 = vmul.f32 %v1365, %v100
    %v1392 = vmul.f32 %v1369, %v101
    %v1393 = vmul.f32 %v1373, %v102
    %v1394 = vmul.f32 %v1377, %v103
    %v1395 = vsel %vm135, %v1379, 0.0
    %v1396 = vrot.slane %v1395, 4
    %v1397 = vadd.f32 %v1395, %v1396
    %v1398 = vrot.slane %v1397, 2
    %v1399 = vadd.f32 %v1397, %v1398
    %v1400 = vrot.slane %v1399, 1
    %v1401 = vadd.f32 %v1399, %v1400
    %v1402 = vsel %vm135, %v1380, 0.0
    %v1403 = vrot.slane %v1402, 4
    %v1404 = vadd.f32 %v1402, %v1403
    %v1405 = vrot.slane %v1404, 2
    %v1406 = vadd.f32 %v1404, %v1405
    %v1407 = vrot.slane %v1406, 1
    %v1408 = vadd.f32 %v1406, %v1407
    %v1409 = vsel %vm135, %v1381, 0.0
    %v1410 = vrot.slane %v1409, 4
    %v1411 = vadd.f32 %v1409, %v1410
    %v1412 = vrot.slane %v1411, 2
    %v1413 = vadd.f32 %v1411, %v1412
    %v1414 = vrot.slane %v1413, 1
    %v1415 = vadd.f32 %v1413, %v1414
    %v1416 = vsel %vm135, %v1382, 0.0
    %v1417 = vrot.slane %v1416, 4
    %v1418 = vadd.f32 %v1416, %v1417
    %v1419 = vrot.slane %v1418, 2
    %v1420 = vadd.f32 %v1418, %v1419
    %v1421 = vrot.slane %v1420, 1
    %v1422 = vadd.f32 %v1420, %v1421
    %v1423 = vsel %vm135, %v1383, 0.0
    %v1424 = vrot.slane %v1423, 4
    %v1425 = vadd.f32 %v1423, %v1424
    %v1426 = vrot.slane %v1425, 2
    %v1427 = vadd.f32 %v1425, %v1426
    %v1428 = vrot.slane %v1427, 1
    %v1429 = vadd.f32 %v1427, %v1428
    %v1430 = vsel %vm135, %v1384, 0.0
    %v1431 = vrot.slane %v1430, 4
    %v1432 = vadd.f32 %v1430, %v1431
    %v1433 = vrot.slane %v1432, 2
    %v1434 = vadd.f32 %v1432, %v1433
    %v1435 = vrot.slane %v1434, 1
    %v1436 = vadd.f32 %v1434, %v1435
    %v1437 = vsel %vm135, %v1385, 0.0
    %v1438 = vrot.slane %v1437, 4
    %v1439 = vadd.f32 %v1437, %v1438
    %v1440 = vrot.slane %v1439, 2
    %v1441 = vadd.f32 %v1439, %v1440
    %v1442 = vrot.slane %v1441, 1
    %v1443 = vadd.f32 %v1441, %v1442
    %v1444 = vsel %vm135, %v1386, 0.0
    %v1445 = vrot.slane %v1444, 4
    %v1446 = vadd.f32 %v1444, %v1445
    %v1447 = vrot.slane %v1446, 2
    %v1448 = vadd.f32 %v1446, %v1447
    %v1449 = vrot.slane %v1448, 1
    %v1450 = vadd.f32 %v1448, %v1449
    %v1451 = vsel %vm135, %v1387, 0.0
    %v1452 = vrot.slane %v1451, 4
    %v1453 = vadd.f32 %v1451, %v1452
    %v1454 = vrot.slane %v1453, 2
    %v1455 = vadd.f32 %v1453, %v1454
    %v1456 = vrot.slane %v1455, 1
    %v1457 = vadd.f32 %v1455, %v1456
    %v1458 = vsel %vm135, %v1388, 0.0
    %v1459 = vrot.slane %v1458, 4
    %v1460 = vadd.f32 %v1458, %v1459
    %v1461 = vrot.slane %v1460, 2
    %v1462 = vadd.f32 %v1460, %v1461
    %v1463 = vrot.slane %v1462, 1
    %v1464 = vadd.f32 %v1462, %v1463
    %v1465 = vsel %vm135, %v1389, 0.0
    %v1466 = vrot.slane %v1465, 4
    %v1467 = vadd.f32 %v1465, %v1466
    %v1468 = vrot.slane %v1467, 2
    %v1469 = vadd.f32 %v1467, %v1468
    %v1470 = vrot.slane %v1469, 1
    %v1471 = vadd.f32 %v1469, %v1470
    %v1472 = vsel %vm135, %v1390, 0.0
    %v1473 = vrot.slane %v1472, 4
    %v1474 = vadd.f32 %v1472, %v1473
    %v1475 = vrot.slane %v1474, 2
    %v1476 = vadd.f32 %v1474, %v1475
    %v1477 = vrot.slane %v1476, 1
    %v1478 = vadd.f32 %v1476, %v1477
    %v1479 = vsel %vm135, %v1391, 0.0
    %v1480 = vrot.slane %v1479, 4
    %v1481 = vadd.f32 %v1479, %v1480
    %v1482 = vrot.slane %v1481, 2
    %v1483 = vadd.f32 %v1481, %v1482
    %v1484 = vrot.slane %v1483, 1
    %v1485 = vadd.f32 %v1483, %v1484
    %v1486 = vsel %vm135, %v1392, 0.0
    %v1487 = vrot.slane %v1486, 4
    %v1488 = vadd.f32 %v1486, %v1487
    %v1489 = vrot.slane %v1488, 2
    %v1490 = vadd.f32 %v1488, %v1489
    %v1491 = vrot.slane %v1490, 1
    %v1492 = vadd.f32 %v1490, %v1491
    %v1493 = vsel %vm135, %v1393, 0.0
    %v1494 = vrot.slane %v1493, 4
    %v1495 = vadd.f32 %v1493, %v1494
    %v1496 = vrot.slane %v1495, 2
    %v1497 = vadd.f32 %v1495, %v1496
    %v1498 = vrot.slane %v1497, 1
    %v1499 = vadd.f32 %v1497, %v1498
    %v1500 = vsel %vm135, %v1394, 0.0
    %v1501 = vrot.slane %v1500, 4
    %v1502 = vadd.f32 %v1500, %v1501
    %v1503 = vrot.slane %v1502, 2
    %v1504 = vadd.f32 %v1502, %v1503
    %v1505 = vrot.slane %v1504, 1
    %v1506 = vadd.f32 %v1504, %v1505
    %vm1523 = vcmask 1041409
    %v1524 = vsel %vm1523, %v832, %v825
    %vm1525 = vcmask 1042434
    %v1526 = vsel %vm1525, %v839, %v1524
    %vm1527 = vcmask 1043459
    %v1528 = vsel %vm1527, %v846, %v1526
    %vm1529 = vcmask 1044484
    %v1530 = vsel %vm1529, %v853, %v1528
    %vm1531 = vcmask 1045509
    %v1532 = vsel %vm1531, %v860, %v1530
    %vm1533 = vcmask 1046534
    %v1534 = vsel %vm1533, %v867, %v1532
    %vm1535 = vcmask 1047559
    %v1536 = vsel %vm1535, %v874, %v1534
    %v1537 = vsel %vm1523, %v888, %v881
    %v1538 = vsel %vm1525, %v895, %v1537
    %v1539 = vsel %vm1527, %v902, %v1538
    %v1540 = vsel %vm1529, %v909, %v1539
    %v1541 = vsel %vm1531, %v916, %v1540
    %v1542 = vsel %vm1533, %v923, %v1541
    %v1543 = vsel %vm1535, %v930, %v1542
    %v1562 = vsel %vm1523, %v1024, %v1017
    %v1563 = vsel %vm1525, %v1031, %v1562
    %v1564 = vsel %vm1527, %v1038, %v1563
    %v1565 = vsel %vm1529, %v1045, %v1564
    %v1566 = vsel %vm1531, %v1052, %v1565
    %v1567 = vsel %vm1533, %v1059, %v1566
    %v1568 = vsel %vm1535, %v1066, %v1567
    %v1569 = vsel %vm1523, %v1080, %v1073
    %v1570 = vsel %vm1525, %v1087, %v1569
    %v1571 = vsel %vm1527, %v1094, %v1570
    %v1572 = vsel %vm1529, %v1101, %v1571
    %v1573 = vsel %vm1531, %v1108, %v1572
    %v1574 = vsel %vm1533, %v1115, %v1573
    %v1575 = vsel %vm1535, %v1122, %v1574
    %1576 = vrot.lane.b32.xlu0 %v1568, 32
    %v1577 = vpop.permute.xlu0 %1576
    %1578 = vrot.lane.b32.xlu0 %v1575, 32
    %v1579 = vpop.permute.xlu0 %1578
    %v1598 = vsel %vm1523, %v1216, %v1209
    %v1599 = vsel %vm1525, %v1223, %v1598
    %v1600 = vsel %vm1527, %v1230, %v1599
    %v1601 = vsel %vm1529, %v1237, %v1600
    %v1602 = vsel %vm1531, %v1244, %v1601
    %v1603 = vsel %vm1533, %v1251, %v1602
    %v1604 = vsel %vm1535, %v1258, %v1603
    %v1605 = vsel %vm1523, %v1272, %v1265
    %v1606 = vsel %vm1525, %v1279, %v1605
    %v1607 = vsel %vm1527, %v1286, %v1606
    %v1608 = vsel %vm1529, %v1293, %v1607
    %v1609 = vsel %vm1531, %v1300, %v1608
    %v1610 = vsel %vm1533, %v1307, %v1609
    %v1611 = vsel %vm1535, %v1314, %v1610
    %1612 = vrot.lane.b32.xlu0 %v1604, 64
    %v1613 = vpop.permute.xlu0 %1612
    %1614 = vrot.lane.b32.xlu0 %v1611, 64
    %v1615 = vpop.permute.xlu0 %1614
    %v1634 = vsel %vm1523, %v1408, %v1401
    %v1635 = vsel %vm1525, %v1415, %v1634
    %v1636 = vsel %vm1527, %v1422, %v1635
    %v1637 = vsel %vm1529, %v1429, %v1636
    %v1638 = vsel %vm1531, %v1436, %v1637
    %v1639 = vsel %vm1533, %v1443, %v1638
    %v1640 = vsel %vm1535, %v1450, %v1639
    %v1641 = vsel %vm1523, %v1464, %v1457
    %v1642 = vsel %vm1525, %v1471, %v1641
    %v1643 = vsel %vm1527, %v1478, %v1642
    %v1644 = vsel %vm1529, %v1485, %v1643
    %v1645 = vsel %vm1531, %v1492, %v1644
    %v1646 = vsel %vm1533, %v1499, %v1645
    %v1647 = vsel %vm1535, %v1506, %v1646
    %1648 = vrot.lane.b32.xlu0 %v1640, 96
    %v1649 = vpop.permute.xlu0 %1648
    %1650 = vrot.lane.b32.xlu0 %v1647, 96
    %v1651 = vpop.permute.xlu0 %1650
    %v1654 = vsel %vm135, %v1536, %v1577
    %v1655 = vsel %vm135, %v1543, %v1579
    %vm1656 = vcmask 523264
    %v1657 = vsel %vm1656, %v1654, %v1613
    %v1658 = vsel %vm1656, %v1655, %v1615
    %vm1659 = vcmask 785408
    %v1660 = vsel %vm1659, %v1657, %v1649
    %v1661 = vsel %vm1659, %v1658, %v1651
    %1662 = vst [vmem:[#allocation5] sm:$0xff] %v1660
    %1663 = vst [vmem:[#allocation5 + $0x8] sm:$0xff] %v1661
    // Predicated region
    $region34: #{tpu_custom_call.1} parent=1 // pred_check
      _
    $region35: #{tpu_custom_call.1} parent=1 // pred_check_branch
      %1665 = sbr.rel (0) target = $region37
    $region36: #{tpu_custom_call.1} parent=1 // pred_region
      %s1667 = ssub.s32 256, 256
      %1668 = vsyncadd [#allocation4], %s1667
      %s1669 = sshll.u32 [#allocation5], 4
      %s1670 = int_to_ptr.vmem [resolvable:$true] %s1669
      %1675 = dma.vmem_to_hbm [thread:$0]  %s1670, 256, %s7, [#allocation4], 128, 128, 8
    $region37: #{tpu_custom_call.1} parent=1 // pred_fallthru
      _
    // Predicated region
    $region38: #{tpu_custom_call.1} parent=1 // pred_check
      _
    $region39: #{tpu_custom_call.1} parent=1 // pred_check_branch
      %1677 = sbr.rel (0) target = $region41
    $region40: #{tpu_custom_call.1} parent=1 // pred_region
      %1678 = dma.done [#allocation4], 256
    $region41: #{tpu_custom_call.1} parent=1 // pred_fallthru
      _
    %1679 = vsyncpa [#allocation3], 1
    %1680 = vsyncpa [#allocation4], 1

</llo_original>
